<compile_context>
chip_gen: v7x
topology: tpu7x:2x2x1
jax: 0.10.0
libtpu: 0.0.40
codegen_flags: <defaults>
</compile_context>

<pallas_src>
import jax
import jax.numpy as jnp
from jax.experimental import pallas as pl
from jax.experimental.pallas import tpu as pltpu


# ---------------- fused Pallas kernel ----------------

def dqn_fused_kernel(x_ref, wc_ref, bc_ref, w1_ref, b1_ref, w2_ref, b2_ref, q_ref):
    # x_ref : (C, N, S)    f32  VMEM   input, channel-major (layout plumbing done in wrapper)
    # wc_ref: (CO, C)      f32  SMEM   conv1 weight (1x1x1 kernel squeezed)
    # bc_ref: (CO,)        f32  SMEM   conv1 bias
    # w1_ref: (CO, S, HID) bf16 VMEM   fc1 weight, pre-permuted from (HID, CO*S)
    # b1_ref: (1, HID)     f32  VMEM
    # w2_ref: (HID, A)     bf16 VMEM   fc2 weight, pre-transposed
    # b2_ref: (1, A)       f32  VMEM
    # q_ref : (N, A)       f32  VMEM
    C, N, S = x_ref.shape
    CO, _, HID = w1_ref.shape

    # Input is tiny: load one (N, S) slab per input channel once.
    xs = [x_ref[k] for k in range(C)]                      # C x (N, S) f32

    # conv(1x1x1) + ReLU fused into the fc1 reduction, accumulated over output channels.
    acc = jnp.zeros((N, HID), jnp.float32)
    for c in range(CO):                                    # CO is small & static -> unroll
        pre = xs[0] * wc_ref[c, 0]                         # VPU scalar FMAs (channel mix)
        for k in range(1, C):
            pre = pre + xs[k] * wc_ref[c, k]
        conv_c = jnp.maximum(pre + bc_ref[c], 0.0)         # (N, S) f32, ReLU in f32
        acc = acc + jnp.dot(conv_c.astype(jnp.bfloat16), w1_ref[c],
                            preferred_element_type=jnp.float32)   # (N, HID) f32 on MXU

    h = jnp.maximum(acc + b1_ref[...], 0.0)                # fc1 bias + ReLU, f32
    q = jnp.dot(h.astype(jnp.bfloat16), w2_ref[...],
                preferred_element_type=jnp.float32) + b2_ref[...]
    q_ref[...] = q                                         # (N, A); masked store is fine (A tiny)


# ---------------- wrapper ----------------

def deep_q_forward(state, kparams):
    """state: (N, C, D, H, W) f32; kparams from prepare_params() -> q: (N, n_actions) f32."""
    N, C, D, H, W = state.shape
    S = D * H * W
    CO, S_k, HID = kparams["fc1_w"].shape
    A = kparams["fc2_w"].shape[1]
    assert S_k == S

    # Layout plumbing only (input is tiny): channel-major so the kernel slices whole
    # (N, S) slabs with leading-dim indexing.
    x = state.reshape(N, C, S).transpose(1, 0, 2)          # (C, N, S)

    return pl.pallas_call(
        dqn_fused_kernel,
        out_shape=jax.ShapeDtypeStruct((N, A), jnp.float32),
        grid=(1,),
        in_specs=[
            pl.BlockSpec((C, N, S), lambda i: (0, 0, 0)),
            pl.BlockSpec((CO, C), lambda i: (0, 0),
                         memory_space=pltpu.MemorySpace.SMEM),
            pl.BlockSpec((CO,), lambda i: (0,),
                         memory_space=pltpu.MemorySpace.SMEM),
            pl.BlockSpec((CO, S, HID), lambda i: (0, 0, 0)),
            pl.BlockSpec((1, HID), lambda i: (0, 0)),
            pl.BlockSpec((HID, A), lambda i: (0, 0)),
            pl.BlockSpec((1, A), lambda i: (0, 0)),
        ],
        out_specs=pl.BlockSpec((N, A), lambda i: (0, 0)),
        compiler_params=pltpu.CompilerParams(dimension_semantics=("arbitrary",)),
    )(x, kparams["conv1_w"], kparams["conv1_b"], kparams["fc1_w"],
      kparams["fc1_b"], kparams["fc2_w"], kparams["fc2_b"])


# ---------------- one-time parameter preparation (PyTorch layout -> kernel layout) ----------------

def prepare_params(p):
    """One-time conversion; per-call wrapper does no weight transposes.

    fc1.weight (HID, CO*S) -> (CO, S, HID) bf16: per-conv-channel slabs, column c*S + s maps
    to [c, s, :], exactly PyTorch's conv1.view(N, -1) flatten order.
    fc2.weight (A, HID)    -> (HID, A)     bf16: pre-transposed so the kernel uses a plain NN matmul.
    """
    HID, F = p["fc1_w"].shape
    CO = p["conv1_w"].shape[0]
    S = F // CO
    return {
        "conv1_w": p["conv1_w"].astype(jnp.float32),                       # (CO, C)  SMEM scalars
        "conv1_b": p["conv1_b"].astype(jnp.float32),                       # (CO,)
        "fc1_w": jnp.transpose(p["fc1_w"].reshape(HID, CO, S), (1, 2, 0)).astype(jnp.bfloat16),
        "fc1_b": p["fc1_b"].reshape(1, HID).astype(jnp.float32),
        "fc2_w": p["fc2_w"].T.astype(jnp.bfloat16),                        # (HID, A)
        "fc2_b": p["fc2_b"].reshape(1, -1).astype(jnp.float32),
    }


# ---------------- pure-JAX (f32, PyTorch-layout) reference ----------------

def deep_q_forward_ref(state, params):
    N, C = state.shape[0], state.shape[1]
    x = state.reshape(N, C, -1)
    conv = jnp.einsum("oc,ncs->nos", params["conv1_w"], x) + params["conv1_b"][None, :, None]
    conv = jnp.maximum(conv, 0.0)
    flat = conv.reshape(N, -1)
    h = jnp.maximum(flat @ params["fc1_w"].T + params["fc1_b"], 0.0)
    return h @ params["fc2_w"].T + params["fc2_b"]


# ---------------- deterministic parameter init (PyTorch layouts) ----------------

def init_params(key, c_in, spatial, n_actions, hidden=128, c_out=32):
    S = spatial[0] * spatial[1] * spatial[2]
    F = c_out * S
    ks = jax.random.split(key, 6)

    def u(k, shape, fan_in):
        bound = 1.0 / jnp.sqrt(jnp.float32(fan_in))
        return jax.random.uniform(k, shape, jnp.float32, -bound, bound)

    return {
        "conv1_w": u(ks[0], (c_out, c_in), c_in),     # Conv3d k=1 -> (32, C, 1, 1, 1) squeezed
        "conv1_b": u(ks[1], (c_out,), c_in),
        "fc1_w": u(ks[2], (hidden, F), F),            # nn.Linear(F, 128).weight
        "fc1_b": u(ks[3], (hidden,), F),
        "fc2_w": u(ks[4], (n_actions, hidden), hidden),
        "fc2_b": u(ks[5], (n_actions,), hidden),
    }


if __name__ == "__main__":
    # small shapes consistent with the module: input_dims = (C, D, H, W)
    N, C, D, H, W = 2, 4, 4, 4, 4
    n_actions = 6

    key = jax.random.PRNGKey(0)
    k_params, k_state = jax.random.split(key)
    params = init_params(k_params, C, (D, H, W), n_actions)   # PyTorch-layout weights
    kparams = prepare_params(params)                          # one-time layout + bf16 prep
    state = jax.random.normal(k_state, (N, C, D, H, W), jnp.float32)

    q = jax.block_until_ready(deep_q_forward(state, kparams))
    q_ref = jax.block_until_ready(deep_q_forward_ref(state, params))

    assert q.shape == (N, n_actions), q.shape
    # kernel uses bf16 fc weights with f32 accumulation vs. pure-f32 reference.
    assert jnp.allclose(q, q_ref, rtol=2e-2, atol=2e-2), (q, q_ref)
    print("KERNEL_OK")
</pallas_src>

<mosaic_0001>
module attributes {stable_mosaic.version = 11 : i64} {
  func.func @dqn_fused_kernel(%arg0: i32, %arg1: memref<4x2x64xf32, #tpu.memory_space<vmem>>, %arg2: memref<32x4xf32, #tpu.memory_space<smem>>, %arg3: memref<32xf32, #tpu.memory_space<smem>>, %arg4: memref<32x64x128xbf16, #tpu.memory_space<vmem>>, %arg5: memref<1x128xf32, #tpu.memory_space<vmem>>, %arg6: memref<128x6xbf16, #tpu.memory_space<vmem>>, %arg7: memref<1x6xf32, #tpu.memory_space<vmem>>, %arg8: memref<2x6xf32, #tpu.memory_space<vmem>>) attributes {dimension_semantics = [#tpu.dimension_semantics<arbitrary>], iteration_bounds = array<i64: 1>, scalar_prefetch = 0 : i64, scratch_operands = 0 : i64, tpu.core_type = #tpu.core_type<tc>, window_params = [{pipeline_mode = #tpu.pipeline_mode<synchronous>, transform_indices = @transform_0, window_bounds = array<i64: 4, 2, 64>}, {transform_indices = @transform_1, window_bounds = array<i64: 32, 4>}, {transform_indices = @transform_2, window_bounds = array<i64: 32>}, {pipeline_mode = #tpu.pipeline_mode<synchronous>, transform_indices = @transform_3, window_bounds = array<i64: 32, 64, 128>}, {pipeline_mode = #tpu.pipeline_mode<synchronous>, transform_indices = @transform_4, window_bounds = array<i64: 1, 128>}, {pipeline_mode = #tpu.pipeline_mode<synchronous>, transform_indices = @transform_5, window_bounds = array<i64: 128, 6>}, {pipeline_mode = #tpu.pipeline_mode<synchronous>, transform_indices = @transform_6, window_bounds = array<i64: 1, 6>}, {pipeline_mode = #tpu.pipeline_mode<synchronous>, transform_indices = @transform_7, window_bounds = array<i64: 2, 6>}]} {
    %c0 = arith.constant 0 : index
    %c0_0 = arith.constant 0 : index
    %c0_1 = arith.constant 0 : index
    %0 = vector.load %arg1[%c0, %c0_0, %c0_1] : memref<4x2x64xf32, #tpu.memory_space<vmem>>, vector<1x2x64xf32>
    %1 = vector.shape_cast %0 : vector<1x2x64xf32> to vector<2x64xf32>
    %c1 = arith.constant 1 : index
    %c0_2 = arith.constant 0 : index
    %c0_3 = arith.constant 0 : index
    %2 = vector.load %arg1[%c1, %c0_2, %c0_3] : memref<4x2x64xf32, #tpu.memory_space<vmem>>, vector<1x2x64xf32>
    %3 = vector.shape_cast %2 : vector<1x2x64xf32> to vector<2x64xf32>
    %c2 = arith.constant 2 : index
    %c0_4 = arith.constant 0 : index
    %c0_5 = arith.constant 0 : index
    %4 = vector.load %arg1[%c2, %c0_4, %c0_5] : memref<4x2x64xf32, #tpu.memory_space<vmem>>, vector<1x2x64xf32>
    %5 = vector.shape_cast %4 : vector<1x2x64xf32> to vector<2x64xf32>
    %c3 = arith.constant 3 : index
    %c0_6 = arith.constant 0 : index
    %c0_7 = arith.constant 0 : index
    %6 = vector.load %arg1[%c3, %c0_6, %c0_7] : memref<4x2x64xf32, #tpu.memory_space<vmem>>, vector<1x2x64xf32>
    %7 = vector.shape_cast %6 : vector<1x2x64xf32> to vector<2x64xf32>
    %cst = arith.constant 0.000000e+00 : f32
    %8 = vector.broadcast %cst : f32 to vector<2x128xf32>
    %c0_8 = arith.constant 0 : index
    %c0_9 = arith.constant 0 : index
    %9 = memref.load %arg2[%c0_8, %c0_9] : memref<32x4xf32, #tpu.memory_space<smem>>
    %10 = vector.broadcast %9 : f32 to vector<2x64xf32>
    %11 = arith.mulf %1, %10 : vector<2x64xf32>
    %c0_10 = arith.constant 0 : index
    %c1_11 = arith.constant 1 : index
    %12 = memref.load %arg2[%c0_10, %c1_11] : memref<32x4xf32, #tpu.memory_space<smem>>
    %13 = vector.broadcast %12 : f32 to vector<2x64xf32>
    %14 = arith.mulf %3, %13 : vector<2x64xf32>
    %15 = arith.addf %11, %14 : vector<2x64xf32>
    %c0_12 = arith.constant 0 : index
    %c2_13 = arith.constant 2 : index
    %16 = memref.load %arg2[%c0_12, %c2_13] : memref<32x4xf32, #tpu.memory_space<smem>>
    %17 = vector.broadcast %16 : f32 to vector<2x64xf32>
    %18 = arith.mulf %5, %17 : vector<2x64xf32>
    %19 = arith.addf %15, %18 : vector<2x64xf32>
    %c0_14 = arith.constant 0 : index
    %c3_15 = arith.constant 3 : index
    %20 = memref.load %arg2[%c0_14, %c3_15] : memref<32x4xf32, #tpu.memory_space<smem>>
    %21 = vector.broadcast %20 : f32 to vector<2x64xf32>
    %22 = arith.mulf %7, %21 : vector<2x64xf32>
    %23 = arith.addf %19, %22 : vector<2x64xf32>
    %c0_16 = arith.constant 0 : index
    %24 = memref.load %arg3[%c0_16] : memref<32xf32, #tpu.memory_space<smem>>
    %25 = vector.broadcast %24 : f32 to vector<2x64xf32>
    %26 = arith.addf %23, %25 : vector<2x64xf32>
    %cst_17 = arith.constant 0.000000e+00 : f32
    %27 = vector.broadcast %cst_17 : f32 to vector<2x64xf32>
    %28 = arith.maximumf %26, %27 : vector<2x64xf32>
    %29 = arith.truncf %28 : vector<2x64xf32> to vector<2x64xbf16>
    %c0_18 = arith.constant 0 : index
    %c0_19 = arith.constant 0 : index
    %c0_20 = arith.constant 0 : index
    %30 = vector.load %arg4[%c0_18, %c0_19, %c0_20] : memref<32x64x128xbf16, #tpu.memory_space<vmem>>, vector<1x64x128xbf16>
    %31 = vector.shape_cast %30 : vector<1x64x128xbf16> to vector<64x128xbf16>
    %cst_21 = arith.constant dense<0.000000e+00> : vector<2x128xf32>
    %32 = tpu.matmul %29, %31, %cst_21 {dimension_numbers = #tpu.dot_dimension_numbers<[1], [0], [0], [1], [0, 0, 1, 1], [], []>} : vector<2x64xbf16>, vector<64x128xbf16>, vector<2x128xf32> -> vector<2x128xf32>
    %33 = arith.addf %8, %32 : vector<2x128xf32>
    %c1_22 = arith.constant 1 : index
    %c0_23 = arith.constant 0 : index
    %34 = memref.load %arg2[%c1_22, %c0_23] : memref<32x4xf32, #tpu.memory_space<smem>>
    %35 = vector.broadcast %34 : f32 to vector<2x64xf32>
    %36 = arith.mulf %1, %35 : vector<2x64xf32>
    %c1_24 = arith.constant 1 : index
    %c1_25 = arith.constant 1 : index
    %37 = memref.load %arg2[%c1_24, %c1_25] : memref<32x4xf32, #tpu.memory_space<smem>>
    %38 = vector.broadcast %37 : f32 to vector<2x64xf32>
    %39 = arith.mulf %3, %38 : vector<2x64xf32>
    %40 = arith.addf %36, %39 : vector<2x64xf32>
    %c1_26 = arith.constant 1 : index
    %c2_27 = arith.constant 2 : index
    %41 = memref.load %arg2[%c1_26, %c2_27] : memref<32x4xf32, #tpu.memory_space<smem>>
    %42 = vector.broadcast %41 : f32 to vector<2x64xf32>
    %43 = arith.mulf %5, %42 : vector<2x64xf32>
    %44 = arith.addf %40, %43 : vector<2x64xf32>
    %c1_28 = arith.constant 1 : index
    %c3_29 = arith.constant 3 : index
    %45 = memref.load %arg2[%c1_28, %c3_29] : memref<32x4xf32, #tpu.memory_space<smem>>
    %46 = vector.broadcast %45 : f32 to vector<2x64xf32>
    %47 = arith.mulf %7, %46 : vector<2x64xf32>
    %48 = arith.addf %44, %47 : vector<2x64xf32>
    %c1_30 = arith.constant 1 : index
    %49 = memref.load %arg3[%c1_30] : memref<32xf32, #tpu.memory_space<smem>>
    %50 = vector.broadcast %49 : f32 to vector<2x64xf32>
    %51 = arith.addf %48, %50 : vector<2x64xf32>
    %cst_31 = arith.constant 0.000000e+00 : f32
    %52 = vector.broadcast %cst_31 : f32 to vector<2x64xf32>
    %53 = arith.maximumf %51, %52 : vector<2x64xf32>
    %54 = arith.truncf %53 : vector<2x64xf32> to vector<2x64xbf16>
    %c1_32 = arith.constant 1 : index
    %c0_33 = arith.constant 0 : index
    %c0_34 = arith.constant 0 : index
    %55 = vector.load %arg4[%c1_32, %c0_33, %c0_34] : memref<32x64x128xbf16, #tpu.memory_space<vmem>>, vector<1x64x128xbf16>
    %56 = vector.shape_cast %55 : vector<1x64x128xbf16> to vector<64x128xbf16>
    %cst_35 = arith.constant dense<0.000000e+00> : vector<2x128xf32>
    %57 = tpu.matmul %54, %56, %cst_35 {dimension_numbers = #tpu.dot_dimension_numbers<[1], [0], [0], [1], [0, 0, 1, 1], [], []>} : vector<2x64xbf16>, vector<64x128xbf16>, vector<2x128xf32> -> vector<2x128xf32>
    %58 = arith.addf %33, %57 : vector<2x128xf32>
    %c2_36 = arith.constant 2 : index
    %c0_37 = arith.constant 0 : index
    %59 = memref.load %arg2[%c2_36, %c0_37] : memref<32x4xf32, #tpu.memory_space<smem>>
    %60 = vector.broadcast %59 : f32 to vector<2x64xf32>
    %61 = arith.mulf %1, %60 : vector<2x64xf32>
    %c2_38 = arith.constant 2 : index
    %c1_39 = arith.constant 1 : index
    %62 = memref.load %arg2[%c2_38, %c1_39] : memref<32x4xf32, #tpu.memory_space<smem>>
    %63 = vector.broadcast %62 : f32 to vector<2x64xf32>
    %64 = arith.mulf %3, %63 : vector<2x64xf32>
    %65 = arith.addf %61, %64 : vector<2x64xf32>
    %c2_40 = arith.constant 2 : index
    %c2_41 = arith.constant 2 : index
    %66 = memref.load %arg2[%c2_40, %c2_41] : memref<32x4xf32, #tpu.memory_space<smem>>
    %67 = vector.broadcast %66 : f32 to vector<2x64xf32>
    %68 = arith.mulf %5, %67 : vector<2x64xf32>
    %69 = arith.addf %65, %68 : vector<2x64xf32>
    %c2_42 = arith.constant 2 : index
    %c3_43 = arith.constant 3 : index
    %70 = memref.load %arg2[%c2_42, %c3_43] : memref<32x4xf32, #tpu.memory_space<smem>>
    %71 = vector.broadcast %70 : f32 to vector<2x64xf32>
    %72 = arith.mulf %7, %71 : vector<2x64xf32>
    %73 = arith.addf %69, %72 : vector<2x64xf32>
    %c2_44 = arith.constant 2 : index
    %74 = memref.load %arg3[%c2_44] : memref<32xf32, #tpu.memory_space<smem>>
    %75 = vector.broadcast %74 : f32 to vector<2x64xf32>
    %76 = arith.addf %73, %75 : vector<2x64xf32>
    %cst_45 = arith.constant 0.000000e+00 : f32
    %77 = vector.broadcast %cst_45 : f32 to vector<2x64xf32>
    %78 = arith.maximumf %76, %77 : vector<2x64xf32>
    %79 = arith.truncf %78 : vector<2x64xf32> to vector<2x64xbf16>
    %c2_46 = arith.constant 2 : index
    %c0_47 = arith.constant 0 : index
    %c0_48 = arith.constant 0 : index
    %80 = vector.load %arg4[%c2_46, %c0_47, %c0_48] : memref<32x64x128xbf16, #tpu.memory_space<vmem>>, vector<1x64x128xbf16>
    %81 = vector.shape_cast %80 : vector<1x64x128xbf16> to vector<64x128xbf16>
    %cst_49 = arith.constant dense<0.000000e+00> : vector<2x128xf32>
    %82 = tpu.matmul %79, %81, %cst_49 {dimension_numbers = #tpu.dot_dimension_numbers<[1], [0], [0], [1], [0, 0, 1, 1], [], []>} : vector<2x64xbf16>, vector<64x128xbf16>, vector<2x128xf32> -> vector<2x128xf32>
    %83 = arith.addf %58, %82 : vector<2x128xf32>
    %c3_50 = arith.constant 3 : index
    %c0_51 = arith.constant 0 : index
    %84 = memref.load %arg2[%c3_50, %c0_51] : memref<32x4xf32, #tpu.memory_space<smem>>
    %85 = vector.broadcast %84 : f32 to vector<2x64xf32>
    %86 = arith.mulf %1, %85 : vector<2x64xf32>
    %c3_52 = arith.constant 3 : index
    %c1_53 = arith.constant 1 : index
    %87 = memref.load %arg2[%c3_52, %c1_53] : memref<32x4xf32, #tpu.memory_space<smem>>
    %88 = vector.broadcast %87 : f32 to vector<2x64xf32>
    %89 = arith.mulf %3, %88 : vector<2x64xf32>
    %90 = arith.addf %86, %89 : vector<2x64xf32>
    %c3_54 = arith.constant 3 : index
    %c2_55 = arith.constant 2 : index
    %91 = memref.load %arg2[%c3_54, %c2_55] : memref<32x4xf32, #tpu.memory_space<smem>>
    %92 = vector.broadcast %91 : f32 to vector<2x64xf32>
    %93 = arith.mulf %5, %92 : vector<2x64xf32>
    %94 = arith.addf %90, %93 : vector<2x64xf32>
    %c3_56 = arith.constant 3 : index
    %c3_57 = arith.constant 3 : index
    %95 = memref.load %arg2[%c3_56, %c3_57] : memref<32x4xf32, #tpu.memory_space<smem>>
    %96 = vector.broadcast %95 : f32 to vector<2x64xf32>
    %97 = arith.mulf %7, %96 : vector<2x64xf32>
    %98 = arith.addf %94, %97 : vector<2x64xf32>
    %c3_58 = arith.constant 3 : index
    %99 = memref.load %arg3[%c3_58] : memref<32xf32, #tpu.memory_space<smem>>
    %100 = vector.broadcast %99 : f32 to vector<2x64xf32>
    %101 = arith.addf %98, %100 : vector<2x64xf32>
    %cst_59 = arith.constant 0.000000e+00 : f32
    %102 = vector.broadcast %cst_59 : f32 to vector<2x64xf32>
    %103 = arith.maximumf %101, %102 : vector<2x64xf32>
    %104 = arith.truncf %103 : vector<2x64xf32> to vector<2x64xbf16>
    %c3_60 = arith.constant 3 : index
    %c0_61 = arith.constant 0 : index
    %c0_62 = arith.constant 0 : index
    %105 = vector.load %arg4[%c3_60, %c0_61, %c0_62] : memref<32x64x128xbf16, #tpu.memory_space<vmem>>, vector<1x64x128xbf16>
    %106 = vector.shape_cast %105 : vector<1x64x128xbf16> to vector<64x128xbf16>
    %cst_63 = arith.constant dense<0.000000e+00> : vector<2x128xf32>
    %107 = tpu.matmul %104, %106, %cst_63 {dimension_numbers = #tpu.dot_dimension_numbers<[1], [0], [0], [1], [0, 0, 1, 1], [], []>} : vector<2x64xbf16>, vector<64x128xbf16>, vector<2x128xf32> -> vector<2x128xf32>
    %108 = arith.addf %83, %107 : vector<2x128xf32>
    %c4 = arith.constant 4 : index
    %c0_64 = arith.constant 0 : index
    %109 = memref.load %arg2[%c4, %c0_64] : memref<32x4xf32, #tpu.memory_space<smem>>
    %110 = vector.broadcast %109 : f32 to vector<2x64xf32>
    %111 = arith.mulf %1, %110 : vector<2x64xf32>
    %c4_65 = arith.constant 4 : index
    %c1_66 = arith.constant 1 : index
    %112 = memref.load %arg2[%c4_65, %c1_66] : memref<32x4xf32, #tpu.memory_space<smem>>
    %113 = vector.broadcast %112 : f32 to vector<2x64xf32>
    %114 = arith.mulf %3, %113 : vector<2x64xf32>
    %115 = arith.addf %111, %114 : vector<2x64xf32>
    %c4_67 = arith.constant 4 : index
    %c2_68 = arith.constant 2 : index
    %116 = memref.load %arg2[%c4_67, %c2_68] : memref<32x4xf32, #tpu.memory_space<smem>>
    %117 = vector.broadcast %116 : f32 to vector<2x64xf32>
    %118 = arith.mulf %5, %117 : vector<2x64xf32>
    %119 = arith.addf %115, %118 : vector<2x64xf32>
    %c4_69 = arith.constant 4 : index
    %c3_70 = arith.constant 3 : index
    %120 = memref.load %arg2[%c4_69, %c3_70] : memref<32x4xf32, #tpu.memory_space<smem>>
    %121 = vector.broadcast %120 : f32 to vector<2x64xf32>
    %122 = arith.mulf %7, %121 : vector<2x64xf32>
    %123 = arith.addf %119, %122 : vector<2x64xf32>
    %c4_71 = arith.constant 4 : index
    %124 = memref.load %arg3[%c4_71] : memref<32xf32, #tpu.memory_space<smem>>
    %125 = vector.broadcast %124 : f32 to vector<2x64xf32>
    %126 = arith.addf %123, %125 : vector<2x64xf32>
    %cst_72 = arith.constant 0.000000e+00 : f32
    %127 = vector.broadcast %cst_72 : f32 to vector<2x64xf32>
    %128 = arith.maximumf %126, %127 : vector<2x64xf32>
    %129 = arith.truncf %128 : vector<2x64xf32> to vector<2x64xbf16>
    %c4_73 = arith.constant 4 : index
    %c0_74 = arith.constant 0 : index
    %c0_75 = arith.constant 0 : index
    %130 = vector.load %arg4[%c4_73, %c0_74, %c0_75] : memref<32x64x128xbf16, #tpu.memory_space<vmem>>, vector<1x64x128xbf16>
    %131 = vector.shape_cast %130 : vector<1x64x128xbf16> to vector<64x128xbf16>
    %cst_76 = arith.constant dense<0.000000e+00> : vector<2x128xf32>
    %132 = tpu.matmul %129, %131, %cst_76 {dimension_numbers = #tpu.dot_dimension_numbers<[1], [0], [0], [1], [0, 0, 1, 1], [], []>} : vector<2x64xbf16>, vector<64x128xbf16>, vector<2x128xf32> -> vector<2x128xf32>
    %133 = arith.addf %108, %132 : vector<2x128xf32>
    %c5 = arith.constant 5 : index
    %c0_77 = arith.constant 0 : index
    %134 = memref.load %arg2[%c5, %c0_77] : memref<32x4xf32, #tpu.memory_space<smem>>
    %135 = vector.broadcast %134 : f32 to vector<2x64xf32>
    %136 = arith.mulf %1, %135 : vector<2x64xf32>
    %c5_78 = arith.constant 5 : index
    %c1_79 = arith.constant 1 : index
    %137 = memref.load %arg2[%c5_78, %c1_79] : memref<32x4xf32, #tpu.memory_space<smem>>
    %138 = vector.broadcast %137 : f32 to vector<2x64xf32>
    %139 = arith.mulf %3, %138 : vector<2x64xf32>
    %140 = arith.addf %136, %139 : vector<2x64xf32>
    %c5_80 = arith.constant 5 : index
    %c2_81 = arith.constant 2 : index
    %141 = memref.load %arg2[%c5_80, %c2_81] : memref<32x4xf32, #tpu.memory_space<smem>>
    %142 = vector.broadcast %141 : f32 to vector<2x64xf32>
    %143 = arith.mulf %5, %142 : vector<2x64xf32>
    %144 = arith.addf %140, %143 : vector<2x64xf32>
    %c5_82 = arith.constant 5 : index
    %c3_83 = arith.constant 3 : index
    %145 = memref.load %arg2[%c5_82, %c3_83] : memref<32x4xf32, #tpu.memory_space<smem>>
    %146 = vector.broadcast %145 : f32 to vector<2x64xf32>
    %147 = arith.mulf %7, %146 : vector<2x64xf32>
    %148 = arith.addf %144, %147 : vector<2x64xf32>
    %c5_84 = arith.constant 5 : index
    %149 = memref.load %arg3[%c5_84] : memref<32xf32, #tpu.memory_space<smem>>
    %150 = vector.broadcast %149 : f32 to vector<2x64xf32>
    %151 = arith.addf %148, %150 : vector<2x64xf32>
    %cst_85 = arith.constant 0.000000e+00 : f32
    %152 = vector.broadcast %cst_85 : f32 to vector<2x64xf32>
    %153 = arith.maximumf %151, %152 : vector<2x64xf32>
    %154 = arith.truncf %153 : vector<2x64xf32> to vector<2x64xbf16>
    %c5_86 = arith.constant 5 : index
    %c0_87 = arith.constant 0 : index
    %c0_88 = arith.constant 0 : index
    %155 = vector.load %arg4[%c5_86, %c0_87, %c0_88] : memref<32x64x128xbf16, #tpu.memory_space<vmem>>, vector<1x64x128xbf16>
    %156 = vector.shape_cast %155 : vector<1x64x128xbf16> to vector<64x128xbf16>
    %cst_89 = arith.constant dense<0.000000e+00> : vector<2x128xf32>
    %157 = tpu.matmul %154, %156, %cst_89 {dimension_numbers = #tpu.dot_dimension_numbers<[1], [0], [0], [1], [0, 0, 1, 1], [], []>} : vector<2x64xbf16>, vector<64x128xbf16>, vector<2x128xf32> -> vector<2x128xf32>
    %158 = arith.addf %133, %157 : vector<2x128xf32>
    %c6 = arith.constant 6 : index
    %c0_90 = arith.constant 0 : index
    %159 = memref.load %arg2[%c6, %c0_90] : memref<32x4xf32, #tpu.memory_space<smem>>
    %160 = vector.broadcast %159 : f32 to vector<2x64xf32>
    %161 = arith.mulf %1, %160 : vector<2x64xf32>
    %c6_91 = arith.constant 6 : index
    %c1_92 = arith.constant 1 : index
    %162 = memref.load %arg2[%c6_91, %c1_92] : memref<32x4xf32, #tpu.memory_space<smem>>
    %163 = vector.broadcast %162 : f32 to vector<2x64xf32>
    %164 = arith.mulf %3, %163 : vector<2x64xf32>
    %165 = arith.addf %161, %164 : vector<2x64xf32>
    %c6_93 = arith.constant 6 : index
    %c2_94 = arith.constant 2 : index
    %166 = memref.load %arg2[%c6_93, %c2_94] : memref<32x4xf32, #tpu.memory_space<smem>>
    %167 = vector.broadcast %166 : f32 to vector<2x64xf32>
    %168 = arith.mulf %5, %167 : vector<2x64xf32>
    %169 = arith.addf %165, %168 : vector<2x64xf32>
    %c6_95 = arith.constant 6 : index
    %c3_96 = arith.constant 3 : index
    %170 = memref.load %arg2[%c6_95, %c3_96] : memref<32x4xf32, #tpu.memory_space<smem>>
    %171 = vector.broadcast %170 : f32 to vector<2x64xf32>
    %172 = arith.mulf %7, %171 : vector<2x64xf32>
    %173 = arith.addf %169, %172 : vector<2x64xf32>
    %c6_97 = arith.constant 6 : index
    %174 = memref.load %arg3[%c6_97] : memref<32xf32, #tpu.memory_space<smem>>
    %175 = vector.broadcast %174 : f32 to vector<2x64xf32>
    %176 = arith.addf %173, %175 : vector<2x64xf32>
    %cst_98 = arith.constant 0.000000e+00 : f32
    %177 = vector.broadcast %cst_98 : f32 to vector<2x64xf32>
    %178 = arith.maximumf %176, %177 : vector<2x64xf32>
    %179 = arith.truncf %178 : vector<2x64xf32> to vector<2x64xbf16>
    %c6_99 = arith.constant 6 : index
    %c0_100 = arith.constant 0 : index
    %c0_101 = arith.constant 0 : index
    %180 = vector.load %arg4[%c6_99, %c0_100, %c0_101] : memref<32x64x128xbf16, #tpu.memory_space<vmem>>, vector<1x64x128xbf16>
    %181 = vector.shape_cast %180 : vector<1x64x128xbf16> to vector<64x128xbf16>
    %cst_102 = arith.constant dense<0.000000e+00> : vector<2x128xf32>
    %182 = tpu.matmul %179, %181, %cst_102 {dimension_numbers = #tpu.dot_dimension_numbers<[1], [0], [0], [1], [0, 0, 1, 1], [], []>} : vector<2x64xbf16>, vector<64x128xbf16>, vector<2x128xf32> -> vector<2x128xf32>
    %183 = arith.addf %158, %182 : vector<2x128xf32>
    %c7 = arith.constant 7 : index
    %c0_103 = arith.constant 0 : index
    %184 = memref.load %arg2[%c7, %c0_103] : memref<32x4xf32, #tpu.memory_space<smem>>
    %185 = vector.broadcast %184 : f32 to vector<2x64xf32>
    %186 = arith.mulf %1, %185 : vector<2x64xf32>
    %c7_104 = arith.constant 7 : index
    %c1_105 = arith.constant 1 : index
    %187 = memref.load %arg2[%c7_104, %c1_105] : memref<32x4xf32, #tpu.memory_space<smem>>
    %188 = vector.broadcast %187 : f32 to vector<2x64xf32>
    %189 = arith.mulf %3, %188 : vector<2x64xf32>
    %190 = arith.addf %186, %189 : vector<2x64xf32>
    %c7_106 = arith.constant 7 : index
    %c2_107 = arith.constant 2 : index
    %191 = memref.load %arg2[%c7_106, %c2_107] : memref<32x4xf32, #tpu.memory_space<smem>>
    %192 = vector.broadcast %191 : f32 to vector<2x64xf32>
    %193 = arith.mulf %5, %192 : vector<2x64xf32>
    %194 = arith.addf %190, %193 : vector<2x64xf32>
    %c7_108 = arith.constant 7 : index
    %c3_109 = arith.constant 3 : index
    %195 = memref.load %arg2[%c7_108, %c3_109] : memref<32x4xf32, #tpu.memory_space<smem>>
    %196 = vector.broadcast %195 : f32 to vector<2x64xf32>
    %197 = arith.mulf %7, %196 : vector<2x64xf32>
    %198 = arith.addf %194, %197 : vector<2x64xf32>
    %c7_110 = arith.constant 7 : index
    %199 = memref.load %arg3[%c7_110] : memref<32xf32, #tpu.memory_space<smem>>
    %200 = vector.broadcast %199 : f32 to vector<2x64xf32>
    %201 = arith.addf %198, %200 : vector<2x64xf32>
    %cst_111 = arith.constant 0.000000e+00 : f32
    %202 = vector.broadcast %cst_111 : f32 to vector<2x64xf32>
    %203 = arith.maximumf %201, %202 : vector<2x64xf32>
    %204 = arith.truncf %203 : vector<2x64xf32> to vector<2x64xbf16>
    %c7_112 = arith.constant 7 : index
    %c0_113 = arith.constant 0 : index
    %c0_114 = arith.constant 0 : index
    %205 = vector.load %arg4[%c7_112, %c0_113, %c0_114] : memref<32x64x128xbf16, #tpu.memory_space<vmem>>, vector<1x64x128xbf16>
    %206 = vector.shape_cast %205 : vector<1x64x128xbf16> to vector<64x128xbf16>
    %cst_115 = arith.constant dense<0.000000e+00> : vector<2x128xf32>
    %207 = tpu.matmul %204, %206, %cst_115 {dimension_numbers = #tpu.dot_dimension_numbers<[1], [0], [0], [1], [0, 0, 1, 1], [], []>} : vector<2x64xbf16>, vector<64x128xbf16>, vector<2x128xf32> -> vector<2x128xf32>
    %208 = arith.addf %183, %207 : vector<2x128xf32>
    %c8 = arith.constant 8 : index
    %c0_116 = arith.constant 0 : index
    %209 = memref.load %arg2[%c8, %c0_116] : memref<32x4xf32, #tpu.memory_space<smem>>
    %210 = vector.broadcast %209 : f32 to vector<2x64xf32>
    %211 = arith.mulf %1, %210 : vector<2x64xf32>
    %c8_117 = arith.constant 8 : index
    %c1_118 = arith.constant 1 : index
    %212 = memref.load %arg2[%c8_117, %c1_118] : memref<32x4xf32, #tpu.memory_space<smem>>
    %213 = vector.broadcast %212 : f32 to vector<2x64xf32>
    %214 = arith.mulf %3, %213 : vector<2x64xf32>
    %215 = arith.addf %211, %214 : vector<2x64xf32>
    %c8_119 = arith.constant 8 : index
    %c2_120 = arith.constant 2 : index
    %216 = memref.load %arg2[%c8_119, %c2_120] : memref<32x4xf32, #tpu.memory_space<smem>>
    %217 = vector.broadcast %216 : f32 to vector<2x64xf32>
    %218 = arith.mulf %5, %217 : vector<2x64xf32>
    %219 = arith.addf %215, %218 : vector<2x64xf32>
    %c8_121 = arith.constant 8 : index
    %c3_122 = arith.constant 3 : index
    %220 = memref.load %arg2[%c8_121, %c3_122] : memref<32x4xf32, #tpu.memory_space<smem>>
    %221 = vector.broadcast %220 : f32 to vector<2x64xf32>
    %222 = arith.mulf %7, %221 : vector<2x64xf32>
    %223 = arith.addf %219, %222 : vector<2x64xf32>
    %c8_123 = arith.constant 8 : index
    %224 = memref.load %arg3[%c8_123] : memref<32xf32, #tpu.memory_space<smem>>
    %225 = vector.broadcast %224 : f32 to vector<2x64xf32>
    %226 = arith.addf %223, %225 : vector<2x64xf32>
    %cst_124 = arith.constant 0.000000e+00 : f32
    %227 = vector.broadcast %cst_124 : f32 to vector<2x64xf32>
    %228 = arith.maximumf %226, %227 : vector<2x64xf32>
    %229 = arith.truncf %228 : vector<2x64xf32> to vector<2x64xbf16>
    %c8_125 = arith.constant 8 : index
    %c0_126 = arith.constant 0 : index
    %c0_127 = arith.constant 0 : index
    %230 = vector.load %arg4[%c8_125, %c0_126, %c0_127] : memref<32x64x128xbf16, #tpu.memory_space<vmem>>, vector<1x64x128xbf16>
    %231 = vector.shape_cast %230 : vector<1x64x128xbf16> to vector<64x128xbf16>
    %cst_128 = arith.constant dense<0.000000e+00> : vector<2x128xf32>
    %232 = tpu.matmul %229, %231, %cst_128 {dimension_numbers = #tpu.dot_dimension_numbers<[1], [0], [0], [1], [0, 0, 1, 1], [], []>} : vector<2x64xbf16>, vector<64x128xbf16>, vector<2x128xf32> -> vector<2x128xf32>
    %233 = arith.addf %208, %232 : vector<2x128xf32>
    %c9 = arith.constant 9 : index
    %c0_129 = arith.constant 0 : index
    %234 = memref.load %arg2[%c9, %c0_129] : memref<32x4xf32, #tpu.memory_space<smem>>
    %235 = vector.broadcast %234 : f32 to vector<2x64xf32>
    %236 = arith.mulf %1, %235 : vector<2x64xf32>
    %c9_130 = arith.constant 9 : index
    %c1_131 = arith.constant 1 : index
    %237 = memref.load %arg2[%c9_130, %c1_131] : memref<32x4xf32, #tpu.memory_space<smem>>
    %238 = vector.broadcast %237 : f32 to vector<2x64xf32>
    %239 = arith.mulf %3, %238 : vector<2x64xf32>
    %240 = arith.addf %236, %239 : vector<2x64xf32>
    %c9_132 = arith.constant 9 : index
    %c2_133 = arith.constant 2 : index
    %241 = memref.load %arg2[%c9_132, %c2_133] : memref<32x4xf32, #tpu.memory_space<smem>>
    %242 = vector.broadcast %241 : f32 to vector<2x64xf32>
    %243 = arith.mulf %5, %242 : vector<2x64xf32>
    %244 = arith.addf %240, %243 : vector<2x64xf32>
    %c9_134 = arith.constant 9 : index
    %c3_135 = arith.constant 3 : index
    %245 = memref.load %arg2[%c9_134, %c3_135] : memref<32x4xf32, #tpu.memory_space<smem>>
    %246 = vector.broadcast %245 : f32 to vector<2x64xf32>
    %247 = arith.mulf %7, %246 : vector<2x64xf32>
    %248 = arith.addf %244, %247 : vector<2x64xf32>
    %c9_136 = arith.constant 9 : index
    %249 = memref.load %arg3[%c9_136] : memref<32xf32, #tpu.memory_space<smem>>
    %250 = vector.broadcast %249 : f32 to vector<2x64xf32>
    %251 = arith.addf %248, %250 : vector<2x64xf32>
    %cst_137 = arith.constant 0.000000e+00 : f32
    %252 = vector.broadcast %cst_137 : f32 to vector<2x64xf32>
    %253 = arith.maximumf %251, %252 : vector<2x64xf32>
    %254 = arith.truncf %253 : vector<2x64xf32> to vector<2x64xbf16>
    %c9_138 = arith.constant 9 : index
    %c0_139 = arith.constant 0 : index
    %c0_140 = arith.constant 0 : index
    %255 = vector.load %arg4[%c9_138, %c0_139, %c0_140] : memref<32x64x128xbf16, #tpu.memory_space<vmem>>, vector<1x64x128xbf16>
    %256 = vector.shape_cast %255 : vector<1x64x128xbf16> to vector<64x128xbf16>
    %cst_141 = arith.constant dense<0.000000e+00> : vector<2x128xf32>
    %257 = tpu.matmul %254, %256, %cst_141 {dimension_numbers = #tpu.dot_dimension_numbers<[1], [0], [0], [1], [0, 0, 1, 1], [], []>} : vector<2x64xbf16>, vector<64x128xbf16>, vector<2x128xf32> -> vector<2x128xf32>
    %258 = arith.addf %233, %257 : vector<2x128xf32>
    %c10 = arith.constant 10 : index
    %c0_142 = arith.constant 0 : index
    %259 = memref.load %arg2[%c10, %c0_142] : memref<32x4xf32, #tpu.memory_space<smem>>
    %260 = vector.broadcast %259 : f32 to vector<2x64xf32>
    %261 = arith.mulf %1, %260 : vector<2x64xf32>
    %c10_143 = arith.constant 10 : index
    %c1_144 = arith.constant 1 : index
    %262 = memref.load %arg2[%c10_143, %c1_144] : memref<32x4xf32, #tpu.memory_space<smem>>
    %263 = vector.broadcast %262 : f32 to vector<2x64xf32>
    %264 = arith.mulf %3, %263 : vector<2x64xf32>
    %265 = arith.addf %261, %264 : vector<2x64xf32>
    %c10_145 = arith.constant 10 : index
    %c2_146 = arith.constant 2 : index
    %266 = memref.load %arg2[%c10_145, %c2_146] : memref<32x4xf32, #tpu.memory_space<smem>>
    %267 = vector.broadcast %266 : f32 to vector<2x64xf32>
    %268 = arith.mulf %5, %267 : vector<2x64xf32>
    %269 = arith.addf %265, %268 : vector<2x64xf32>
    %c10_147 = arith.constant 10 : index
    %c3_148 = arith.constant 3 : index
    %270 = memref.load %arg2[%c10_147, %c3_148] : memref<32x4xf32, #tpu.memory_space<smem>>
    %271 = vector.broadcast %270 : f32 to vector<2x64xf32>
    %272 = arith.mulf %7, %271 : vector<2x64xf32>
    %273 = arith.addf %269, %272 : vector<2x64xf32>
    %c10_149 = arith.constant 10 : index
    %274 = memref.load %arg3[%c10_149] : memref<32xf32, #tpu.memory_space<smem>>
    %275 = vector.broadcast %274 : f32 to vector<2x64xf32>
    %276 = arith.addf %273, %275 : vector<2x64xf32>
    %cst_150 = arith.constant 0.000000e+00 : f32
    %277 = vector.broadcast %cst_150 : f32 to vector<2x64xf32>
    %278 = arith.maximumf %276, %277 : vector<2x64xf32>
    %279 = arith.truncf %278 : vector<2x64xf32> to vector<2x64xbf16>
    %c10_151 = arith.constant 10 : index
    %c0_152 = arith.constant 0 : index
    %c0_153 = arith.constant 0 : index
    %280 = vector.load %arg4[%c10_151, %c0_152, %c0_153] : memref<32x64x128xbf16, #tpu.memory_space<vmem>>, vector<1x64x128xbf16>
    %281 = vector.shape_cast %280 : vector<1x64x128xbf16> to vector<64x128xbf16>
    %cst_154 = arith.constant dense<0.000000e+00> : vector<2x128xf32>
    %282 = tpu.matmul %279, %281, %cst_154 {dimension_numbers = #tpu.dot_dimension_numbers<[1], [0], [0], [1], [0, 0, 1, 1], [], []>} : vector<2x64xbf16>, vector<64x128xbf16>, vector<2x128xf32> -> vector<2x128xf32>
    %283 = arith.addf %258, %282 : vector<2x128xf32>
    %c11 = arith.constant 11 : index
    %c0_155 = arith.constant 0 : index
    %284 = memref.load %arg2[%c11, %c0_155] : memref<32x4xf32, #tpu.memory_space<smem>>
    %285 = vector.broadcast %284 : f32 to vector<2x64xf32>
    %286 = arith.mulf %1, %285 : vector<2x64xf32>
    %c11_156 = arith.constant 11 : index
    %c1_157 = arith.constant 1 : index
    %287 = memref.load %arg2[%c11_156, %c1_157] : memref<32x4xf32, #tpu.memory_space<smem>>
    %288 = vector.broadcast %287 : f32 to vector<2x64xf32>
    %289 = arith.mulf %3, %288 : vector<2x64xf32>
    %290 = arith.addf %286, %289 : vector<2x64xf32>
    %c11_158 = arith.constant 11 : index
    %c2_159 = arith.constant 2 : index
    %291 = memref.load %arg2[%c11_158, %c2_159] : memref<32x4xf32, #tpu.memory_space<smem>>
    %292 = vector.broadcast %291 : f32 to vector<2x64xf32>
    %293 = arith.mulf %5, %292 : vector<2x64xf32>
    %294 = arith.addf %290, %293 : vector<2x64xf32>
    %c11_160 = arith.constant 11 : index
    %c3_161 = arith.constant 3 : index
    %295 = memref.load %arg2[%c11_160, %c3_161] : memref<32x4xf32, #tpu.memory_space<smem>>
    %296 = vector.broadcast %295 : f32 to vector<2x64xf32>
    %297 = arith.mulf %7, %296 : vector<2x64xf32>
    %298 = arith.addf %294, %297 : vector<2x64xf32>
    %c11_162 = arith.constant 11 : index
    %299 = memref.load %arg3[%c11_162] : memref<32xf32, #tpu.memory_space<smem>>
    %300 = vector.broadcast %299 : f32 to vector<2x64xf32>
    %301 = arith.addf %298, %300 : vector<2x64xf32>
    %cst_163 = arith.constant 0.000000e+00 : f32
    %302 = vector.broadcast %cst_163 : f32 to vector<2x64xf32>
    %303 = arith.maximumf %301, %302 : vector<2x64xf32>
    %304 = arith.truncf %303 : vector<2x64xf32> to vector<2x64xbf16>
    %c11_164 = arith.constant 11 : index
    %c0_165 = arith.constant 0 : index
    %c0_166 = arith.constant 0 : index
    %305 = vector.load %arg4[%c11_164, %c0_165, %c0_166] : memref<32x64x128xbf16, #tpu.memory_space<vmem>>, vector<1x64x128xbf16>
    %306 = vector.shape_cast %305 : vector<1x64x128xbf16> to vector<64x128xbf16>
    %cst_167 = arith.constant dense<0.000000e+00> : vector<2x128xf32>
    %307 = tpu.matmul %304, %306, %cst_167 {dimension_numbers = #tpu.dot_dimension_numbers<[1], [0], [0], [1], [0, 0, 1, 1], [], []>} : vector<2x64xbf16>, vector<64x128xbf16>, vector<2x128xf32> -> vector<2x128xf32>
    %308 = arith.addf %283, %307 : vector<2x128xf32>
    %c12 = arith.constant 12 : index
    %c0_168 = arith.constant 0 : index
    %309 = memref.load %arg2[%c12, %c0_168] : memref<32x4xf32, #tpu.memory_space<smem>>
    %310 = vector.broadcast %309 : f32 to vector<2x64xf32>
    %311 = arith.mulf %1, %310 : vector<2x64xf32>
    %c12_169 = arith.constant 12 : index
    %c1_170 = arith.constant 1 : index
    %312 = memref.load %arg2[%c12_169, %c1_170] : memref<32x4xf32, #tpu.memory_space<smem>>
    %313 = vector.broadcast %312 : f32 to vector<2x64xf32>
    %314 = arith.mulf %3, %313 : vector<2x64xf32>
    %315 = arith.addf %311, %314 : vector<2x64xf32>
    %c12_171 = arith.constant 12 : index
    %c2_172 = arith.constant 2 : index
    %316 = memref.load %arg2[%c12_171, %c2_172] : memref<32x4xf32, #tpu.memory_space<smem>>
    %317 = vector.broadcast %316 : f32 to vector<2x64xf32>
    %318 = arith.mulf %5, %317 : vector<2x64xf32>
    %319 = arith.addf %315, %318 : vector<2x64xf32>
    %c12_173 = arith.constant 12 : index
    %c3_174 = arith.constant 3 : index
    %320 = memref.load %arg2[%c12_173, %c3_174] : memref<32x4xf32, #tpu.memory_space<smem>>
    %321 = vector.broadcast %320 : f32 to vector<2x64xf32>
    %322 = arith.mulf %7, %321 : vector<2x64xf32>
    %323 = arith.addf %319, %322 : vector<2x64xf32>
    %c12_175 = arith.constant 12 : index
    %324 = memref.load %arg3[%c12_175] : memref<32xf32, #tpu.memory_space<smem>>
    %325 = vector.broadcast %324 : f32 to vector<2x64xf32>
    %326 = arith.addf %323, %325 : vector<2x64xf32>
    %cst_176 = arith.constant 0.000000e+00 : f32
    %327 = vector.broadcast %cst_176 : f32 to vector<2x64xf32>
    %328 = arith.maximumf %326, %327 : vector<2x64xf32>
    %329 = arith.truncf %328 : vector<2x64xf32> to vector<2x64xbf16>
    %c12_177 = arith.constant 12 : index
    %c0_178 = arith.constant 0 : index
    %c0_179 = arith.constant 0 : index
    %330 = vector.load %arg4[%c12_177, %c0_178, %c0_179] : memref<32x64x128xbf16, #tpu.memory_space<vmem>>, vector<1x64x128xbf16>
    %331 = vector.shape_cast %330 : vector<1x64x128xbf16> to vector<64x128xbf16>
    %cst_180 = arith.constant dense<0.000000e+00> : vector<2x128xf32>
    %332 = tpu.matmul %329, %331, %cst_180 {dimension_numbers = #tpu.dot_dimension_numbers<[1], [0], [0], [1], [0, 0, 1, 1], [], []>} : vector<2x64xbf16>, vector<64x128xbf16>, vector<2x128xf32> -> vector<2x128xf32>
    %333 = arith.addf %308, %332 : vector<2x128xf32>
    %c13 = arith.constant 13 : index
    %c0_181 = arith.constant 0 : index
    %334 = memref.load %arg2[%c13, %c0_181] : memref<32x4xf32, #tpu.memory_space<smem>>
    %335 = vector.broadcast %334 : f32 to vector<2x64xf32>
    %336 = arith.mulf %1, %335 : vector<2x64xf32>
    %c13_182 = arith.constant 13 : index
    %c1_183 = arith.constant 1 : index
    %337 = memref.load %arg2[%c13_182, %c1_183] : memref<32x4xf32, #tpu.memory_space<smem>>
    %338 = vector.broadcast %337 : f32 to vector<2x64xf32>
    %339 = arith.mulf %3, %338 : vector<2x64xf32>
    %340 = arith.addf %336, %339 : vector<2x64xf32>
    %c13_184 = arith.constant 13 : index
    %c2_185 = arith.constant 2 : index
    %341 = memref.load %arg2[%c13_184, %c2_185] : memref<32x4xf32, #tpu.memory_space<smem>>
    %342 = vector.broadcast %341 : f32 to vector<2x64xf32>
    %343 = arith.mulf %5, %342 : vector<2x64xf32>
    %344 = arith.addf %340, %343 : vector<2x64xf32>
    %c13_186 = arith.constant 13 : index
    %c3_187 = arith.constant 3 : index
    %345 = memref.load %arg2[%c13_186, %c3_187] : memref<32x4xf32, #tpu.memory_space<smem>>
    %346 = vector.broadcast %345 : f32 to vector<2x64xf32>
    %347 = arith.mulf %7, %346 : vector<2x64xf32>
    %348 = arith.addf %344, %347 : vector<2x64xf32>
    %c13_188 = arith.constant 13 : index
    %349 = memref.load %arg3[%c13_188] : memref<32xf32, #tpu.memory_space<smem>>
    %350 = vector.broadcast %349 : f32 to vector<2x64xf32>
    %351 = arith.addf %348, %350 : vector<2x64xf32>
    %cst_189 = arith.constant 0.000000e+00 : f32
    %352 = vector.broadcast %cst_189 : f32 to vector<2x64xf32>
    %353 = arith.maximumf %351, %352 : vector<2x64xf32>
    %354 = arith.truncf %353 : vector<2x64xf32> to vector<2x64xbf16>
    %c13_190 = arith.constant 13 : index
    %c0_191 = arith.constant 0 : index
    %c0_192 = arith.constant 0 : index
    %355 = vector.load %arg4[%c13_190, %c0_191, %c0_192] : memref<32x64x128xbf16, #tpu.memory_space<vmem>>, vector<1x64x128xbf16>
    %356 = vector.shape_cast %355 : vector<1x64x128xbf16> to vector<64x128xbf16>
    %cst_193 = arith.constant dense<0.000000e+00> : vector<2x128xf32>
    %357 = tpu.matmul %354, %356, %cst_193 {dimension_numbers = #tpu.dot_dimension_numbers<[1], [0], [0], [1], [0, 0, 1, 1], [], []>} : vector<2x64xbf16>, vector<64x128xbf16>, vector<2x128xf32> -> vector<2x128xf32>
    %358 = arith.addf %333, %357 : vector<2x128xf32>
    %c14 = arith.constant 14 : index
    %c0_194 = arith.constant 0 : index
    %359 = memref.load %arg2[%c14, %c0_194] : memref<32x4xf32, #tpu.memory_space<smem>>
    %360 = vector.broadcast %359 : f32 to vector<2x64xf32>
    %361 = arith.mulf %1, %360 : vector<2x64xf32>
    %c14_195 = arith.constant 14 : index
    %c1_196 = arith.constant 1 : index
    %362 = memref.load %arg2[%c14_195, %c1_196] : memref<32x4xf32, #tpu.memory_space<smem>>
    %363 = vector.broadcast %362 : f32 to vector<2x64xf32>
    %364 = arith.mulf %3, %363 : vector<2x64xf32>
    %365 = arith.addf %361, %364 : vector<2x64xf32>
    %c14_197 = arith.constant 14 : index
    %c2_198 = arith.constant 2 : index
    %366 = memref.load %arg2[%c14_197, %c2_198] : memref<32x4xf32, #tpu.memory_space<smem>>
    %367 = vector.broadcast %366 : f32 to vector<2x64xf32>
    %368 = arith.mulf %5, %367 : vector<2x64xf32>
    %369 = arith.addf %365, %368 : vector<2x64xf32>
    %c14_199 = arith.constant 14 : index
    %c3_200 = arith.constant 3 : index
    %370 = memref.load %arg2[%c14_199, %c3_200] : memref<32x4xf32, #tpu.memory_space<smem>>
    %371 = vector.broadcast %370 : f32 to vector<2x64xf32>
    %372 = arith.mulf %7, %371 : vector<2x64xf32>
    %373 = arith.addf %369, %372 : vector<2x64xf32>
    %c14_201 = arith.constant 14 : index
    %374 = memref.load %arg3[%c14_201] : memref<32xf32, #tpu.memory_space<smem>>
    %375 = vector.broadcast %374 : f32 to vector<2x64xf32>
    %376 = arith.addf %373, %375 : vector<2x64xf32>
    %cst_202 = arith.constant 0.000000e+00 : f32
    %377 = vector.broadcast %cst_202 : f32 to vector<2x64xf32>
    %378 = arith.maximumf %376, %377 : vector<2x64xf32>
    %379 = arith.truncf %378 : vector<2x64xf32> to vector<2x64xbf16>
    %c14_203 = arith.constant 14 : index
    %c0_204 = arith.constant 0 : index
    %c0_205 = arith.constant 0 : index
    %380 = vector.load %arg4[%c14_203, %c0_204, %c0_205] : memref<32x64x128xbf16, #tpu.memory_space<vmem>>, vector<1x64x128xbf16>
    %381 = vector.shape_cast %380 : vector<1x64x128xbf16> to vector<64x128xbf16>
    %cst_206 = arith.constant dense<0.000000e+00> : vector<2x128xf32>
    %382 = tpu.matmul %379, %381, %cst_206 {dimension_numbers = #tpu.dot_dimension_numbers<[1], [0], [0], [1], [0, 0, 1, 1], [], []>} : vector<2x64xbf16>, vector<64x128xbf16>, vector<2x128xf32> -> vector<2x128xf32>
    %383 = arith.addf %358, %382 : vector<2x128xf32>
    %c15 = arith.constant 15 : index
    %c0_207 = arith.constant 0 : index
    %384 = memref.load %arg2[%c15, %c0_207] : memref<32x4xf32, #tpu.memory_space<smem>>
    %385 = vector.broadcast %384 : f32 to vector<2x64xf32>
    %386 = arith.mulf %1, %385 : vector<2x64xf32>
    %c15_208 = arith.constant 15 : index
    %c1_209 = arith.constant 1 : index
    %387 = memref.load %arg2[%c15_208, %c1_209] : memref<32x4xf32, #tpu.memory_space<smem>>
    %388 = vector.broadcast %387 : f32 to vector<2x64xf32>
    %389 = arith.mulf %3, %388 : vector<2x64xf32>
    %390 = arith.addf %386, %389 : vector<2x64xf32>
    %c15_210 = arith.constant 15 : index
    %c2_211 = arith.constant 2 : index
    %391 = memref.load %arg2[%c15_210, %c2_211] : memref<32x4xf32, #tpu.memory_space<smem>>
    %392 = vector.broadcast %391 : f32 to vector<2x64xf32>
    %393 = arith.mulf %5, %392 : vector<2x64xf32>
    %394 = arith.addf %390, %393 : vector<2x64xf32>
    %c15_212 = arith.constant 15 : index
    %c3_213 = arith.constant 3 : index
    %395 = memref.load %arg2[%c15_212, %c3_213] : memref<32x4xf32, #tpu.memory_space<smem>>
    %396 = vector.broadcast %395 : f32 to vector<2x64xf32>
    %397 = arith.mulf %7, %396 : vector<2x64xf32>
    %398 = arith.addf %394, %397 : vector<2x64xf32>
    %c15_214 = arith.constant 15 : index
    %399 = memref.load %arg3[%c15_214] : memref<32xf32, #tpu.memory_space<smem>>
    %400 = vector.broadcast %399 : f32 to vector<2x64xf32>
    %401 = arith.addf %398, %400 : vector<2x64xf32>
    %cst_215 = arith.constant 0.000000e+00 : f32
    %402 = vector.broadcast %cst_215 : f32 to vector<2x64xf32>
    %403 = arith.maximumf %401, %402 : vector<2x64xf32>
    %404 = arith.truncf %403 : vector<2x64xf32> to vector<2x64xbf16>
    %c15_216 = arith.constant 15 : index
    %c0_217 = arith.constant 0 : index
    %c0_218 = arith.constant 0 : index
    %405 = vector.load %arg4[%c15_216, %c0_217, %c0_218] : memref<32x64x128xbf16, #tpu.memory_space<vmem>>, vector<1x64x128xbf16>
    %406 = vector.shape_cast %405 : vector<1x64x128xbf16> to vector<64x128xbf16>
    %cst_219 = arith.constant dense<0.000000e+00> : vector<2x128xf32>
    %407 = tpu.matmul %404, %406, %cst_219 {dimension_numbers = #tpu.dot_dimension_numbers<[1], [0], [0], [1], [0, 0, 1, 1], [], []>} : vector<2x64xbf16>, vector<64x128xbf16>, vector<2x128xf32> -> vector<2x128xf32>
    %408 = arith.addf %383, %407 : vector<2x128xf32>
    %c16 = arith.constant 16 : index
    %c0_220 = arith.constant 0 : index
    %409 = memref.load %arg2[%c16, %c0_220] : memref<32x4xf32, #tpu.memory_space<smem>>
    %410 = vector.broadcast %409 : f32 to vector<2x64xf32>
    %411 = arith.mulf %1, %410 : vector<2x64xf32>
    %c16_221 = arith.constant 16 : index
    %c1_222 = arith.constant 1 : index
    %412 = memref.load %arg2[%c16_221, %c1_222] : memref<32x4xf32, #tpu.memory_space<smem>>
    %413 = vector.broadcast %412 : f32 to vector<2x64xf32>
    %414 = arith.mulf %3, %413 : vector<2x64xf32>
    %415 = arith.addf %411, %414 : vector<2x64xf32>
    %c16_223 = arith.constant 16 : index
    %c2_224 = arith.constant 2 : index
    %416 = memref.load %arg2[%c16_223, %c2_224] : memref<32x4xf32, #tpu.memory_space<smem>>
    %417 = vector.broadcast %416 : f32 to vector<2x64xf32>
    %418 = arith.mulf %5, %417 : vector<2x64xf32>
    %419 = arith.addf %415, %418 : vector<2x64xf32>
    %c16_225 = arith.constant 16 : index
    %c3_226 = arith.constant 3 : index
    %420 = memref.load %arg2[%c16_225, %c3_226] : memref<32x4xf32, #tpu.memory_space<smem>>
    %421 = vector.broadcast %420 : f32 to vector<2x64xf32>
    %422 = arith.mulf %7, %421 : vector<2x64xf32>
    %423 = arith.addf %419, %422 : vector<2x64xf32>
    %c16_227 = arith.constant 16 : index
    %424 = memref.load %arg3[%c16_227] : memref<32xf32, #tpu.memory_space<smem>>
    %425 = vector.broadcast %424 : f32 to vector<2x64xf32>
    %426 = arith.addf %423, %425 : vector<2x64xf32>
    %cst_228 = arith.constant 0.000000e+00 : f32
    %427 = vector.broadcast %cst_228 : f32 to vector<2x64xf32>
    %428 = arith.maximumf %426, %427 : vector<2x64xf32>
    %429 = arith.truncf %428 : vector<2x64xf32> to vector<2x64xbf16>
    %c16_229 = arith.constant 16 : index
    %c0_230 = arith.constant 0 : index
    %c0_231 = arith.constant 0 : index
    %430 = vector.load %arg4[%c16_229, %c0_230, %c0_231] : memref<32x64x128xbf16, #tpu.memory_space<vmem>>, vector<1x64x128xbf16>
    %431 = vector.shape_cast %430 : vector<1x64x128xbf16> to vector<64x128xbf16>
    %cst_232 = arith.constant dense<0.000000e+00> : vector<2x128xf32>
    %432 = tpu.matmul %429, %431, %cst_232 {dimension_numbers = #tpu.dot_dimension_numbers<[1], [0], [0], [1], [0, 0, 1, 1], [], []>} : vector<2x64xbf16>, vector<64x128xbf16>, vector<2x128xf32> -> vector<2x128xf32>
    %433 = arith.addf %408, %432 : vector<2x128xf32>
    %c17 = arith.constant 17 : index
    %c0_233 = arith.constant 0 : index
    %434 = memref.load %arg2[%c17, %c0_233] : memref<32x4xf32, #tpu.memory_space<smem>>
    %435 = vector.broadcast %434 : f32 to vector<2x64xf32>
    %436 = arith.mulf %1, %435 : vector<2x64xf32>
    %c17_234 = arith.constant 17 : index
    %c1_235 = arith.constant 1 : index
    %437 = memref.load %arg2[%c17_234, %c1_235] : memref<32x4xf32, #tpu.memory_space<smem>>
    %438 = vector.broadcast %437 : f32 to vector<2x64xf32>
    %439 = arith.mulf %3, %438 : vector<2x64xf32>
    %440 = arith.addf %436, %439 : vector<2x64xf32>
    %c17_236 = arith.constant 17 : index
    %c2_237 = arith.constant 2 : index
    %441 = memref.load %arg2[%c17_236, %c2_237] : memref<32x4xf32, #tpu.memory_space<smem>>
    %442 = vector.broadcast %441 : f32 to vector<2x64xf32>
    %443 = arith.mulf %5, %442 : vector<2x64xf32>
    %444 = arith.addf %440, %443 : vector<2x64xf32>
    %c17_238 = arith.constant 17 : index
    %c3_239 = arith.constant 3 : index
    %445 = memref.load %arg2[%c17_238, %c3_239] : memref<32x4xf32, #tpu.memory_space<smem>>
    %446 = vector.broadcast %445 : f32 to vector<2x64xf32>
    %447 = arith.mulf %7, %446 : vector<2x64xf32>
    %448 = arith.addf %444, %447 : vector<2x64xf32>
    %c17_240 = arith.constant 17 : index
    %449 = memref.load %arg3[%c17_240] : memref<32xf32, #tpu.memory_space<smem>>
    %450 = vector.broadcast %449 : f32 to vector<2x64xf32>
    %451 = arith.addf %448, %450 : vector<2x64xf32>
    %cst_241 = arith.constant 0.000000e+00 : f32
    %452 = vector.broadcast %cst_241 : f32 to vector<2x64xf32>
    %453 = arith.maximumf %451, %452 : vector<2x64xf32>
    %454 = arith.truncf %453 : vector<2x64xf32> to vector<2x64xbf16>
    %c17_242 = arith.constant 17 : index
    %c0_243 = arith.constant 0 : index
    %c0_244 = arith.constant 0 : index
    %455 = vector.load %arg4[%c17_242, %c0_243, %c0_244] : memref<32x64x128xbf16, #tpu.memory_space<vmem>>, vector<1x64x128xbf16>
    %456 = vector.shape_cast %455 : vector<1x64x128xbf16> to vector<64x128xbf16>
    %cst_245 = arith.constant dense<0.000000e+00> : vector<2x128xf32>
    %457 = tpu.matmul %454, %456, %cst_245 {dimension_numbers = #tpu.dot_dimension_numbers<[1], [0], [0], [1], [0, 0, 1, 1], [], []>} : vector<2x64xbf16>, vector<64x128xbf16>, vector<2x128xf32> -> vector<2x128xf32>
    %458 = arith.addf %433, %457 : vector<2x128xf32>
    %c18 = arith.constant 18 : index
    %c0_246 = arith.constant 0 : index
    %459 = memref.load %arg2[%c18, %c0_246] : memref<32x4xf32, #tpu.memory_space<smem>>
    %460 = vector.broadcast %459 : f32 to vector<2x64xf32>
    %461 = arith.mulf %1, %460 : vector<2x64xf32>
    %c18_247 = arith.constant 18 : index
    %c1_248 = arith.constant 1 : index
    %462 = memref.load %arg2[%c18_247, %c1_248] : memref<32x4xf32, #tpu.memory_space<smem>>
    %463 = vector.broadcast %462 : f32 to vector<2x64xf32>
    %464 = arith.mulf %3, %463 : vector<2x64xf32>
    %465 = arith.addf %461, %464 : vector<2x64xf32>
    %c18_249 = arith.constant 18 : index
    %c2_250 = arith.constant 2 : index
    %466 = memref.load %arg2[%c18_249, %c2_250] : memref<32x4xf32, #tpu.memory_space<smem>>
    %467 = vector.broadcast %466 : f32 to vector<2x64xf32>
    %468 = arith.mulf %5, %467 : vector<2x64xf32>
    %469 = arith.addf %465, %468 : vector<2x64xf32>
    %c18_251 = arith.constant 18 : index
    %c3_252 = arith.constant 3 : index
    %470 = memref.load %arg2[%c18_251, %c3_252] : memref<32x4xf32, #tpu.memory_space<smem>>
    %471 = vector.broadcast %470 : f32 to vector<2x64xf32>
    %472 = arith.mulf %7, %471 : vector<2x64xf32>
    %473 = arith.addf %469, %472 : vector<2x64xf32>
    %c18_253 = arith.constant 18 : index
    %474 = memref.load %arg3[%c18_253] : memref<32xf32, #tpu.memory_space<smem>>
    %475 = vector.broadcast %474 : f32 to vector<2x64xf32>
    %476 = arith.addf %473, %475 : vector<2x64xf32>
    %cst_254 = arith.constant 0.000000e+00 : f32
    %477 = vector.broadcast %cst_254 : f32 to vector<2x64xf32>
    %478 = arith.maximumf %476, %477 : vector<2x64xf32>
    %479 = arith.truncf %478 : vector<2x64xf32> to vector<2x64xbf16>
    %c18_255 = arith.constant 18 : index
    %c0_256 = arith.constant 0 : index
    %c0_257 = arith.constant 0 : index
    %480 = vector.load %arg4[%c18_255, %c0_256, %c0_257] : memref<32x64x128xbf16, #tpu.memory_space<vmem>>, vector<1x64x128xbf16>
    %481 = vector.shape_cast %480 : vector<1x64x128xbf16> to vector<64x128xbf16>
    %cst_258 = arith.constant dense<0.000000e+00> : vector<2x128xf32>
    %482 = tpu.matmul %479, %481, %cst_258 {dimension_numbers = #tpu.dot_dimension_numbers<[1], [0], [0], [1], [0, 0, 1, 1], [], []>} : vector<2x64xbf16>, vector<64x128xbf16>, vector<2x128xf32> -> vector<2x128xf32>
    %483 = arith.addf %458, %482 : vector<2x128xf32>
    %c19 = arith.constant 19 : index
    %c0_259 = arith.constant 0 : index
    %484 = memref.load %arg2[%c19, %c0_259] : memref<32x4xf32, #tpu.memory_space<smem>>
    %485 = vector.broadcast %484 : f32 to vector<2x64xf32>
    %486 = arith.mulf %1, %485 : vector<2x64xf32>
    %c19_260 = arith.constant 19 : index
    %c1_261 = arith.constant 1 : index
    %487 = memref.load %arg2[%c19_260, %c1_261] : memref<32x4xf32, #tpu.memory_space<smem>>
    %488 = vector.broadcast %487 : f32 to vector<2x64xf32>
    %489 = arith.mulf %3, %488 : vector<2x64xf32>
    %490 = arith.addf %486, %489 : vector<2x64xf32>
    %c19_262 = arith.constant 19 : index
    %c2_263 = arith.constant 2 : index
    %491 = memref.load %arg2[%c19_262, %c2_263] : memref<32x4xf32, #tpu.memory_space<smem>>
    %492 = vector.broadcast %491 : f32 to vector<2x64xf32>
    %493 = arith.mulf %5, %492 : vector<2x64xf32>
    %494 = arith.addf %490, %493 : vector<2x64xf32>
    %c19_264 = arith.constant 19 : index
    %c3_265 = arith.constant 3 : index
    %495 = memref.load %arg2[%c19_264, %c3_265] : memref<32x4xf32, #tpu.memory_space<smem>>
    %496 = vector.broadcast %495 : f32 to vector<2x64xf32>
    %497 = arith.mulf %7, %496 : vector<2x64xf32>
    %498 = arith.addf %494, %497 : vector<2x64xf32>
    %c19_266 = arith.constant 19 : index
    %499 = memref.load %arg3[%c19_266] : memref<32xf32, #tpu.memory_space<smem>>
    %500 = vector.broadcast %499 : f32 to vector<2x64xf32>
    %501 = arith.addf %498, %500 : vector<2x64xf32>
    %cst_267 = arith.constant 0.000000e+00 : f32
    %502 = vector.broadcast %cst_267 : f32 to vector<2x64xf32>
    %503 = arith.maximumf %501, %502 : vector<2x64xf32>
    %504 = arith.truncf %503 : vector<2x64xf32> to vector<2x64xbf16>
    %c19_268 = arith.constant 19 : index
    %c0_269 = arith.constant 0 : index
    %c0_270 = arith.constant 0 : index
    %505 = vector.load %arg4[%c19_268, %c0_269, %c0_270] : memref<32x64x128xbf16, #tpu.memory_space<vmem>>, vector<1x64x128xbf16>
    %506 = vector.shape_cast %505 : vector<1x64x128xbf16> to vector<64x128xbf16>
    %cst_271 = arith.constant dense<0.000000e+00> : vector<2x128xf32>
    %507 = tpu.matmul %504, %506, %cst_271 {dimension_numbers = #tpu.dot_dimension_numbers<[1], [0], [0], [1], [0, 0, 1, 1], [], []>} : vector<2x64xbf16>, vector<64x128xbf16>, vector<2x128xf32> -> vector<2x128xf32>
    %508 = arith.addf %483, %507 : vector<2x128xf32>
    %c20 = arith.constant 20 : index
    %c0_272 = arith.constant 0 : index
    %509 = memref.load %arg2[%c20, %c0_272] : memref<32x4xf32, #tpu.memory_space<smem>>
    %510 = vector.broadcast %509 : f32 to vector<2x64xf32>
    %511 = arith.mulf %1, %510 : vector<2x64xf32>
    %c20_273 = arith.constant 20 : index
    %c1_274 = arith.constant 1 : index
    %512 = memref.load %arg2[%c20_273, %c1_274] : memref<32x4xf32, #tpu.memory_space<smem>>
    %513 = vector.broadcast %512 : f32 to vector<2x64xf32>
    %514 = arith.mulf %3, %513 : vector<2x64xf32>
    %515 = arith.addf %511, %514 : vector<2x64xf32>
    %c20_275 = arith.constant 20 : index
    %c2_276 = arith.constant 2 : index
    %516 = memref.load %arg2[%c20_275, %c2_276] : memref<32x4xf32, #tpu.memory_space<smem>>
    %517 = vector.broadcast %516 : f32 to vector<2x64xf32>
    %518 = arith.mulf %5, %517 : vector<2x64xf32>
    %519 = arith.addf %515, %518 : vector<2x64xf32>
    %c20_277 = arith.constant 20 : index
    %c3_278 = arith.constant 3 : index
    %520 = memref.load %arg2[%c20_277, %c3_278] : memref<32x4xf32, #tpu.memory_space<smem>>
    %521 = vector.broadcast %520 : f32 to vector<2x64xf32>
    %522 = arith.mulf %7, %521 : vector<2x64xf32>
    %523 = arith.addf %519, %522 : vector<2x64xf32>
    %c20_279 = arith.constant 20 : index
    %524 = memref.load %arg3[%c20_279] : memref<32xf32, #tpu.memory_space<smem>>
    %525 = vector.broadcast %524 : f32 to vector<2x64xf32>
    %526 = arith.addf %523, %525 : vector<2x64xf32>
    %cst_280 = arith.constant 0.000000e+00 : f32
    %527 = vector.broadcast %cst_280 : f32 to vector<2x64xf32>
    %528 = arith.maximumf %526, %527 : vector<2x64xf32>
    %529 = arith.truncf %528 : vector<2x64xf32> to vector<2x64xbf16>
    %c20_281 = arith.constant 20 : index
    %c0_282 = arith.constant 0 : index
    %c0_283 = arith.constant 0 : index
    %530 = vector.load %arg4[%c20_281, %c0_282, %c0_283] : memref<32x64x128xbf16, #tpu.memory_space<vmem>>, vector<1x64x128xbf16>
    %531 = vector.shape_cast %530 : vector<1x64x128xbf16> to vector<64x128xbf16>
    %cst_284 = arith.constant dense<0.000000e+00> : vector<2x128xf32>
    %532 = tpu.matmul %529, %531, %cst_284 {dimension_numbers = #tpu.dot_dimension_numbers<[1], [0], [0], [1], [0, 0, 1, 1], [], []>} : vector<2x64xbf16>, vector<64x128xbf16>, vector<2x128xf32> -> vector<2x128xf32>
    %533 = arith.addf %508, %532 : vector<2x128xf32>
    %c21 = arith.constant 21 : index
    %c0_285 = arith.constant 0 : index
    %534 = memref.load %arg2[%c21, %c0_285] : memref<32x4xf32, #tpu.memory_space<smem>>
    %535 = vector.broadcast %534 : f32 to vector<2x64xf32>
    %536 = arith.mulf %1, %535 : vector<2x64xf32>
    %c21_286 = arith.constant 21 : index
    %c1_287 = arith.constant 1 : index
    %537 = memref.load %arg2[%c21_286, %c1_287] : memref<32x4xf32, #tpu.memory_space<smem>>
    %538 = vector.broadcast %537 : f32 to vector<2x64xf32>
    %539 = arith.mulf %3, %538 : vector<2x64xf32>
    %540 = arith.addf %536, %539 : vector<2x64xf32>
    %c21_288 = arith.constant 21 : index
    %c2_289 = arith.constant 2 : index
    %541 = memref.load %arg2[%c21_288, %c2_289] : memref<32x4xf32, #tpu.memory_space<smem>>
    %542 = vector.broadcast %541 : f32 to vector<2x64xf32>
    %543 = arith.mulf %5, %542 : vector<2x64xf32>
    %544 = arith.addf %540, %543 : vector<2x64xf32>
    %c21_290 = arith.constant 21 : index
    %c3_291 = arith.constant 3 : index
    %545 = memref.load %arg2[%c21_290, %c3_291] : memref<32x4xf32, #tpu.memory_space<smem>>
    %546 = vector.broadcast %545 : f32 to vector<2x64xf32>
    %547 = arith.mulf %7, %546 : vector<2x64xf32>
    %548 = arith.addf %544, %547 : vector<2x64xf32>
    %c21_292 = arith.constant 21 : index
    %549 = memref.load %arg3[%c21_292] : memref<32xf32, #tpu.memory_space<smem>>
    %550 = vector.broadcast %549 : f32 to vector<2x64xf32>
    %551 = arith.addf %548, %550 : vector<2x64xf32>
    %cst_293 = arith.constant 0.000000e+00 : f32
    %552 = vector.broadcast %cst_293 : f32 to vector<2x64xf32>
    %553 = arith.maximumf %551, %552 : vector<2x64xf32>
    %554 = arith.truncf %553 : vector<2x64xf32> to vector<2x64xbf16>
    %c21_294 = arith.constant 21 : index
    %c0_295 = arith.constant 0 : index
    %c0_296 = arith.constant 0 : index
    %555 = vector.load %arg4[%c21_294, %c0_295, %c0_296] : memref<32x64x128xbf16, #tpu.memory_space<vmem>>, vector<1x64x128xbf16>
    %556 = vector.shape_cast %555 : vector<1x64x128xbf16> to vector<64x128xbf16>
    %cst_297 = arith.constant dense<0.000000e+00> : vector<2x128xf32>
    %557 = tpu.matmul %554, %556, %cst_297 {dimension_numbers = #tpu.dot_dimension_numbers<[1], [0], [0], [1], [0, 0, 1, 1], [], []>} : vector<2x64xbf16>, vector<64x128xbf16>, vector<2x128xf32> -> vector<2x128xf32>
    %558 = arith.addf %533, %557 : vector<2x128xf32>
    %c22 = arith.constant 22 : index
    %c0_298 = arith.constant 0 : index
    %559 = memref.load %arg2[%c22, %c0_298] : memref<32x4xf32, #tpu.memory_space<smem>>
    %560 = vector.broadcast %559 : f32 to vector<2x64xf32>
    %561 = arith.mulf %1, %560 : vector<2x64xf32>
    %c22_299 = arith.constant 22 : index
    %c1_300 = arith.constant 1 : index
    %562 = memref.load %arg2[%c22_299, %c1_300] : memref<32x4xf32, #tpu.memory_space<smem>>
    %563 = vector.broadcast %562 : f32 to vector<2x64xf32>
    %564 = arith.mulf %3, %563 : vector<2x64xf32>
    %565 = arith.addf %561, %564 : vector<2x64xf32>
    %c22_301 = arith.constant 22 : index
    %c2_302 = arith.constant 2 : index
    %566 = memref.load %arg2[%c22_301, %c2_302] : memref<32x4xf32, #tpu.memory_space<smem>>
    %567 = vector.broadcast %566 : f32 to vector<2x64xf32>
    %568 = arith.mulf %5, %567 : vector<2x64xf32>
    %569 = arith.addf %565, %568 : vector<2x64xf32>
    %c22_303 = arith.constant 22 : index
    %c3_304 = arith.constant 3 : index
    %570 = memref.load %arg2[%c22_303, %c3_304] : memref<32x4xf32, #tpu.memory_space<smem>>
    %571 = vector.broadcast %570 : f32 to vector<2x64xf32>
    %572 = arith.mulf %7, %571 : vector<2x64xf32>
    %573 = arith.addf %569, %572 : vector<2x64xf32>
    %c22_305 = arith.constant 22 : index
    %574 = memref.load %arg3[%c22_305] : memref<32xf32, #tpu.memory_space<smem>>
    %575 = vector.broadcast %574 : f32 to vector<2x64xf32>
    %576 = arith.addf %573, %575 : vector<2x64xf32>
    %cst_306 = arith.constant 0.000000e+00 : f32
    %577 = vector.broadcast %cst_306 : f32 to vector<2x64xf32>
    %578 = arith.maximumf %576, %577 : vector<2x64xf32>
    %579 = arith.truncf %578 : vector<2x64xf32> to vector<2x64xbf16>
    %c22_307 = arith.constant 22 : index
    %c0_308 = arith.constant 0 : index
    %c0_309 = arith.constant 0 : index
    %580 = vector.load %arg4[%c22_307, %c0_308, %c0_309] : memref<32x64x128xbf16, #tpu.memory_space<vmem>>, vector<1x64x128xbf16>
    %581 = vector.shape_cast %580 : vector<1x64x128xbf16> to vector<64x128xbf16>
    %cst_310 = arith.constant dense<0.000000e+00> : vector<2x128xf32>
    %582 = tpu.matmul %579, %581, %cst_310 {dimension_numbers = #tpu.dot_dimension_numbers<[1], [0], [0], [1], [0, 0, 1, 1], [], []>} : vector<2x64xbf16>, vector<64x128xbf16>, vector<2x128xf32> -> vector<2x128xf32>
    %583 = arith.addf %558, %582 : vector<2x128xf32>
    %c23 = arith.constant 23 : index
    %c0_311 = arith.constant 0 : index
    %584 = memref.load %arg2[%c23, %c0_311] : memref<32x4xf32, #tpu.memory_space<smem>>
    %585 = vector.broadcast %584 : f32 to vector<2x64xf32>
    %586 = arith.mulf %1, %585 : vector<2x64xf32>
    %c23_312 = arith.constant 23 : index
    %c1_313 = arith.constant 1 : index
    %587 = memref.load %arg2[%c23_312, %c1_313] : memref<32x4xf32, #tpu.memory_space<smem>>
    %588 = vector.broadcast %587 : f32 to vector<2x64xf32>
    %589 = arith.mulf %3, %588 : vector<2x64xf32>
    %590 = arith.addf %586, %589 : vector<2x64xf32>
    %c23_314 = arith.constant 23 : index
    %c2_315 = arith.constant 2 : index
    %591 = memref.load %arg2[%c23_314, %c2_315] : memref<32x4xf32, #tpu.memory_space<smem>>
    %592 = vector.broadcast %591 : f32 to vector<2x64xf32>
    %593 = arith.mulf %5, %592 : vector<2x64xf32>
    %594 = arith.addf %590, %593 : vector<2x64xf32>
    %c23_316 = arith.constant 23 : index
    %c3_317 = arith.constant 3 : index
    %595 = memref.load %arg2[%c23_316, %c3_317] : memref<32x4xf32, #tpu.memory_space<smem>>
    %596 = vector.broadcast %595 : f32 to vector<2x64xf32>
    %597 = arith.mulf %7, %596 : vector<2x64xf32>
    %598 = arith.addf %594, %597 : vector<2x64xf32>
    %c23_318 = arith.constant 23 : index
    %599 = memref.load %arg3[%c23_318] : memref<32xf32, #tpu.memory_space<smem>>
    %600 = vector.broadcast %599 : f32 to vector<2x64xf32>
    %601 = arith.addf %598, %600 : vector<2x64xf32>
    %cst_319 = arith.constant 0.000000e+00 : f32
    %602 = vector.broadcast %cst_319 : f32 to vector<2x64xf32>
    %603 = arith.maximumf %601, %602 : vector<2x64xf32>
    %604 = arith.truncf %603 : vector<2x64xf32> to vector<2x64xbf16>
    %c23_320 = arith.constant 23 : index
    %c0_321 = arith.constant 0 : index
    %c0_322 = arith.constant 0 : index
    %605 = vector.load %arg4[%c23_320, %c0_321, %c0_322] : memref<32x64x128xbf16, #tpu.memory_space<vmem>>, vector<1x64x128xbf16>
    %606 = vector.shape_cast %605 : vector<1x64x128xbf16> to vector<64x128xbf16>
    %cst_323 = arith.constant dense<0.000000e+00> : vector<2x128xf32>
    %607 = tpu.matmul %604, %606, %cst_323 {dimension_numbers = #tpu.dot_dimension_numbers<[1], [0], [0], [1], [0, 0, 1, 1], [], []>} : vector<2x64xbf16>, vector<64x128xbf16>, vector<2x128xf32> -> vector<2x128xf32>
    %608 = arith.addf %583, %607 : vector<2x128xf32>
    %c24 = arith.constant 24 : index
    %c0_324 = arith.constant 0 : index
    %609 = memref.load %arg2[%c24, %c0_324] : memref<32x4xf32, #tpu.memory_space<smem>>
    %610 = vector.broadcast %609 : f32 to vector<2x64xf32>
    %611 = arith.mulf %1, %610 : vector<2x64xf32>
    %c24_325 = arith.constant 24 : index
    %c1_326 = arith.constant 1 : index
    %612 = memref.load %arg2[%c24_325, %c1_326] : memref<32x4xf32, #tpu.memory_space<smem>>
    %613 = vector.broadcast %612 : f32 to vector<2x64xf32>
    %614 = arith.mulf %3, %613 : vector<2x64xf32>
    %615 = arith.addf %611, %614 : vector<2x64xf32>
    %c24_327 = arith.constant 24 : index
    %c2_328 = arith.constant 2 : index
    %616 = memref.load %arg2[%c24_327, %c2_328] : memref<32x4xf32, #tpu.memory_space<smem>>
    %617 = vector.broadcast %616 : f32 to vector<2x64xf32>
    %618 = arith.mulf %5, %617 : vector<2x64xf32>
    %619 = arith.addf %615, %618 : vector<2x64xf32>
    %c24_329 = arith.constant 24 : index
    %c3_330 = arith.constant 3 : index
    %620 = memref.load %arg2[%c24_329, %c3_330] : memref<32x4xf32, #tpu.memory_space<smem>>
    %621 = vector.broadcast %620 : f32 to vector<2x64xf32>
    %622 = arith.mulf %7, %621 : vector<2x64xf32>
    %623 = arith.addf %619, %622 : vector<2x64xf32>
    %c24_331 = arith.constant 24 : index
    %624 = memref.load %arg3[%c24_331] : memref<32xf32, #tpu.memory_space<smem>>
    %625 = vector.broadcast %624 : f32 to vector<2x64xf32>
    %626 = arith.addf %623, %625 : vector<2x64xf32>
    %cst_332 = arith.constant 0.000000e+00 : f32
    %627 = vector.broadcast %cst_332 : f32 to vector<2x64xf32>
    %628 = arith.maximumf %626, %627 : vector<2x64xf32>
    %629 = arith.truncf %628 : vector<2x64xf32> to vector<2x64xbf16>
    %c24_333 = arith.constant 24 : index
    %c0_334 = arith.constant 0 : index
    %c0_335 = arith.constant 0 : index
    %630 = vector.load %arg4[%c24_333, %c0_334, %c0_335] : memref<32x64x128xbf16, #tpu.memory_space<vmem>>, vector<1x64x128xbf16>
    %631 = vector.shape_cast %630 : vector<1x64x128xbf16> to vector<64x128xbf16>
    %cst_336 = arith.constant dense<0.000000e+00> : vector<2x128xf32>
    %632 = tpu.matmul %629, %631, %cst_336 {dimension_numbers = #tpu.dot_dimension_numbers<[1], [0], [0], [1], [0, 0, 1, 1], [], []>} : vector<2x64xbf16>, vector<64x128xbf16>, vector<2x128xf32> -> vector<2x128xf32>
    %633 = arith.addf %608, %632 : vector<2x128xf32>
    %c25 = arith.constant 25 : index
    %c0_337 = arith.constant 0 : index
    %634 = memref.load %arg2[%c25, %c0_337] : memref<32x4xf32, #tpu.memory_space<smem>>
    %635 = vector.broadcast %634 : f32 to vector<2x64xf32>
    %636 = arith.mulf %1, %635 : vector<2x64xf32>
    %c25_338 = arith.constant 25 : index
    %c1_339 = arith.constant 1 : index
    %637 = memref.load %arg2[%c25_338, %c1_339] : memref<32x4xf32, #tpu.memory_space<smem>>
    %638 = vector.broadcast %637 : f32 to vector<2x64xf32>
    %639 = arith.mulf %3, %638 : vector<2x64xf32>
    %640 = arith.addf %636, %639 : vector<2x64xf32>
    %c25_340 = arith.constant 25 : index
    %c2_341 = arith.constant 2 : index
    %641 = memref.load %arg2[%c25_340, %c2_341] : memref<32x4xf32, #tpu.memory_space<smem>>
    %642 = vector.broadcast %641 : f32 to vector<2x64xf32>
    %643 = arith.mulf %5, %642 : vector<2x64xf32>
    %644 = arith.addf %640, %643 : vector<2x64xf32>
    %c25_342 = arith.constant 25 : index
    %c3_343 = arith.constant 3 : index
    %645 = memref.load %arg2[%c25_342, %c3_343] : memref<32x4xf32, #tpu.memory_space<smem>>
    %646 = vector.broadcast %645 : f32 to vector<2x64xf32>
    %647 = arith.mulf %7, %646 : vector<2x64xf32>
    %648 = arith.addf %644, %647 : vector<2x64xf32>
    %c25_344 = arith.constant 25 : index
    %649 = memref.load %arg3[%c25_344] : memref<32xf32, #tpu.memory_space<smem>>
    %650 = vector.broadcast %649 : f32 to vector<2x64xf32>
    %651 = arith.addf %648, %650 : vector<2x64xf32>
    %cst_345 = arith.constant 0.000000e+00 : f32
    %652 = vector.broadcast %cst_345 : f32 to vector<2x64xf32>
    %653 = arith.maximumf %651, %652 : vector<2x64xf32>
    %654 = arith.truncf %653 : vector<2x64xf32> to vector<2x64xbf16>
    %c25_346 = arith.constant 25 : index
    %c0_347 = arith.constant 0 : index
    %c0_348 = arith.constant 0 : index
    %655 = vector.load %arg4[%c25_346, %c0_347, %c0_348] : memref<32x64x128xbf16, #tpu.memory_space<vmem>>, vector<1x64x128xbf16>
    %656 = vector.shape_cast %655 : vector<1x64x128xbf16> to vector<64x128xbf16>
    %cst_349 = arith.constant dense<0.000000e+00> : vector<2x128xf32>
    %657 = tpu.matmul %654, %656, %cst_349 {dimension_numbers = #tpu.dot_dimension_numbers<[1], [0], [0], [1], [0, 0, 1, 1], [], []>} : vector<2x64xbf16>, vector<64x128xbf16>, vector<2x128xf32> -> vector<2x128xf32>
    %658 = arith.addf %633, %657 : vector<2x128xf32>
    %c26 = arith.constant 26 : index
    %c0_350 = arith.constant 0 : index
    %659 = memref.load %arg2[%c26, %c0_350] : memref<32x4xf32, #tpu.memory_space<smem>>
    %660 = vector.broadcast %659 : f32 to vector<2x64xf32>
    %661 = arith.mulf %1, %660 : vector<2x64xf32>
    %c26_351 = arith.constant 26 : index
    %c1_352 = arith.constant 1 : index
    %662 = memref.load %arg2[%c26_351, %c1_352] : memref<32x4xf32, #tpu.memory_space<smem>>
    %663 = vector.broadcast %662 : f32 to vector<2x64xf32>
    %664 = arith.mulf %3, %663 : vector<2x64xf32>
    %665 = arith.addf %661, %664 : vector<2x64xf32>
    %c26_353 = arith.constant 26 : index
    %c2_354 = arith.constant 2 : index
    %666 = memref.load %arg2[%c26_353, %c2_354] : memref<32x4xf32, #tpu.memory_space<smem>>
    %667 = vector.broadcast %666 : f32 to vector<2x64xf32>
    %668 = arith.mulf %5, %667 : vector<2x64xf32>
    %669 = arith.addf %665, %668 : vector<2x64xf32>
    %c26_355 = arith.constant 26 : index
    %c3_356 = arith.constant 3 : index
    %670 = memref.load %arg2[%c26_355, %c3_356] : memref<32x4xf32, #tpu.memory_space<smem>>
    %671 = vector.broadcast %670 : f32 to vector<2x64xf32>
    %672 = arith.mulf %7, %671 : vector<2x64xf32>
    %673 = arith.addf %669, %672 : vector<2x64xf32>
    %c26_357 = arith.constant 26 : index
    %674 = memref.load %arg3[%c26_357] : memref<32xf32, #tpu.memory_space<smem>>
    %675 = vector.broadcast %674 : f32 to vector<2x64xf32>
    %676 = arith.addf %673, %675 : vector<2x64xf32>
    %cst_358 = arith.constant 0.000000e+00 : f32
    %677 = vector.broadcast %cst_358 : f32 to vector<2x64xf32>
    %678 = arith.maximumf %676, %677 : vector<2x64xf32>
    %679 = arith.truncf %678 : vector<2x64xf32> to vector<2x64xbf16>
    %c26_359 = arith.constant 26 : index
    %c0_360 = arith.constant 0 : index
    %c0_361 = arith.constant 0 : index
    %680 = vector.load %arg4[%c26_359, %c0_360, %c0_361] : memref<32x64x128xbf16, #tpu.memory_space<vmem>>, vector<1x64x128xbf16>
    %681 = vector.shape_cast %680 : vector<1x64x128xbf16> to vector<64x128xbf16>
    %cst_362 = arith.constant dense<0.000000e+00> : vector<2x128xf32>
    %682 = tpu.matmul %679, %681, %cst_362 {dimension_numbers = #tpu.dot_dimension_numbers<[1], [0], [0], [1], [0, 0, 1, 1], [], []>} : vector<2x64xbf16>, vector<64x128xbf16>, vector<2x128xf32> -> vector<2x128xf32>
    %683 = arith.addf %658, %682 : vector<2x128xf32>
    %c27 = arith.constant 27 : index
    %c0_363 = arith.constant 0 : index
    %684 = memref.load %arg2[%c27, %c0_363] : memref<32x4xf32, #tpu.memory_space<smem>>
    %685 = vector.broadcast %684 : f32 to vector<2x64xf32>
    %686 = arith.mulf %1, %685 : vector<2x64xf32>
    %c27_364 = arith.constant 27 : index
    %c1_365 = arith.constant 1 : index
    %687 = memref.load %arg2[%c27_364, %c1_365] : memref<32x4xf32, #tpu.memory_space<smem>>
    %688 = vector.broadcast %687 : f32 to vector<2x64xf32>
    %689 = arith.mulf %3, %688 : vector<2x64xf32>
    %690 = arith.addf %686, %689 : vector<2x64xf32>
    %c27_366 = arith.constant 27 : index
    %c2_367 = arith.constant 2 : index
    %691 = memref.load %arg2[%c27_366, %c2_367] : memref<32x4xf32, #tpu.memory_space<smem>>
    %692 = vector.broadcast %691 : f32 to vector<2x64xf32>
    %693 = arith.mulf %5, %692 : vector<2x64xf32>
    %694 = arith.addf %690, %693 : vector<2x64xf32>
    %c27_368 = arith.constant 27 : index
    %c3_369 = arith.constant 3 : index
    %695 = memref.load %arg2[%c27_368, %c3_369] : memref<32x4xf32, #tpu.memory_space<smem>>
    %696 = vector.broadcast %695 : f32 to vector<2x64xf32>
    %697 = arith.mulf %7, %696 : vector<2x64xf32>
    %698 = arith.addf %694, %697 : vector<2x64xf32>
    %c27_370 = arith.constant 27 : index
    %699 = memref.load %arg3[%c27_370] : memref<32xf32, #tpu.memory_space<smem>>
    %700 = vector.broadcast %699 : f32 to vector<2x64xf32>
    %701 = arith.addf %698, %700 : vector<2x64xf32>
    %cst_371 = arith.constant 0.000000e+00 : f32
    %702 = vector.broadcast %cst_371 : f32 to vector<2x64xf32>
    %703 = arith.maximumf %701, %702 : vector<2x64xf32>
    %704 = arith.truncf %703 : vector<2x64xf32> to vector<2x64xbf16>
    %c27_372 = arith.constant 27 : index
    %c0_373 = arith.constant 0 : index
    %c0_374 = arith.constant 0 : index
    %705 = vector.load %arg4[%c27_372, %c0_373, %c0_374] : memref<32x64x128xbf16, #tpu.memory_space<vmem>>, vector<1x64x128xbf16>
    %706 = vector.shape_cast %705 : vector<1x64x128xbf16> to vector<64x128xbf16>
    %cst_375 = arith.constant dense<0.000000e+00> : vector<2x128xf32>
    %707 = tpu.matmul %704, %706, %cst_375 {dimension_numbers = #tpu.dot_dimension_numbers<[1], [0], [0], [1], [0, 0, 1, 1], [], []>} : vector<2x64xbf16>, vector<64x128xbf16>, vector<2x128xf32> -> vector<2x128xf32>
    %708 = arith.addf %683, %707 : vector<2x128xf32>
    %c28 = arith.constant 28 : index
    %c0_376 = arith.constant 0 : index
    %709 = memref.load %arg2[%c28, %c0_376] : memref<32x4xf32, #tpu.memory_space<smem>>
    %710 = vector.broadcast %709 : f32 to vector<2x64xf32>
    %711 = arith.mulf %1, %710 : vector<2x64xf32>
    %c28_377 = arith.constant 28 : index
    %c1_378 = arith.constant 1 : index
    %712 = memref.load %arg2[%c28_377, %c1_378] : memref<32x4xf32, #tpu.memory_space<smem>>
    %713 = vector.broadcast %712 : f32 to vector<2x64xf32>
    %714 = arith.mulf %3, %713 : vector<2x64xf32>
    %715 = arith.addf %711, %714 : vector<2x64xf32>
    %c28_379 = arith.constant 28 : index
    %c2_380 = arith.constant 2 : index
    %716 = memref.load %arg2[%c28_379, %c2_380] : memref<32x4xf32, #tpu.memory_space<smem>>
    %717 = vector.broadcast %716 : f32 to vector<2x64xf32>
    %718 = arith.mulf %5, %717 : vector<2x64xf32>
    %719 = arith.addf %715, %718 : vector<2x64xf32>
    %c28_381 = arith.constant 28 : index
    %c3_382 = arith.constant 3 : index
    %720 = memref.load %arg2[%c28_381, %c3_382] : memref<32x4xf32, #tpu.memory_space<smem>>
    %721 = vector.broadcast %720 : f32 to vector<2x64xf32>
    %722 = arith.mulf %7, %721 : vector<2x64xf32>
    %723 = arith.addf %719, %722 : vector<2x64xf32>
    %c28_383 = arith.constant 28 : index
    %724 = memref.load %arg3[%c28_383] : memref<32xf32, #tpu.memory_space<smem>>
    %725 = vector.broadcast %724 : f32 to vector<2x64xf32>
    %726 = arith.addf %723, %725 : vector<2x64xf32>
    %cst_384 = arith.constant 0.000000e+00 : f32
    %727 = vector.broadcast %cst_384 : f32 to vector<2x64xf32>
    %728 = arith.maximumf %726, %727 : vector<2x64xf32>
    %729 = arith.truncf %728 : vector<2x64xf32> to vector<2x64xbf16>
    %c28_385 = arith.constant 28 : index
    %c0_386 = arith.constant 0 : index
    %c0_387 = arith.constant 0 : index
    %730 = vector.load %arg4[%c28_385, %c0_386, %c0_387] : memref<32x64x128xbf16, #tpu.memory_space<vmem>>, vector<1x64x128xbf16>
    %731 = vector.shape_cast %730 : vector<1x64x128xbf16> to vector<64x128xbf16>
    %cst_388 = arith.constant dense<0.000000e+00> : vector<2x128xf32>
    %732 = tpu.matmul %729, %731, %cst_388 {dimension_numbers = #tpu.dot_dimension_numbers<[1], [0], [0], [1], [0, 0, 1, 1], [], []>} : vector<2x64xbf16>, vector<64x128xbf16>, vector<2x128xf32> -> vector<2x128xf32>
    %733 = arith.addf %708, %732 : vector<2x128xf32>
    %c29 = arith.constant 29 : index
    %c0_389 = arith.constant 0 : index
    %734 = memref.load %arg2[%c29, %c0_389] : memref<32x4xf32, #tpu.memory_space<smem>>
    %735 = vector.broadcast %734 : f32 to vector<2x64xf32>
    %736 = arith.mulf %1, %735 : vector<2x64xf32>
    %c29_390 = arith.constant 29 : index
    %c1_391 = arith.constant 1 : index
    %737 = memref.load %arg2[%c29_390, %c1_391] : memref<32x4xf32, #tpu.memory_space<smem>>
    %738 = vector.broadcast %737 : f32 to vector<2x64xf32>
    %739 = arith.mulf %3, %738 : vector<2x64xf32>
    %740 = arith.addf %736, %739 : vector<2x64xf32>
    %c29_392 = arith.constant 29 : index
    %c2_393 = arith.constant 2 : index
    %741 = memref.load %arg2[%c29_392, %c2_393] : memref<32x4xf32, #tpu.memory_space<smem>>
    %742 = vector.broadcast %741 : f32 to vector<2x64xf32>
    %743 = arith.mulf %5, %742 : vector<2x64xf32>
    %744 = arith.addf %740, %743 : vector<2x64xf32>
    %c29_394 = arith.constant 29 : index
    %c3_395 = arith.constant 3 : index
    %745 = memref.load %arg2[%c29_394, %c3_395] : memref<32x4xf32, #tpu.memory_space<smem>>
    %746 = vector.broadcast %745 : f32 to vector<2x64xf32>
    %747 = arith.mulf %7, %746 : vector<2x64xf32>
    %748 = arith.addf %744, %747 : vector<2x64xf32>
    %c29_396 = arith.constant 29 : index
    %749 = memref.load %arg3[%c29_396] : memref<32xf32, #tpu.memory_space<smem>>
    %750 = vector.broadcast %749 : f32 to vector<2x64xf32>
    %751 = arith.addf %748, %750 : vector<2x64xf32>
    %cst_397 = arith.constant 0.000000e+00 : f32
    %752 = vector.broadcast %cst_397 : f32 to vector<2x64xf32>
    %753 = arith.maximumf %751, %752 : vector<2x64xf32>
    %754 = arith.truncf %753 : vector<2x64xf32> to vector<2x64xbf16>
    %c29_398 = arith.constant 29 : index
    %c0_399 = arith.constant 0 : index
    %c0_400 = arith.constant 0 : index
    %755 = vector.load %arg4[%c29_398, %c0_399, %c0_400] : memref<32x64x128xbf16, #tpu.memory_space<vmem>>, vector<1x64x128xbf16>
    %756 = vector.shape_cast %755 : vector<1x64x128xbf16> to vector<64x128xbf16>
    %cst_401 = arith.constant dense<0.000000e+00> : vector<2x128xf32>
    %757 = tpu.matmul %754, %756, %cst_401 {dimension_numbers = #tpu.dot_dimension_numbers<[1], [0], [0], [1], [0, 0, 1, 1], [], []>} : vector<2x64xbf16>, vector<64x128xbf16>, vector<2x128xf32> -> vector<2x128xf32>
    %758 = arith.addf %733, %757 : vector<2x128xf32>
    %c30 = arith.constant 30 : index
    %c0_402 = arith.constant 0 : index
    %759 = memref.load %arg2[%c30, %c0_402] : memref<32x4xf32, #tpu.memory_space<smem>>
    %760 = vector.broadcast %759 : f32 to vector<2x64xf32>
    %761 = arith.mulf %1, %760 : vector<2x64xf32>
    %c30_403 = arith.constant 30 : index
    %c1_404 = arith.constant 1 : index
    %762 = memref.load %arg2[%c30_403, %c1_404] : memref<32x4xf32, #tpu.memory_space<smem>>
    %763 = vector.broadcast %762 : f32 to vector<2x64xf32>
    %764 = arith.mulf %3, %763 : vector<2x64xf32>
    %765 = arith.addf %761, %764 : vector<2x64xf32>
    %c30_405 = arith.constant 30 : index
    %c2_406 = arith.constant 2 : index
    %766 = memref.load %arg2[%c30_405, %c2_406] : memref<32x4xf32, #tpu.memory_space<smem>>
    %767 = vector.broadcast %766 : f32 to vector<2x64xf32>
    %768 = arith.mulf %5, %767 : vector<2x64xf32>
    %769 = arith.addf %765, %768 : vector<2x64xf32>
    %c30_407 = arith.constant 30 : index
    %c3_408 = arith.constant 3 : index
    %770 = memref.load %arg2[%c30_407, %c3_408] : memref<32x4xf32, #tpu.memory_space<smem>>
    %771 = vector.broadcast %770 : f32 to vector<2x64xf32>
    %772 = arith.mulf %7, %771 : vector<2x64xf32>
    %773 = arith.addf %769, %772 : vector<2x64xf32>
    %c30_409 = arith.constant 30 : index
    %774 = memref.load %arg3[%c30_409] : memref<32xf32, #tpu.memory_space<smem>>
    %775 = vector.broadcast %774 : f32 to vector<2x64xf32>
    %776 = arith.addf %773, %775 : vector<2x64xf32>
    %cst_410 = arith.constant 0.000000e+00 : f32
    %777 = vector.broadcast %cst_410 : f32 to vector<2x64xf32>
    %778 = arith.maximumf %776, %777 : vector<2x64xf32>
    %779 = arith.truncf %778 : vector<2x64xf32> to vector<2x64xbf16>
    %c30_411 = arith.constant 30 : index
    %c0_412 = arith.constant 0 : index
    %c0_413 = arith.constant 0 : index
    %780 = vector.load %arg4[%c30_411, %c0_412, %c0_413] : memref<32x64x128xbf16, #tpu.memory_space<vmem>>, vector<1x64x128xbf16>
    %781 = vector.shape_cast %780 : vector<1x64x128xbf16> to vector<64x128xbf16>
    %cst_414 = arith.constant dense<0.000000e+00> : vector<2x128xf32>
    %782 = tpu.matmul %779, %781, %cst_414 {dimension_numbers = #tpu.dot_dimension_numbers<[1], [0], [0], [1], [0, 0, 1, 1], [], []>} : vector<2x64xbf16>, vector<64x128xbf16>, vector<2x128xf32> -> vector<2x128xf32>
    %783 = arith.addf %758, %782 : vector<2x128xf32>
    %c31 = arith.constant 31 : index
    %c0_415 = arith.constant 0 : index
    %784 = memref.load %arg2[%c31, %c0_415] : memref<32x4xf32, #tpu.memory_space<smem>>
    %785 = vector.broadcast %784 : f32 to vector<2x64xf32>
    %786 = arith.mulf %1, %785 : vector<2x64xf32>
    %c31_416 = arith.constant 31 : index
    %c1_417 = arith.constant 1 : index
    %787 = memref.load %arg2[%c31_416, %c1_417] : memref<32x4xf32, #tpu.memory_space<smem>>
    %788 = vector.broadcast %787 : f32 to vector<2x64xf32>
    %789 = arith.mulf %3, %788 : vector<2x64xf32>
    %790 = arith.addf %786, %789 : vector<2x64xf32>
    %c31_418 = arith.constant 31 : index
    %c2_419 = arith.constant 2 : index
    %791 = memref.load %arg2[%c31_418, %c2_419] : memref<32x4xf32, #tpu.memory_space<smem>>
    %792 = vector.broadcast %791 : f32 to vector<2x64xf32>
    %793 = arith.mulf %5, %792 : vector<2x64xf32>
    %794 = arith.addf %790, %793 : vector<2x64xf32>
    %c31_420 = arith.constant 31 : index
    %c3_421 = arith.constant 3 : index
    %795 = memref.load %arg2[%c31_420, %c3_421] : memref<32x4xf32, #tpu.memory_space<smem>>
    %796 = vector.broadcast %795 : f32 to vector<2x64xf32>
    %797 = arith.mulf %7, %796 : vector<2x64xf32>
    %798 = arith.addf %794, %797 : vector<2x64xf32>
    %c31_422 = arith.constant 31 : index
    %799 = memref.load %arg3[%c31_422] : memref<32xf32, #tpu.memory_space<smem>>
    %800 = vector.broadcast %799 : f32 to vector<2x64xf32>
    %801 = arith.addf %798, %800 : vector<2x64xf32>
    %cst_423 = arith.constant 0.000000e+00 : f32
    %802 = vector.broadcast %cst_423 : f32 to vector<2x64xf32>
    %803 = arith.maximumf %801, %802 : vector<2x64xf32>
    %804 = arith.truncf %803 : vector<2x64xf32> to vector<2x64xbf16>
    %c31_424 = arith.constant 31 : index
    %c0_425 = arith.constant 0 : index
    %c0_426 = arith.constant 0 : index
    %805 = vector.load %arg4[%c31_424, %c0_425, %c0_426] : memref<32x64x128xbf16, #tpu.memory_space<vmem>>, vector<1x64x128xbf16>
    %806 = vector.shape_cast %805 : vector<1x64x128xbf16> to vector<64x128xbf16>
    %cst_427 = arith.constant dense<0.000000e+00> : vector<2x128xf32>
    %807 = tpu.matmul %804, %806, %cst_427 {dimension_numbers = #tpu.dot_dimension_numbers<[1], [0], [0], [1], [0, 0, 1, 1], [], []>} : vector<2x64xbf16>, vector<64x128xbf16>, vector<2x128xf32> -> vector<2x128xf32>
    %808 = arith.addf %783, %807 : vector<2x128xf32>
    %c0_428 = arith.constant 0 : index
    %c0_429 = arith.constant 0 : index
    %809 = vector.load %arg5[%c0_428, %c0_429] : memref<1x128xf32, #tpu.memory_space<vmem>>, vector<1x128xf32>
    %810 = vector.broadcast %809 : vector<1x128xf32> to vector<2x128xf32>
    %811 = arith.addf %808, %810 : vector<2x128xf32>
    %cst_430 = arith.constant 0.000000e+00 : f32
    %812 = vector.broadcast %cst_430 : f32 to vector<2x128xf32>
    %813 = arith.maximumf %811, %812 : vector<2x128xf32>
    %814 = arith.truncf %813 : vector<2x128xf32> to vector<2x128xbf16>
    %c0_431 = arith.constant 0 : index
    %c0_432 = arith.constant 0 : index
    %815 = vector.load %arg6[%c0_431, %c0_432] : memref<128x6xbf16, #tpu.memory_space<vmem>>, vector<128x6xbf16>
    %cst_433 = arith.constant dense<0.000000e+00> : vector<2x6xf32>
    %816 = tpu.matmul %814, %815, %cst_433 {dimension_numbers = #tpu.dot_dimension_numbers<[1], [0], [0], [1], [0, 0, 1, 1], [], []>} : vector<2x128xbf16>, vector<128x6xbf16>, vector<2x6xf32> -> vector<2x6xf32>
    %c0_434 = arith.constant 0 : index
    %c0_435 = arith.constant 0 : index
    %817 = vector.load %arg7[%c0_434, %c0_435] : memref<1x6xf32, #tpu.memory_space<vmem>>, vector<1x6xf32>
    %818 = vector.broadcast %817 : vector<1x6xf32> to vector<2x6xf32>
    %819 = arith.addf %816, %818 : vector<2x6xf32>
    %c0_436 = arith.constant 0 : index
    %c0_437 = arith.constant 0 : index
    %820 = vector.load %arg8[%c0_436, %c0_437] : memref<2x6xf32, #tpu.memory_space<vmem>>, vector<2x6xf32>
    tpu.vector_store %arg8[%c0_436, %c0_437], %819 {strides = array<i32>} : memref<2x6xf32, #tpu.memory_space<vmem>>, vector<2x6xf32>,
    return
  }
  func.func @transform_0(%arg0: i32) -> (i32, i32, i32) {
    %c0_i32 = arith.constant 0 : i32
    %c0_i32_0 = arith.constant 0 : i32
    %c0_i32_1 = arith.constant 0 : i32
    %c0_i32_2 = arith.constant 0 : i32
    return %c0_i32, %c0_i32_0, %c0_i32_1 : i32, i32, i32
  }
  func.func @transform_1(%arg0: i32) -> (i32, i32) {
    %c0_i32 = arith.constant 0 : i32
    %c0_i32_0 = arith.constant 0 : i32
    %c0_i32_1 = arith.constant 0 : i32
    return %c0_i32, %c0_i32_0 : i32, i32
  }
  func.func @transform_2(%arg0: i32) -> i32 {
    %c0_i32 = arith.constant 0 : i32
    %c0_i32_0 = arith.constant 0 : i32
    return %c0_i32 : i32
  }
  func.func @transform_3(%arg0: i32) -> (i32, i32, i32) {
    %c0_i32 = arith.constant 0 : i32
    %c0_i32_0 = arith.constant 0 : i32
    %c0_i32_1 = arith.constant 0 : i32
    %c0_i32_2 = arith.constant 0 : i32
    return %c0_i32, %c0_i32_0, %c0_i32_1 : i32, i32, i32
  }
  func.func @transform_4(%arg0: i32) -> (i32, i32) {
    %c0_i32 = arith.constant 0 : i32
    %c0_i32_0 = arith.constant 0 : i32
    %c0_i32_1 = arith.constant 0 : i32
    return %c0_i32, %c0_i32_0 : i32, i32
  }
  func.func @transform_5(%arg0: i32) -> (i32, i32) {
    %c0_i32 = arith.constant 0 : i32
    %c0_i32_0 = arith.constant 0 : i32
    %c0_i32_1 = arith.constant 0 : i32
    return %c0_i32, %c0_i32_0 : i32, i32
  }
  func.func @transform_6(%arg0: i32) -> (i32, i32) {
    %c0_i32 = arith.constant 0 : i32
    %c0_i32_0 = arith.constant 0 : i32
    %c0_i32_1 = arith.constant 0 : i32
    return %c0_i32, %c0_i32_0 : i32, i32
  }
  func.func @transform_7(%arg0: i32) -> (i32, i32) {
    %c0_i32 = arith.constant 0 : i32
    %c0_i32_0 = arith.constant 0 : i32
    %c0_i32_1 = arith.constant 0 : i32
    return %c0_i32, %c0_i32_0 : i32, i32
  }
}

</mosaic_0001>

<llo_original>
// kernel: tpu_custom_call.1
$region0: #{tpu_custom_call.1}
  #allocation0 [shape = 'u32[]', space=smem, size = 0x4, offset = 0x4, fixed_abs, tag = 'smem constant byte address 0x4 - core index']
  #allocation1 [shape = 'u32[144,128]{1,0:T(1,128)}', space=vmem, size = 0x12000, scoped, tag = 'internal scratch']
  %s0 = inlined_call_operand.vmem [shape: f32[4,2,64], index: 0, kind: input, shape index: {}]
  %s1 = inlined_call_operand.vmem [shape: f32[32,4], index: 1, kind: input, shape index: {}]
  %s2 = inlined_call_operand.vmem [shape: f32[32], index: 2, kind: input, shape index: {}]
  %s3 = inlined_call_operand.hbm [shape: bf16[32,64,128], index: 3, kind: input, shape index: {}]
  %s4 = inlined_call_operand.vmem [shape: f32[1,128], index: 4, kind: input, shape index: {}]
  %s5 = inlined_call_operand.vmem [shape: bf16[128,6], index: 5, kind: input, shape index: {}]
  %s6 = inlined_call_operand.vmem [shape: f32[1,6], index: 6, kind: input, shape index: {}]
  %s7 = inlined_call_operand.hbm [shape: f32[2,6], index: 7, kind: output, shape index: {}]
  %s8 = sld [smem:[#allocation0]]
  $region50: #{tpu_custom_call.1} parent=0
    _
  %s10 = ssub.s32 1, %s8
  %s11 = scalar_select 0, %s10, %s8
  $region1: #{tpu_custom_call.1} parent=0
    #allocation2 [shape = 'u8[16384]{0}', space=smem, size = 0x4000, scoped, tag = 'input window, operand 1, single buffered']
    #allocation3 [shape = 's32[1]{0}', space=sflag, size = 0x4, scoped, tag = 'scoped memory for tpu_custom_call.1']
    #allocation4 [shape = 's32[1]{0}', space=sflag, size = 0x4, scoped, tag = 'scoped memory for tpu_custom_call.1']
    #allocation5 [shape = 's32[1]{0}', space=sflag, size = 0x4, scoped, tag = 'scoped memory for tpu_custom_call.1']
    #allocation6 [shape = 'u8[512]{0}', space=smem, size = 0x200, scoped, tag = 'input window, operand 2, single buffered']
    #allocation7 [shape = 's32[1]{0}', space=sflag, size = 0x4, scoped, tag = 'scoped memory for tpu_custom_call.1']
    #allocation8 [shape = 'u8[524288]{0}', space=vmem, size = 0x80000, scoped, tag = 'input window, operand 3, single buffered']
    #allocation9 [shape = 'u8[1024]{0}', space=vmem, size = 0x400, scoped, tag = 'output window, operand 0, single buffered']
    %12 = vsyncpa [#allocation5], 0
    %13 = vsyncpa [#allocation7], 0
    %14 = vsyncpa [#allocation3], 0
    %15 = vsyncpa [#allocation4], 0
    // Predicated region
    $region2: #{tpu_custom_call.1} parent=1 // pred_check
      _
    $region3: #{tpu_custom_call.1} parent=1 // pred_check_branch
      %17 = sbr.rel (0) target = $region5
    $region4: #{tpu_custom_call.1} parent=1 // pred_region
      _
    $region5: #{tpu_custom_call.1} parent=1 // pred_fallthru
      _
    // Predicated region
    $region6: #{tpu_custom_call.1} parent=1 // pred_check
      _
    $region7: #{tpu_custom_call.1} parent=1 // pred_check_branch
      %19 = sbr.rel (0) target = $region9
    $region8: #{tpu_custom_call.1} parent=1 // pred_region
      %s21 = ssub.s32 512, 512
      %22 = vsyncadd [#allocation5], %s21
      %s23 = sshll.u32 %s1, 4
      %s24 = int_to_ptr.vmem [resolvable:$true] %s23
      %29 = dma.vmem_to_smem %s24, 512, [#allocation2], [#allocation5], 128, 128, 8
    $region9: #{tpu_custom_call.1} parent=1 // pred_fallthru
      _
    // Predicated region
    $region10: #{tpu_custom_call.1} parent=1 // pred_check
      _
    $region11: #{tpu_custom_call.1} parent=1 // pred_check_branch
      %31 = sbr.rel (0) target = $region13
    $region12: #{tpu_custom_call.1} parent=1 // pred_region
      %s33 = ssub.s32 16, 16
      %34 = vsyncadd [#allocation7], %s33
      %s36 = sshll.u32 %s2, 4
      %s37 = int_to_ptr.vmem [resolvable:$true] %s36
      %39 = dma.vmem_to_smem %s37, 16, [#allocation6], [#allocation7]
    $region13: #{tpu_custom_call.1} parent=1 // pred_fallthru
      _
    // Predicated region
    $region14: #{tpu_custom_call.1} parent=1 // pred_check
      _
    $region15: #{tpu_custom_call.1} parent=1 // pred_check_branch
      %41 = sbr.rel (0) target = $region17
    $region16: #{tpu_custom_call.1} parent=1 // pred_region
      %s43 = ssub.s32 16384, 16384
      %44 = vsyncadd [#allocation3], %s43
      %s45 = sshll.u32 [#allocation8], 4
      %s46 = int_to_ptr.vmem [resolvable:$true] %s45
      %51 = dma.hbm_to_vmem [thread:$0]  %s3, 16384, %s46, [#allocation3], 64, 64, 4
    $region17: #{tpu_custom_call.1} parent=1 // pred_fallthru
      _
    // Predicated region
    $region18: #{tpu_custom_call.1} parent=1 // pred_check
      _
    $region19: #{tpu_custom_call.1} parent=1 // pred_check_branch
      %53 = sbr.rel (0) target = $region21
    $region20: #{tpu_custom_call.1} parent=1 // pred_region
      _
    $region21: #{tpu_custom_call.1} parent=1 // pred_fallthru
      _
    // Predicated region
    $region22: #{tpu_custom_call.1} parent=1 // pred_check
      _
    $region23: #{tpu_custom_call.1} parent=1 // pred_check_branch
      %55 = sbr.rel (0) target = $region25
    $region24: #{tpu_custom_call.1} parent=1 // pred_region
      _
    $region25: #{tpu_custom_call.1} parent=1 // pred_fallthru
      _
    // Predicated region
    $region26: #{tpu_custom_call.1} parent=1 // pred_check
      _
    $region27: #{tpu_custom_call.1} parent=1 // pred_check_branch
      %57 = sbr.rel (0) target = $region29
    $region28: #{tpu_custom_call.1} parent=1 // pred_region
      _
    $region29: #{tpu_custom_call.1} parent=1 // pred_fallthru
      _
    // Predicated region
    $region30: #{tpu_custom_call.1} parent=1 // pred_check
      _
    $region31: #{tpu_custom_call.1} parent=1 // pred_check_branch
      %59 = sbr.rel (0) target = $region33
    $region32: #{tpu_custom_call.1} parent=1 // pred_region
      %60 = dma.done [#allocation5], 512
    $region33: #{tpu_custom_call.1} parent=1 // pred_fallthru
      _
    // Predicated region
    $region34: #{tpu_custom_call.1} parent=1 // pred_check
      _
    $region35: #{tpu_custom_call.1} parent=1 // pred_check_branch
      %62 = sbr.rel (0) target = $region37
    $region36: #{tpu_custom_call.1} parent=1 // pred_region
      %63 = dma.done [#allocation7], 16
    $region37: #{tpu_custom_call.1} parent=1 // pred_fallthru
      _
    // Predicated region
    $region38: #{tpu_custom_call.1} parent=1 // pred_check
      _
    $region39: #{tpu_custom_call.1} parent=1 // pred_check_branch
      %65 = sbr.rel (0) target = $region41
    $region40: #{tpu_custom_call.1} parent=1 // pred_region
      %66 = dma.done [#allocation3], 16384
    $region41: #{tpu_custom_call.1} parent=1 // pred_fallthru
      _
    %67 = sfence
    %v69 = vld [vmem:[%s0] sm:$0x3]
    %s70 = scalar_lea.vmem %s0, 2
    %v71 = vld [vmem:[%s70] sm:$0x3]
    %s72 = scalar_lea.vmem %s0, 4
    %v73 = vld [vmem:[%s72] sm:$0x3]
    %s74 = scalar_lea.vmem %s0, 6
    %v75 = vld [vmem:[%s74] sm:$0x3]
    %s76 = sld [smem:[#allocation2]]
    %v77 = vstv %s76
    %v78 = vmul.f32 %v69, %v77
    %s79 = sld [smem:[#allocation2 + $0x1]]
    %v80 = vstv %s79
    %v81 = vmul.f32 %v71, %v80
    %v82 = vadd.f32 %v78, %v81
    %s83 = sld [smem:[#allocation2 + $0x2]]
    %v84 = vstv %s83
    %v85 = vmul.f32 %v73, %v84
    %v86 = vadd.f32 %v82, %v85
    %s87 = sld [smem:[#allocation2 + $0x3]]
    %v88 = vstv %s87
    %v89 = vmul.f32 %v75, %v88
    %v90 = vadd.f32 %v86, %v89
    %s91 = sld [smem:[#allocation6]]
    %v92 = vstv %s91
    %v93 = vadd.f32 %v90, %v92
    %v94 = vmax.f32 %v93, 0.0
    %v95 = vpack.c.bf16 %v94, %v94
    %v96 = vld [vmem:[#allocation8] sm:$0xf]
    %v97 = vld [vmem:[#allocation8 + $0x4] sm:$0xf]
    %v98 = vld [vmem:[#allocation8 + $0x8] sm:$0xf]
    %v99 = vld [vmem:[#allocation8 + $0xc] sm:$0xf]
    %v100 = vld [vmem:[#allocation8 + $0x10] sm:$0xf]
    %v101 = vld [vmem:[#allocation8 + $0x14] sm:$0xf]
    %v102 = vld [vmem:[#allocation8 + $0x18] sm:$0xf]
    %v103 = vld [vmem:[#allocation8 + $0x1c] sm:$0xf]
    %s104 = sld [smem:[#allocation2 + $0x80]]
    %v105 = vstv %s104
    %v106 = vmul.f32 %v69, %v105
    %s107 = sld [smem:[#allocation2 + $0x81]]
    %v108 = vstv %s107
    %v109 = vmul.f32 %v71, %v108
    %v110 = vadd.f32 %v106, %v109
    %s111 = sld [smem:[#allocation2 + $0x82]]
    %v112 = vstv %s111
    %v113 = vmul.f32 %v73, %v112
    %v114 = vadd.f32 %v110, %v113
    %s115 = sld [smem:[#allocation2 + $0x83]]
    %v116 = vstv %s115
    %v117 = vmul.f32 %v75, %v116
    %v118 = vadd.f32 %v114, %v117
    %s119 = sld [smem:[#allocation6 + $0x1]]
    %v120 = vstv %s119
    %v121 = vadd.f32 %v118, %v120
    %v122 = vmax.f32 %v121, 0.0
    %v123 = vpack.c.bf16 %v122, %v122
    %s124 = scalar_lea.vmem [#allocation8], 32
    %v125 = vld [vmem:[%s124] sm:$0xf]
    %v126 = vld [vmem:[%s124 + $0x4] sm:$0xf]
    %v127 = vld [vmem:[%s124 + $0x8] sm:$0xf]
    %v128 = vld [vmem:[%s124 + $0xc] sm:$0xf]
    %v129 = vld [vmem:[%s124 + $0x10] sm:$0xf]
    %v130 = vld [vmem:[%s124 + $0x14] sm:$0xf]
    %v131 = vld [vmem:[%s124 + $0x18] sm:$0xf]
    %v132 = vld [vmem:[%s124 + $0x1c] sm:$0xf]
    %v141 = vunpack.c.l.b16 %v125
    %v142 = vunpack.c.l.b16 %v126
    %v143 = vunpack.c.l.b16 %v127
    %v144 = vunpack.c.l.b16 %v128
    %v145 = vunpack.c.l.b16 %v129
    %v146 = vunpack.c.l.b16 %v130
    %v147 = vunpack.c.l.b16 %v131
    %v148 = vunpack.c.l.b16 %v132
    %v149 = vpack.c.b16 %v142, %v141
    %v150 = vpack.c.b16 %v144, %v143
    %v151 = vpack.c.b16 %v146, %v145
    %v152 = vpack.c.b16 %v148, %v147
    %vm157 = vcmask 523264
    %v159 = vsel %vm157, %v123, 0
    %161 = vmatprep.subr.bf16.mxu0 0
    %162 = vmatpush1.bf16.msra.mxu0 %v149
    %163 = vmatprep.subr.bf16.mxu0 0
    %164 = vmatpush1.bf16.msra.mxu0 %v150
    %165 = vmatprep.subr.bf16.mxu0 0
    %166 = vmatpush1.bf16.msra.mxu0 %v151
    %167 = vmatprep.subr.bf16.mxu0 0
    %168 = vmatpush1.bf16.msra.mxu0 %v152
    %169 = vmatprep.subr.bf16.mxu0 0
    %170 = vmatpush1.bf16.msra.mxu0 0
    %171 = vmatprep.subr.bf16.mxu0 0
    %172 = vmatpush1.bf16.msra.mxu0 0
    %173 = vmatprep.subr.bf16.mxu0 0
    %174 = vmatpush1.bf16.msra.mxu0 0
    %175 = vmatprep.subr.bf16.mxu0 0
    %176 = vmatpush1.bf16.msra.mxu0 0
    %177 = vmatprep.subr.bf16.mxu0 0
    %178 = vmatpush1.bf16.msra.mxu0 0
    %179 = vmatprep.subr.bf16.mxu0 0
    %180 = vmatpush1.bf16.msra.mxu0 0
    %181 = vmatprep.subr.bf16.mxu0 0
    %182 = vmatpush1.bf16.msra.mxu0 0
    %183 = vmatprep.subr.bf16.mxu0 0
    %184 = vmatpush1.bf16.msra.mxu0 0
    %185 = vmatprep.subr.bf16.mxu0 0
    %186 = vmatpush1.bf16.msra.mxu0 0
    %187 = vmatprep.subr.bf16.mxu0 0
    %188 = vmatpush1.bf16.msra.mxu0 0
    %189 = vmatprep.subr.bf16.mxu0 0
    %190 = vmatpush1.bf16.msra.mxu0 0
    %191 = vmatprep.subr.bf16.mxu0 0
    %192 = vmatpush1.bf16.msra.mxu0 0
    %193 = vmatprep.mubr.bf16.mxu0 0
    %194 = vmatmul.mubr.bf16.gmra.mrb[0].mxu0 %v159
    %v195 = vpop.f32.mrb[0].mxu0
    %v196 = vadd.f32 0.0, %v195
    %v197 = vpop.f32.mrb[0].mxu0
    %v198 = vpop.f32.mrb[0].mxu0
    %v199 = vpop.f32.mrb[0].mxu0
    %200 = vdwg.mxu0
    %v209 = vunpack.c.l.b16 %v96
    %v210 = vunpack.c.l.b16 %v97
    %v211 = vunpack.c.l.b16 %v98
    %v212 = vunpack.c.l.b16 %v99
    %v213 = vunpack.c.l.b16 %v100
    %v214 = vunpack.c.l.b16 %v101
    %v215 = vunpack.c.l.b16 %v102
    %v216 = vunpack.c.l.b16 %v103
    %v217 = vpack.c.b16 %v210, %v209
    %v218 = vpack.c.b16 %v212, %v211
    %v219 = vpack.c.b16 %v214, %v213
    %v220 = vpack.c.b16 %v216, %v215
    %v226 = vsel %vm157, %v95, 0
    %228 = vmatprep.subr.bf16.mxu0 0
    %229 = vmatpush1.bf16.msra.mxu0 %v217
    %230 = vmatprep.subr.bf16.mxu0 0
    %231 = vmatpush1.bf16.msra.mxu0 %v218
    %232 = vmatprep.subr.bf16.mxu0 0
    %233 = vmatpush1.bf16.msra.mxu0 %v219
    %234 = vmatprep.subr.bf16.mxu0 0
    %235 = vmatpush1.bf16.msra.mxu0 %v220
    %236 = vmatprep.subr.bf16.mxu0 0
    %237 = vmatpush1.bf16.msra.mxu0 0
    %238 = vmatprep.subr.bf16.mxu0 0
    %239 = vmatpush1.bf16.msra.mxu0 0
    %240 = vmatprep.subr.bf16.mxu0 0
    %241 = vmatpush1.bf16.msra.mxu0 0
    %242 = vmatprep.subr.bf16.mxu0 0
    %243 = vmatpush1.bf16.msra.mxu0 0
    %244 = vmatprep.subr.bf16.mxu0 0
    %245 = vmatpush1.bf16.msra.mxu0 0
    %246 = vmatprep.subr.bf16.mxu0 0
    %247 = vmatpush1.bf16.msra.mxu0 0
    %248 = vmatprep.subr.bf16.mxu0 0
    %249 = vmatpush1.bf16.msra.mxu0 0
    %250 = vmatprep.subr.bf16.mxu0 0
    %251 = vmatpush1.bf16.msra.mxu0 0
    %252 = vmatprep.subr.bf16.mxu0 0
    %253 = vmatpush1.bf16.msra.mxu0 0
    %254 = vmatprep.subr.bf16.mxu0 0
    %255 = vmatpush1.bf16.msra.mxu0 0
    %256 = vmatprep.subr.bf16.mxu0 0
    %257 = vmatpush1.bf16.msra.mxu0 0
    %258 = vmatprep.subr.bf16.mxu0 0
    %259 = vmatpush1.bf16.msra.mxu0 0
    %260 = vmatprep.mubr.bf16.mxu0 0
    %261 = vmatmul.mubr.bf16.gmra.mrb[0].mxu0 %v226
    %v262 = vpop.f32.mrb[0].mxu0
    %v263 = vadd.f32 %v196, %v262
    %v264 = vpop.f32.mrb[0].mxu0
    %v265 = vpop.f32.mrb[0].mxu0
    %v266 = vpop.f32.mrb[0].mxu0
    %267 = vdwg.mxu0
    %s268 = sld [smem:[#allocation2 + $0x100]]
    %v269 = vstv %s268
    %v270 = vmul.f32 %v69, %v269
    %s271 = sld [smem:[#allocation2 + $0x101]]
    %v272 = vstv %s271
    %v273 = vmul.f32 %v71, %v272
    %v274 = vadd.f32 %v270, %v273
    %s275 = sld [smem:[#allocation2 + $0x102]]
    %v276 = vstv %s275
    %v277 = vmul.f32 %v73, %v276
    %v278 = vadd.f32 %v274, %v277
    %s279 = sld [smem:[#allocation2 + $0x103]]
    %v280 = vstv %s279
    %v281 = vmul.f32 %v75, %v280
    %v282 = vadd.f32 %v278, %v281
    %s283 = sld [smem:[#allocation6 + $0x2]]
    %v284 = vstv %s283
    %v285 = vadd.f32 %v282, %v284
    %v286 = vmax.f32 %v285, 0.0
    %v287 = vpack.c.bf16 %v286, %v286
    %s288 = scalar_lea.vmem [#allocation8], 64
    %v289 = vld [vmem:[%s288] sm:$0xf]
    %v290 = vld [vmem:[%s288 + $0x4] sm:$0xf]
    %v291 = vld [vmem:[%s288 + $0x8] sm:$0xf]
    %v292 = vld [vmem:[%s288 + $0xc] sm:$0xf]
    %v293 = vld [vmem:[%s288 + $0x10] sm:$0xf]
    %v294 = vld [vmem:[%s288 + $0x14] sm:$0xf]
    %v295 = vld [vmem:[%s288 + $0x18] sm:$0xf]
    %v296 = vld [vmem:[%s288 + $0x1c] sm:$0xf]
    %v305 = vunpack.c.l.b16 %v289
    %v306 = vunpack.c.l.b16 %v290
    %v307 = vunpack.c.l.b16 %v291
    %v308 = vunpack.c.l.b16 %v292
    %v309 = vunpack.c.l.b16 %v293
    %v310 = vunpack.c.l.b16 %v294
    %v311 = vunpack.c.l.b16 %v295
    %v312 = vunpack.c.l.b16 %v296
    %v313 = vpack.c.b16 %v306, %v305
    %v314 = vpack.c.b16 %v308, %v307
    %v315 = vpack.c.b16 %v310, %v309
    %v316 = vpack.c.b16 %v312, %v311
    %v322 = vsel %vm157, %v287, 0
    %324 = vmatprep.subr.bf16.mxu0 0
    %325 = vmatpush1.bf16.msra.mxu0 %v313
    %326 = vmatprep.subr.bf16.mxu0 0
    %327 = vmatpush1.bf16.msra.mxu0 %v314
    %328 = vmatprep.subr.bf16.mxu0 0
    %329 = vmatpush1.bf16.msra.mxu0 %v315
    %330 = vmatprep.subr.bf16.mxu0 0
    %331 = vmatpush1.bf16.msra.mxu0 %v316
    %332 = vmatprep.subr.bf16.mxu0 0
    %333 = vmatpush1.bf16.msra.mxu0 0
    %334 = vmatprep.subr.bf16.mxu0 0
    %335 = vmatpush1.bf16.msra.mxu0 0
    %336 = vmatprep.subr.bf16.mxu0 0
    %337 = vmatpush1.bf16.msra.mxu0 0
    %338 = vmatprep.subr.bf16.mxu0 0
    %339 = vmatpush1.bf16.msra.mxu0 0
    %340 = vmatprep.subr.bf16.mxu0 0
    %341 = vmatpush1.bf16.msra.mxu0 0
    %342 = vmatprep.subr.bf16.mxu0 0
    %343 = vmatpush1.bf16.msra.mxu0 0
    %344 = vmatprep.subr.bf16.mxu0 0
    %345 = vmatpush1.bf16.msra.mxu0 0
    %346 = vmatprep.subr.bf16.mxu0 0
    %347 = vmatpush1.bf16.msra.mxu0 0
    %348 = vmatprep.subr.bf16.mxu0 0
    %349 = vmatpush1.bf16.msra.mxu0 0
    %350 = vmatprep.subr.bf16.mxu0 0
    %351 = vmatpush1.bf16.msra.mxu0 0
    %352 = vmatprep.subr.bf16.mxu0 0
    %353 = vmatpush1.bf16.msra.mxu0 0
    %354 = vmatprep.subr.bf16.mxu0 0
    %355 = vmatpush1.bf16.msra.mxu0 0
    %356 = vmatprep.mubr.bf16.mxu0 0
    %357 = vmatmul.mubr.bf16.gmra.mrb[0].mxu0 %v322
    %v358 = vpop.f32.mrb[0].mxu0
    %v359 = vadd.f32 0.0, %v358
    %v360 = vpop.f32.mrb[0].mxu0
    %v361 = vpop.f32.mrb[0].mxu0
    %v362 = vpop.f32.mrb[0].mxu0
    %363 = vdwg.mxu0
    %v364 = vadd.f32 %v263, %v359
    %s365 = sld [smem:[#allocation2 + $0x180]]
    %v366 = vstv %s365
    %v367 = vmul.f32 %v69, %v366
    %s368 = sld [smem:[#allocation2 + $0x181]]
    %v369 = vstv %s368
    %v370 = vmul.f32 %v71, %v369
    %v371 = vadd.f32 %v367, %v370
    %s372 = sld [smem:[#allocation2 + $0x182]]
    %v373 = vstv %s372
    %v374 = vmul.f32 %v73, %v373
    %v375 = vadd.f32 %v371, %v374
    %s376 = sld [smem:[#allocation2 + $0x183]]
    %v377 = vstv %s376
    %v378 = vmul.f32 %v75, %v377
    %v379 = vadd.f32 %v375, %v378
    %s380 = sld [smem:[#allocation6 + $0x3]]
    %v381 = vstv %s380
    %v382 = vadd.f32 %v379, %v381
    %v383 = vmax.f32 %v382, 0.0
    %v384 = vpack.c.bf16 %v383, %v383
    %s385 = scalar_lea.vmem [#allocation8], 96
    %v386 = vld [vmem:[%s385] sm:$0xf]
    %v387 = vld [vmem:[%s385 + $0x4] sm:$0xf]
    %v388 = vld [vmem:[%s385 + $0x8] sm:$0xf]
    %v389 = vld [vmem:[%s385 + $0xc] sm:$0xf]
    %v390 = vld [vmem:[%s385 + $0x10] sm:$0xf]
    %v391 = vld [vmem:[%s385 + $0x14] sm:$0xf]
    %v392 = vld [vmem:[%s385 + $0x18] sm:$0xf]
    %v393 = vld [vmem:[%s385 + $0x1c] sm:$0xf]
    %v402 = vunpack.c.l.b16 %v386
    %v403 = vunpack.c.l.b16 %v387
    %v404 = vunpack.c.l.b16 %v388
    %v405 = vunpack.c.l.b16 %v389
    %v406 = vunpack.c.l.b16 %v390
    %v407 = vunpack.c.l.b16 %v391
    %v408 = vunpack.c.l.b16 %v392
    %v409 = vunpack.c.l.b16 %v393
    %v410 = vpack.c.b16 %v403, %v402
    %v411 = vpack.c.b16 %v405, %v404
    %v412 = vpack.c.b16 %v407, %v406
    %v413 = vpack.c.b16 %v409, %v408
    %v419 = vsel %vm157, %v384, 0
    %421 = vmatprep.subr.bf16.mxu0 0
    %422 = vmatpush1.bf16.msra.mxu0 %v410
    %423 = vmatprep.subr.bf16.mxu0 0
    %424 = vmatpush1.bf16.msra.mxu0 %v411
    %425 = vmatprep.subr.bf16.mxu0 0
    %426 = vmatpush1.bf16.msra.mxu0 %v412
    %427 = vmatprep.subr.bf16.mxu0 0
    %428 = vmatpush1.bf16.msra.mxu0 %v413
    %429 = vmatprep.subr.bf16.mxu0 0
    %430 = vmatpush1.bf16.msra.mxu0 0
    %431 = vmatprep.subr.bf16.mxu0 0
    %432 = vmatpush1.bf16.msra.mxu0 0
    %433 = vmatprep.subr.bf16.mxu0 0
    %434 = vmatpush1.bf16.msra.mxu0 0
    %435 = vmatprep.subr.bf16.mxu0 0
    %436 = vmatpush1.bf16.msra.mxu0 0
    %437 = vmatprep.subr.bf16.mxu0 0
    %438 = vmatpush1.bf16.msra.mxu0 0
    %439 = vmatprep.subr.bf16.mxu0 0
    %440 = vmatpush1.bf16.msra.mxu0 0
    %441 = vmatprep.subr.bf16.mxu0 0
    %442 = vmatpush1.bf16.msra.mxu0 0
    %443 = vmatprep.subr.bf16.mxu0 0
    %444 = vmatpush1.bf16.msra.mxu0 0
    %445 = vmatprep.subr.bf16.mxu0 0
    %446 = vmatpush1.bf16.msra.mxu0 0
    %447 = vmatprep.subr.bf16.mxu0 0
    %448 = vmatpush1.bf16.msra.mxu0 0
    %449 = vmatprep.subr.bf16.mxu0 0
    %450 = vmatpush1.bf16.msra.mxu0 0
    %451 = vmatprep.subr.bf16.mxu0 0
    %452 = vmatpush1.bf16.msra.mxu0 0
    %453 = vmatprep.mubr.bf16.mxu0 0
    %454 = vmatmul.mubr.bf16.gmra.mrb[0].mxu0 %v419
    %v455 = vpop.f32.mrb[0].mxu0
    %v456 = vadd.f32 0.0, %v455
    %v457 = vpop.f32.mrb[0].mxu0
    %v458 = vpop.f32.mrb[0].mxu0
    %v459 = vpop.f32.mrb[0].mxu0
    %460 = vdwg.mxu0
    %v461 = vadd.f32 %v364, %v456
    %s462 = sld [smem:[#allocation2 + $0x200]]
    %v463 = vstv %s462
    %v464 = vmul.f32 %v69, %v463
    %s465 = sld [smem:[#allocation2 + $0x201]]
    %v466 = vstv %s465
    %v467 = vmul.f32 %v71, %v466
    %v468 = vadd.f32 %v464, %v467
    %s469 = sld [smem:[#allocation2 + $0x202]]
    %v470 = vstv %s469
    %v471 = vmul.f32 %v73, %v470
    %v472 = vadd.f32 %v468, %v471
    %s473 = sld [smem:[#allocation2 + $0x203]]
    %v474 = vstv %s473
    %v475 = vmul.f32 %v75, %v474
    %v476 = vadd.f32 %v472, %v475
    %s477 = sld [smem:[#allocation6 + $0x4]]
    %v478 = vstv %s477
    %v479 = vadd.f32 %v476, %v478
    %v480 = vmax.f32 %v479, 0.0
    %v481 = vpack.c.bf16 %v480, %v480
    %s482 = scalar_lea.vmem [#allocation8], 128
    %v483 = vld [vmem:[%s482] sm:$0xf]
    %v484 = vld [vmem:[%s482 + $0x4] sm:$0xf]
    %v485 = vld [vmem:[%s482 + $0x8] sm:$0xf]
    %v486 = vld [vmem:[%s482 + $0xc] sm:$0xf]
    %v487 = vld [vmem:[%s482 + $0x10] sm:$0xf]
    %v488 = vld [vmem:[%s482 + $0x14] sm:$0xf]
    %v489 = vld [vmem:[%s482 + $0x18] sm:$0xf]
    %v490 = vld [vmem:[%s482 + $0x1c] sm:$0xf]
    %v499 = vunpack.c.l.b16 %v483
    %v500 = vunpack.c.l.b16 %v484
    %v501 = vunpack.c.l.b16 %v485
    %v502 = vunpack.c.l.b16 %v486
    %v503 = vunpack.c.l.b16 %v487
    %v504 = vunpack.c.l.b16 %v488
    %v505 = vunpack.c.l.b16 %v489
    %v506 = vunpack.c.l.b16 %v490
    %v507 = vpack.c.b16 %v500, %v499
    %v508 = vpack.c.b16 %v502, %v501
    %v509 = vpack.c.b16 %v504, %v503
    %v510 = vpack.c.b16 %v506, %v505
    %v516 = vsel %vm157, %v481, 0
    %518 = vmatprep.subr.bf16.mxu0 0
    %519 = vmatpush1.bf16.msra.mxu0 %v507
    %520 = vmatprep.subr.bf16.mxu0 0
    %521 = vmatpush1.bf16.msra.mxu0 %v508
    %522 = vmatprep.subr.bf16.mxu0 0
    %523 = vmatpush1.bf16.msra.mxu0 %v509
    %524 = vmatprep.subr.bf16.mxu0 0
    %525 = vmatpush1.bf16.msra.mxu0 %v510
    %526 = vmatprep.subr.bf16.mxu0 0
    %527 = vmatpush1.bf16.msra.mxu0 0
    %528 = vmatprep.subr.bf16.mxu0 0
    %529 = vmatpush1.bf16.msra.mxu0 0
    %530 = vmatprep.subr.bf16.mxu0 0
    %531 = vmatpush1.bf16.msra.mxu0 0
    %532 = vmatprep.subr.bf16.mxu0 0
    %533 = vmatpush1.bf16.msra.mxu0 0
    %534 = vmatprep.subr.bf16.mxu0 0
    %535 = vmatpush1.bf16.msra.mxu0 0
    %536 = vmatprep.subr.bf16.mxu0 0
    %537 = vmatpush1.bf16.msra.mxu0 0
    %538 = vmatprep.subr.bf16.mxu0 0
    %539 = vmatpush1.bf16.msra.mxu0 0
    %540 = vmatprep.subr.bf16.mxu0 0
    %541 = vmatpush1.bf16.msra.mxu0 0
    %542 = vmatprep.subr.bf16.mxu0 0
    %543 = vmatpush1.bf16.msra.mxu0 0
    %544 = vmatprep.subr.bf16.mxu0 0
    %545 = vmatpush1.bf16.msra.mxu0 0
    %546 = vmatprep.subr.bf16.mxu0 0
    %547 = vmatpush1.bf16.msra.mxu0 0
    %548 = vmatprep.subr.bf16.mxu0 0
    %549 = vmatpush1.bf16.msra.mxu0 0
    %550 = vmatprep.mubr.bf16.mxu0 0
    %551 = vmatmul.mubr.bf16.gmra.mrb[0].mxu0 %v516
    %v552 = vpop.f32.mrb[0].mxu0
    %v553 = vadd.f32 0.0, %v552
    %v554 = vpop.f32.mrb[0].mxu0
    %v555 = vpop.f32.mrb[0].mxu0
    %v556 = vpop.f32.mrb[0].mxu0
    %557 = vdwg.mxu0
    %v558 = vadd.f32 %v461, %v553
    %s559 = sld [smem:[#allocation2 + $0x280]]
    %v560 = vstv %s559
    %v561 = vmul.f32 %v69, %v560
    %s562 = sld [smem:[#allocation2 + $0x281]]
    %v563 = vstv %s562
    %v564 = vmul.f32 %v71, %v563
    %v565 = vadd.f32 %v561, %v564
    %s566 = sld [smem:[#allocation2 + $0x282]]
    %v567 = vstv %s566
    %v568 = vmul.f32 %v73, %v567
    %v569 = vadd.f32 %v565, %v568
    %s570 = sld [smem:[#allocation2 + $0x283]]
    %v571 = vstv %s570
    %v572 = vmul.f32 %v75, %v571
    %v573 = vadd.f32 %v569, %v572
    %s574 = sld [smem:[#allocation6 + $0x5]]
    %v575 = vstv %s574
    %v576 = vadd.f32 %v573, %v575
    %v577 = vmax.f32 %v576, 0.0
    %v578 = vpack.c.bf16 %v577, %v577
    %s579 = scalar_lea.vmem [#allocation8], 160
    %v580 = vld [vmem:[%s579] sm:$0xf]
    %v581 = vld [vmem:[%s579 + $0x4] sm:$0xf]
    %v582 = vld [vmem:[%s579 + $0x8] sm:$0xf]
    %v583 = vld [vmem:[%s579 + $0xc] sm:$0xf]
    %v584 = vld [vmem:[%s579 + $0x10] sm:$0xf]
    %v585 = vld [vmem:[%s579 + $0x14] sm:$0xf]
    %v586 = vld [vmem:[%s579 + $0x18] sm:$0xf]
    %v587 = vld [vmem:[%s579 + $0x1c] sm:$0xf]
    %v596 = vunpack.c.l.b16 %v580
    %v597 = vunpack.c.l.b16 %v581
    %v598 = vunpack.c.l.b16 %v582
    %v599 = vunpack.c.l.b16 %v583
    %v600 = vunpack.c.l.b16 %v584
    %v601 = vunpack.c.l.b16 %v585
    %v602 = vunpack.c.l.b16 %v586
    %v603 = vunpack.c.l.b16 %v587
    %v604 = vpack.c.b16 %v597, %v596
    %v605 = vpack.c.b16 %v599, %v598
    %v606 = vpack.c.b16 %v601, %v600
    %v607 = vpack.c.b16 %v603, %v602
    %v613 = vsel %vm157, %v578, 0
    %615 = vmatprep.subr.bf16.mxu0 0
    %616 = vmatpush1.bf16.msra.mxu0 %v604
    %617 = vmatprep.subr.bf16.mxu0 0
    %618 = vmatpush1.bf16.msra.mxu0 %v605
    %619 = vmatprep.subr.bf16.mxu0 0
    %620 = vmatpush1.bf16.msra.mxu0 %v606
    %621 = vmatprep.subr.bf16.mxu0 0
    %622 = vmatpush1.bf16.msra.mxu0 %v607
    %623 = vmatprep.subr.bf16.mxu0 0
    %624 = vmatpush1.bf16.msra.mxu0 0
    %625 = vmatprep.subr.bf16.mxu0 0
    %626 = vmatpush1.bf16.msra.mxu0 0
    %627 = vmatprep.subr.bf16.mxu0 0
    %628 = vmatpush1.bf16.msra.mxu0 0
    %629 = vmatprep.subr.bf16.mxu0 0
    %630 = vmatpush1.bf16.msra.mxu0 0
    %631 = vmatprep.subr.bf16.mxu0 0
    %632 = vmatpush1.bf16.msra.mxu0 0
    %633 = vmatprep.subr.bf16.mxu0 0
    %634 = vmatpush1.bf16.msra.mxu0 0
    %635 = vmatprep.subr.bf16.mxu0 0
    %636 = vmatpush1.bf16.msra.mxu0 0
    %637 = vmatprep.subr.bf16.mxu0 0
    %638 = vmatpush1.bf16.msra.mxu0 0
    %639 = vmatprep.subr.bf16.mxu0 0
    %640 = vmatpush1.bf16.msra.mxu0 0
    %641 = vmatprep.subr.bf16.mxu0 0
    %642 = vmatpush1.bf16.msra.mxu0 0
    %643 = vmatprep.subr.bf16.mxu0 0
    %644 = vmatpush1.bf16.msra.mxu0 0
    %645 = vmatprep.subr.bf16.mxu0 0
    %646 = vmatpush1.bf16.msra.mxu0 0
    %647 = vmatprep.mubr.bf16.mxu0 0
    %648 = vmatmul.mubr.bf16.gmra.mrb[0].mxu0 %v613
    %v649 = vpop.f32.mrb[0].mxu0
    %v650 = vadd.f32 0.0, %v649
    %v651 = vpop.f32.mrb[0].mxu0
    %v652 = vpop.f32.mrb[0].mxu0
    %v653 = vpop.f32.mrb[0].mxu0
    %654 = vdwg.mxu0
    %v655 = vadd.f32 %v558, %v650
    %s656 = sld [smem:[#allocation2 + $0x300]]
    %v657 = vstv %s656
    %v658 = vmul.f32 %v69, %v657
    %s659 = sld [smem:[#allocation2 + $0x301]]
    %v660 = vstv %s659
    %v661 = vmul.f32 %v71, %v660
    %v662 = vadd.f32 %v658, %v661
    %s663 = sld [smem:[#allocation2 + $0x302]]
    %v664 = vstv %s663
    %v665 = vmul.f32 %v73, %v664
    %v666 = vadd.f32 %v662, %v665
    %s667 = sld [smem:[#allocation2 + $0x303]]
    %v668 = vstv %s667
    %v669 = vmul.f32 %v75, %v668
    %v670 = vadd.f32 %v666, %v669
    %s671 = sld [smem:[#allocation6 + $0x6]]
    %v672 = vstv %s671
    %v673 = vadd.f32 %v670, %v672
    %v674 = vmax.f32 %v673, 0.0
    %v675 = vpack.c.bf16 %v674, %v674
    %s676 = scalar_lea.vmem [#allocation8], 192
    %v677 = vld [vmem:[%s676] sm:$0xf]
    %v678 = vld [vmem:[%s676 + $0x4] sm:$0xf]
    %v679 = vld [vmem:[%s676 + $0x8] sm:$0xf]
    %v680 = vld [vmem:[%s676 + $0xc] sm:$0xf]
    %v681 = vld [vmem:[%s676 + $0x10] sm:$0xf]
    %v682 = vld [vmem:[%s676 + $0x14] sm:$0xf]
    %v683 = vld [vmem:[%s676 + $0x18] sm:$0xf]
    %v684 = vld [vmem:[%s676 + $0x1c] sm:$0xf]
    %v693 = vunpack.c.l.b16 %v677
    %v694 = vunpack.c.l.b16 %v678
    %v695 = vunpack.c.l.b16 %v679
    %v696 = vunpack.c.l.b16 %v680
    %v697 = vunpack.c.l.b16 %v681
    %v698 = vunpack.c.l.b16 %v682
    %v699 = vunpack.c.l.b16 %v683
    %v700 = vunpack.c.l.b16 %v684
    %v701 = vpack.c.b16 %v694, %v693
    %v702 = vpack.c.b16 %v696, %v695
    %v703 = vpack.c.b16 %v698, %v697
    %v704 = vpack.c.b16 %v700, %v699
    %v710 = vsel %vm157, %v675, 0
    %712 = vmatprep.subr.bf16.mxu0 0
    %713 = vmatpush1.bf16.msra.mxu0 %v701
    %714 = vmatprep.subr.bf16.mxu0 0
    %715 = vmatpush1.bf16.msra.mxu0 %v702
    %716 = vmatprep.subr.bf16.mxu0 0
    %717 = vmatpush1.bf16.msra.mxu0 %v703
    %718 = vmatprep.subr.bf16.mxu0 0
    %719 = vmatpush1.bf16.msra.mxu0 %v704
    %720 = vmatprep.subr.bf16.mxu0 0
    %721 = vmatpush1.bf16.msra.mxu0 0
    %722 = vmatprep.subr.bf16.mxu0 0
    %723 = vmatpush1.bf16.msra.mxu0 0
    %724 = vmatprep.subr.bf16.mxu0 0
    %725 = vmatpush1.bf16.msra.mxu0 0
    %726 = vmatprep.subr.bf16.mxu0 0
    %727 = vmatpush1.bf16.msra.mxu0 0
    %728 = vmatprep.subr.bf16.mxu0 0
    %729 = vmatpush1.bf16.msra.mxu0 0
    %730 = vmatprep.subr.bf16.mxu0 0
    %731 = vmatpush1.bf16.msra.mxu0 0
    %732 = vmatprep.subr.bf16.mxu0 0
    %733 = vmatpush1.bf16.msra.mxu0 0
    %734 = vmatprep.subr.bf16.mxu0 0
    %735 = vmatpush1.bf16.msra.mxu0 0
    %736 = vmatprep.subr.bf16.mxu0 0
    %737 = vmatpush1.bf16.msra.mxu0 0
    %738 = vmatprep.subr.bf16.mxu0 0
    %739 = vmatpush1.bf16.msra.mxu0 0
    %740 = vmatprep.subr.bf16.mxu0 0
    %741 = vmatpush1.bf16.msra.mxu0 0
    %742 = vmatprep.subr.bf16.mxu0 0
    %743 = vmatpush1.bf16.msra.mxu0 0
    %744 = vmatprep.mubr.bf16.mxu0 0
    %745 = vmatmul.mubr.bf16.gmra.mrb[0].mxu0 %v710
    %v746 = vpop.f32.mrb[0].mxu0
    %v747 = vadd.f32 0.0, %v746
    %v748 = vpop.f32.mrb[0].mxu0
    %v749 = vpop.f32.mrb[0].mxu0
    %v750 = vpop.f32.mrb[0].mxu0
    %751 = vdwg.mxu0
    %v752 = vadd.f32 %v655, %v747
    %s753 = sld [smem:[#allocation2 + $0x380]]
    %v754 = vstv %s753
    %v755 = vmul.f32 %v69, %v754
    %s756 = sld [smem:[#allocation2 + $0x381]]
    %v757 = vstv %s756
    %v758 = vmul.f32 %v71, %v757
    %v759 = vadd.f32 %v755, %v758
    %s760 = sld [smem:[#allocation2 + $0x382]]
    %v761 = vstv %s760
    %v762 = vmul.f32 %v73, %v761
    %v763 = vadd.f32 %v759, %v762
    %s764 = sld [smem:[#allocation2 + $0x383]]
    %v765 = vstv %s764
    %v766 = vmul.f32 %v75, %v765
    %v767 = vadd.f32 %v763, %v766
    %s768 = sld [smem:[#allocation6 + $0x7]]
    %v769 = vstv %s768
    %v770 = vadd.f32 %v767, %v769
    %v771 = vmax.f32 %v770, 0.0
    %v772 = vpack.c.bf16 %v771, %v771
    %s773 = scalar_lea.vmem [#allocation8], 224
    %v774 = vld [vmem:[%s773] sm:$0xf]
    %v775 = vld [vmem:[%s773 + $0x4] sm:$0xf]
    %v776 = vld [vmem:[%s773 + $0x8] sm:$0xf]
    %v777 = vld [vmem:[%s773 + $0xc] sm:$0xf]
    %v778 = vld [vmem:[%s773 + $0x10] sm:$0xf]
    %v779 = vld [vmem:[%s773 + $0x14] sm:$0xf]
    %v780 = vld [vmem:[%s773 + $0x18] sm:$0xf]
    %v781 = vld [vmem:[%s773 + $0x1c] sm:$0xf]
    %v790 = vunpack.c.l.b16 %v774
    %v791 = vunpack.c.l.b16 %v775
    %v792 = vunpack.c.l.b16 %v776
    %v793 = vunpack.c.l.b16 %v777
    %v794 = vunpack.c.l.b16 %v778
    %v795 = vunpack.c.l.b16 %v779
    %v796 = vunpack.c.l.b16 %v780
    %v797 = vunpack.c.l.b16 %v781
    %v798 = vpack.c.b16 %v791, %v790
    %v799 = vpack.c.b16 %v793, %v792
    %v800 = vpack.c.b16 %v795, %v794
    %v801 = vpack.c.b16 %v797, %v796
    %v807 = vsel %vm157, %v772, 0
    %809 = vmatprep.subr.bf16.mxu0 0
    %810 = vmatpush1.bf16.msra.mxu0 %v798
    %811 = vmatprep.subr.bf16.mxu0 0
    %812 = vmatpush1.bf16.msra.mxu0 %v799
    %813 = vmatprep.subr.bf16.mxu0 0
    %814 = vmatpush1.bf16.msra.mxu0 %v800
    %815 = vmatprep.subr.bf16.mxu0 0
    %816 = vmatpush1.bf16.msra.mxu0 %v801
    %817 = vmatprep.subr.bf16.mxu0 0
    %818 = vmatpush1.bf16.msra.mxu0 0
    %819 = vmatprep.subr.bf16.mxu0 0
    %820 = vmatpush1.bf16.msra.mxu0 0
    %821 = vmatprep.subr.bf16.mxu0 0
    %822 = vmatpush1.bf16.msra.mxu0 0
    %823 = vmatprep.subr.bf16.mxu0 0
    %824 = vmatpush1.bf16.msra.mxu0 0
    %825 = vmatprep.subr.bf16.mxu0 0
    %826 = vmatpush1.bf16.msra.mxu0 0
    %827 = vmatprep.subr.bf16.mxu0 0
    %828 = vmatpush1.bf16.msra.mxu0 0
    %829 = vmatprep.subr.bf16.mxu0 0
    %830 = vmatpush1.bf16.msra.mxu0 0
    %831 = vmatprep.subr.bf16.mxu0 0
    %832 = vmatpush1.bf16.msra.mxu0 0
    %833 = vmatprep.subr.bf16.mxu0 0
    %834 = vmatpush1.bf16.msra.mxu0 0
    %835 = vmatprep.subr.bf16.mxu0 0
    %836 = vmatpush1.bf16.msra.mxu0 0
    %837 = vmatprep.subr.bf16.mxu0 0
    %838 = vmatpush1.bf16.msra.mxu0 0
    %839 = vmatprep.subr.bf16.mxu0 0
    %840 = vmatpush1.bf16.msra.mxu0 0
    %841 = vmatprep.mubr.bf16.mxu0 0
    %842 = vmatmul.mubr.bf16.gmra.mrb[0].mxu0 %v807
    %v843 = vpop.f32.mrb[0].mxu0
    %v844 = vadd.f32 0.0, %v843
    %v845 = vpop.f32.mrb[0].mxu0
    %v846 = vpop.f32.mrb[0].mxu0
    %v847 = vpop.f32.mrb[0].mxu0
    %848 = vdwg.mxu0
    %v849 = vadd.f32 %v752, %v844
    %s850 = sld [smem:[#allocation2 + $0x400]]
    %v851 = vstv %s850
    %v852 = vmul.f32 %v69, %v851
    %s853 = sld [smem:[#allocation2 + $0x401]]
    %v854 = vstv %s853
    %v855 = vmul.f32 %v71, %v854
    %v856 = vadd.f32 %v852, %v855
    %s857 = sld [smem:[#allocation2 + $0x402]]
    %v858 = vstv %s857
    %v859 = vmul.f32 %v73, %v858
    %v860 = vadd.f32 %v856, %v859
    %s861 = sld [smem:[#allocation2 + $0x403]]
    %v862 = vstv %s861
    %v863 = vmul.f32 %v75, %v862
    %v864 = vadd.f32 %v860, %v863
    %s865 = sld [smem:[#allocation6 + $0x8]]
    %v866 = vstv %s865
    %v867 = vadd.f32 %v864, %v866
    %v868 = vmax.f32 %v867, 0.0
    %v869 = vpack.c.bf16 %v868, %v868
    %s870 = scalar_lea.vmem [#allocation8], 256
    %v871 = vld [vmem:[%s870] sm:$0xf]
    %v872 = vld [vmem:[%s870 + $0x4] sm:$0xf]
    %v873 = vld [vmem:[%s870 + $0x8] sm:$0xf]
    %v874 = vld [vmem:[%s870 + $0xc] sm:$0xf]
    %v875 = vld [vmem:[%s870 + $0x10] sm:$0xf]
    %v876 = vld [vmem:[%s870 + $0x14] sm:$0xf]
    %v877 = vld [vmem:[%s870 + $0x18] sm:$0xf]
    %v878 = vld [vmem:[%s870 + $0x1c] sm:$0xf]
    %v887 = vunpack.c.l.b16 %v871
    %v888 = vunpack.c.l.b16 %v872
    %v889 = vunpack.c.l.b16 %v873
    %v890 = vunpack.c.l.b16 %v874
    %v891 = vunpack.c.l.b16 %v875
    %v892 = vunpack.c.l.b16 %v876
    %v893 = vunpack.c.l.b16 %v877
    %v894 = vunpack.c.l.b16 %v878
    %v895 = vpack.c.b16 %v888, %v887
    %v896 = vpack.c.b16 %v890, %v889
    %v897 = vpack.c.b16 %v892, %v891
    %v898 = vpack.c.b16 %v894, %v893
    %v904 = vsel %vm157, %v869, 0
    %906 = vmatprep.subr.bf16.mxu0 0
    %907 = vmatpush1.bf16.msra.mxu0 %v895
    %908 = vmatprep.subr.bf16.mxu0 0
    %909 = vmatpush1.bf16.msra.mxu0 %v896
    %910 = vmatprep.subr.bf16.mxu0 0
    %911 = vmatpush1.bf16.msra.mxu0 %v897
    %912 = vmatprep.subr.bf16.mxu0 0
    %913 = vmatpush1.bf16.msra.mxu0 %v898
    %914 = vmatprep.subr.bf16.mxu0 0
    %915 = vmatpush1.bf16.msra.mxu0 0
    %916 = vmatprep.subr.bf16.mxu0 0
    %917 = vmatpush1.bf16.msra.mxu0 0
    %918 = vmatprep.subr.bf16.mxu0 0
    %919 = vmatpush1.bf16.msra.mxu0 0
    %920 = vmatprep.subr.bf16.mxu0 0
    %921 = vmatpush1.bf16.msra.mxu0 0
    %922 = vmatprep.subr.bf16.mxu0 0
    %923 = vmatpush1.bf16.msra.mxu0 0
    %924 = vmatprep.subr.bf16.mxu0 0
    %925 = vmatpush1.bf16.msra.mxu0 0
    %926 = vmatprep.subr.bf16.mxu0 0
    %927 = vmatpush1.bf16.msra.mxu0 0
    %928 = vmatprep.subr.bf16.mxu0 0
    %929 = vmatpush1.bf16.msra.mxu0 0
    %930 = vmatprep.subr.bf16.mxu0 0
    %931 = vmatpush1.bf16.msra.mxu0 0
    %932 = vmatprep.subr.bf16.mxu0 0
    %933 = vmatpush1.bf16.msra.mxu0 0
    %934 = vmatprep.subr.bf16.mxu0 0
    %935 = vmatpush1.bf16.msra.mxu0 0
    %936 = vmatprep.subr.bf16.mxu0 0
    %937 = vmatpush1.bf16.msra.mxu0 0
    %938 = vmatprep.mubr.bf16.mxu0 0
    %939 = vmatmul.mubr.bf16.gmra.mrb[0].mxu0 %v904
    %v940 = vpop.f32.mrb[0].mxu0
    %v941 = vadd.f32 0.0, %v940
    %v942 = vpop.f32.mrb[0].mxu0
    %v943 = vpop.f32.mrb[0].mxu0
    %v944 = vpop.f32.mrb[0].mxu0
    %945 = vdwg.mxu0
    %v946 = vadd.f32 %v849, %v941
    %s947 = sld [smem:[#allocation2 + $0x480]]
    %v948 = vstv %s947
    %v949 = vmul.f32 %v69, %v948
    %s950 = sld [smem:[#allocation2 + $0x481]]
    %v951 = vstv %s950
    %v952 = vmul.f32 %v71, %v951
    %v953 = vadd.f32 %v949, %v952
    %s954 = sld [smem:[#allocation2 + $0x482]]
    %v955 = vstv %s954
    %v956 = vmul.f32 %v73, %v955
    %v957 = vadd.f32 %v953, %v956
    %s958 = sld [smem:[#allocation2 + $0x483]]
    %v959 = vstv %s958
    %v960 = vmul.f32 %v75, %v959
    %v961 = vadd.f32 %v957, %v960
    %s962 = sld [smem:[#allocation6 + $0x9]]
    %v963 = vstv %s962
    %v964 = vadd.f32 %v961, %v963
    %v965 = vmax.f32 %v964, 0.0
    %v966 = vpack.c.bf16 %v965, %v965
    %s967 = scalar_lea.vmem [#allocation8], 288
    %v968 = vld [vmem:[%s967] sm:$0xf]
    %v969 = vld [vmem:[%s967 + $0x4] sm:$0xf]
    %v970 = vld [vmem:[%s967 + $0x8] sm:$0xf]
    %v971 = vld [vmem:[%s967 + $0xc] sm:$0xf]
    %v972 = vld [vmem:[%s967 + $0x10] sm:$0xf]
    %v973 = vld [vmem:[%s967 + $0x14] sm:$0xf]
    %v974 = vld [vmem:[%s967 + $0x18] sm:$0xf]
    %v975 = vld [vmem:[%s967 + $0x1c] sm:$0xf]
    %v984 = vunpack.c.l.b16 %v968
    %v985 = vunpack.c.l.b16 %v969
    %v986 = vunpack.c.l.b16 %v970
    %v987 = vunpack.c.l.b16 %v971
    %v988 = vunpack.c.l.b16 %v972
    %v989 = vunpack.c.l.b16 %v973
    %v990 = vunpack.c.l.b16 %v974
    %v991 = vunpack.c.l.b16 %v975
    %v992 = vpack.c.b16 %v985, %v984
    %v993 = vpack.c.b16 %v987, %v986
    %v994 = vpack.c.b16 %v989, %v988
    %v995 = vpack.c.b16 %v991, %v990
    %v1001 = vsel %vm157, %v966, 0
    %1003 = vmatprep.subr.bf16.mxu0 0
    %1004 = vmatpush1.bf16.msra.mxu0 %v992
    %1005 = vmatprep.subr.bf16.mxu0 0
    %1006 = vmatpush1.bf16.msra.mxu0 %v993
    %1007 = vmatprep.subr.bf16.mxu0 0
    %1008 = vmatpush1.bf16.msra.mxu0 %v994
    %1009 = vmatprep.subr.bf16.mxu0 0
    %1010 = vmatpush1.bf16.msra.mxu0 %v995
    %1011 = vmatprep.subr.bf16.mxu0 0
    %1012 = vmatpush1.bf16.msra.mxu0 0
    %1013 = vmatprep.subr.bf16.mxu0 0
    %1014 = vmatpush1.bf16.msra.mxu0 0
    %1015 = vmatprep.subr.bf16.mxu0 0
    %1016 = vmatpush1.bf16.msra.mxu0 0
    %1017 = vmatprep.subr.bf16.mxu0 0
    %1018 = vmatpush1.bf16.msra.mxu0 0
    %1019 = vmatprep.subr.bf16.mxu0 0
    %1020 = vmatpush1.bf16.msra.mxu0 0
    %1021 = vmatprep.subr.bf16.mxu0 0
    %1022 = vmatpush1.bf16.msra.mxu0 0
    %1023 = vmatprep.subr.bf16.mxu0 0
    %1024 = vmatpush1.bf16.msra.mxu0 0
    %1025 = vmatprep.subr.bf16.mxu0 0
    %1026 = vmatpush1.bf16.msra.mxu0 0
    %1027 = vmatprep.subr.bf16.mxu0 0
    %1028 = vmatpush1.bf16.msra.mxu0 0
    %1029 = vmatprep.subr.bf16.mxu0 0
    %1030 = vmatpush1.bf16.msra.mxu0 0
    %1031 = vmatprep.subr.bf16.mxu0 0
    %1032 = vmatpush1.bf16.msra.mxu0 0
    %1033 = vmatprep.subr.bf16.mxu0 0
    %1034 = vmatpush1.bf16.msra.mxu0 0
    %1035 = vmatprep.mubr.bf16.mxu0 0
    %1036 = vmatmul.mubr.bf16.gmra.mrb[0].mxu0 %v1001
    %v1037 = vpop.f32.mrb[0].mxu0
    %v1038 = vadd.f32 0.0, %v1037
    %v1039 = vpop.f32.mrb[0].mxu0
    %v1040 = vpop.f32.mrb[0].mxu0
    %v1041 = vpop.f32.mrb[0].mxu0
    %1042 = vdwg.mxu0
    %v1043 = vadd.f32 %v946, %v1038
    %s1044 = sld [smem:[#allocation2 + $0x500]]
    %v1045 = vstv %s1044
    %v1046 = vmul.f32 %v69, %v1045
    %s1047 = sld [smem:[#allocation2 + $0x501]]
    %v1048 = vstv %s1047
    %v1049 = vmul.f32 %v71, %v1048
    %v1050 = vadd.f32 %v1046, %v1049
    %s1051 = sld [smem:[#allocation2 + $0x502]]
    %v1052 = vstv %s1051
    %v1053 = vmul.f32 %v73, %v1052
    %v1054 = vadd.f32 %v1050, %v1053
    %s1055 = sld [smem:[#allocation2 + $0x503]]
    %v1056 = vstv %s1055
    %v1057 = vmul.f32 %v75, %v1056
    %v1058 = vadd.f32 %v1054, %v1057
    %s1059 = sld [smem:[#allocation6 + $0xa]]
    %v1060 = vstv %s1059
    %v1061 = vadd.f32 %v1058, %v1060
    %v1062 = vmax.f32 %v1061, 0.0
    %v1063 = vpack.c.bf16 %v1062, %v1062
    %s1064 = scalar_lea.vmem [#allocation8], 320
    %v1065 = vld [vmem:[%s1064] sm:$0xf]
    %v1066 = vld [vmem:[%s1064 + $0x4] sm:$0xf]
    %v1067 = vld [vmem:[%s1064 + $0x8] sm:$0xf]
    %v1068 = vld [vmem:[%s1064 + $0xc] sm:$0xf]
    %v1069 = vld [vmem:[%s1064 + $0x10] sm:$0xf]
    %v1070 = vld [vmem:[%s1064 + $0x14] sm:$0xf]
    %v1071 = vld [vmem:[%s1064 + $0x18] sm:$0xf]
    %v1072 = vld [vmem:[%s1064 + $0x1c] sm:$0xf]
    %v1081 = vunpack.c.l.b16 %v1065
    %v1082 = vunpack.c.l.b16 %v1066
    %v1083 = vunpack.c.l.b16 %v1067
    %v1084 = vunpack.c.l.b16 %v1068
    %v1085 = vunpack.c.l.b16 %v1069
    %v1086 = vunpack.c.l.b16 %v1070
    %v1087 = vunpack.c.l.b16 %v1071
    %v1088 = vunpack.c.l.b16 %v1072
    %v1089 = vpack.c.b16 %v1082, %v1081
    %v1090 = vpack.c.b16 %v1084, %v1083
    %v1091 = vpack.c.b16 %v1086, %v1085
    %v1092 = vpack.c.b16 %v1088, %v1087
    %v1098 = vsel %vm157, %v1063, 0
    %1100 = vmatprep.subr.bf16.mxu0 0
    %1101 = vmatpush1.bf16.msra.mxu0 %v1089
    %1102 = vmatprep.subr.bf16.mxu0 0
    %1103 = vmatpush1.bf16.msra.mxu0 %v1090
    %1104 = vmatprep.subr.bf16.mxu0 0
    %1105 = vmatpush1.bf16.msra.mxu0 %v1091
    %1106 = vmatprep.subr.bf16.mxu0 0
    %1107 = vmatpush1.bf16.msra.mxu0 %v1092
    %1108 = vmatprep.subr.bf16.mxu0 0
    %1109 = vmatpush1.bf16.msra.mxu0 0
    %1110 = vmatprep.subr.bf16.mxu0 0
    %1111 = vmatpush1.bf16.msra.mxu0 0
    %1112 = vmatprep.subr.bf16.mxu0 0
    %1113 = vmatpush1.bf16.msra.mxu0 0
    %1114 = vmatprep.subr.bf16.mxu0 0
    %1115 = vmatpush1.bf16.msra.mxu0 0
    %1116 = vmatprep.subr.bf16.mxu0 0
    %1117 = vmatpush1.bf16.msra.mxu0 0
    %1118 = vmatprep.subr.bf16.mxu0 0
    %1119 = vmatpush1.bf16.msra.mxu0 0
    %1120 = vmatprep.subr.bf16.mxu0 0
    %1121 = vmatpush1.bf16.msra.mxu0 0
    %1122 = vmatprep.subr.bf16.mxu0 0
    %1123 = vmatpush1.bf16.msra.mxu0 0
    %1124 = vmatprep.subr.bf16.mxu0 0
    %1125 = vmatpush1.bf16.msra.mxu0 0
    %1126 = vmatprep.subr.bf16.mxu0 0
    %1127 = vmatpush1.bf16.msra.mxu0 0
    %1128 = vmatprep.subr.bf16.mxu0 0
    %1129 = vmatpush1.bf16.msra.mxu0 0
    %1130 = vmatprep.subr.bf16.mxu0 0
    %1131 = vmatpush1.bf16.msra.mxu0 0
    %1132 = vmatprep.mubr.bf16.mxu0 0
    %1133 = vmatmul.mubr.bf16.gmra.mrb[0].mxu0 %v1098
    %v1134 = vpop.f32.mrb[0].mxu0
    %v1135 = vadd.f32 0.0, %v1134
    %v1136 = vpop.f32.mrb[0].mxu0
    %v1137 = vpop.f32.mrb[0].mxu0
    %v1138 = vpop.f32.mrb[0].mxu0
    %1139 = vdwg.mxu0
    %v1140 = vadd.f32 %v1043, %v1135
    %s1141 = sld [smem:[#allocation2 + $0x580]]
    %v1142 = vstv %s1141
    %v1143 = vmul.f32 %v69, %v1142
    %s1144 = sld [smem:[#allocation2 + $0x581]]
    %v1145 = vstv %s1144
    %v1146 = vmul.f32 %v71, %v1145
    %v1147 = vadd.f32 %v1143, %v1146
    %s1148 = sld [smem:[#allocation2 + $0x582]]
    %v1149 = vstv %s1148
    %v1150 = vmul.f32 %v73, %v1149
    %v1151 = vadd.f32 %v1147, %v1150
    %s1152 = sld [smem:[#allocation2 + $0x583]]
    %v1153 = vstv %s1152
    %v1154 = vmul.f32 %v75, %v1153
    %v1155 = vadd.f32 %v1151, %v1154
    %s1156 = sld [smem:[#allocation6 + $0xb]]
    %v1157 = vstv %s1156
    %v1158 = vadd.f32 %v1155, %v1157
    %v1159 = vmax.f32 %v1158, 0.0
    %v1160 = vpack.c.bf16 %v1159, %v1159
    %s1161 = scalar_lea.vmem [#allocation8], 352
    %v1162 = vld [vmem:[%s1161] sm:$0xf]
    %v1163 = vld [vmem:[%s1161 + $0x4] sm:$0xf]
    %v1164 = vld [vmem:[%s1161 + $0x8] sm:$0xf]
    %v1165 = vld [vmem:[%s1161 + $0xc] sm:$0xf]
    %v1166 = vld [vmem:[%s1161 + $0x10] sm:$0xf]
    %v1167 = vld [vmem:[%s1161 + $0x14] sm:$0xf]
    %v1168 = vld [vmem:[%s1161 + $0x18] sm:$0xf]
    %v1169 = vld [vmem:[%s1161 + $0x1c] sm:$0xf]
    %v1178 = vunpack.c.l.b16 %v1162
    %v1179 = vunpack.c.l.b16 %v1163
    %v1180 = vunpack.c.l.b16 %v1164
    %v1181 = vunpack.c.l.b16 %v1165
    %v1182 = vunpack.c.l.b16 %v1166
    %v1183 = vunpack.c.l.b16 %v1167
    %v1184 = vunpack.c.l.b16 %v1168
    %v1185 = vunpack.c.l.b16 %v1169
    %v1186 = vpack.c.b16 %v1179, %v1178
    %v1187 = vpack.c.b16 %v1181, %v1180
    %v1188 = vpack.c.b16 %v1183, %v1182
    %v1189 = vpack.c.b16 %v1185, %v1184
    %v1195 = vsel %vm157, %v1160, 0
    %1197 = vmatprep.subr.bf16.mxu0 0
    %1198 = vmatpush1.bf16.msra.mxu0 %v1186
    %1199 = vmatprep.subr.bf16.mxu0 0
    %1200 = vmatpush1.bf16.msra.mxu0 %v1187
    %1201 = vmatprep.subr.bf16.mxu0 0
    %1202 = vmatpush1.bf16.msra.mxu0 %v1188
    %1203 = vmatprep.subr.bf16.mxu0 0
    %1204 = vmatpush1.bf16.msra.mxu0 %v1189
    %1205 = vmatprep.subr.bf16.mxu0 0
    %1206 = vmatpush1.bf16.msra.mxu0 0
    %1207 = vmatprep.subr.bf16.mxu0 0
    %1208 = vmatpush1.bf16.msra.mxu0 0
    %1209 = vmatprep.subr.bf16.mxu0 0
    %1210 = vmatpush1.bf16.msra.mxu0 0
    %1211 = vmatprep.subr.bf16.mxu0 0
    %1212 = vmatpush1.bf16.msra.mxu0 0
    %1213 = vmatprep.subr.bf16.mxu0 0
    %1214 = vmatpush1.bf16.msra.mxu0 0
    %1215 = vmatprep.subr.bf16.mxu0 0
    %1216 = vmatpush1.bf16.msra.mxu0 0
    %1217 = vmatprep.subr.bf16.mxu0 0
    %1218 = vmatpush1.bf16.msra.mxu0 0
    %1219 = vmatprep.subr.bf16.mxu0 0
    %1220 = vmatpush1.bf16.msra.mxu0 0
    %1221 = vmatprep.subr.bf16.mxu0 0
    %1222 = vmatpush1.bf16.msra.mxu0 0
    %1223 = vmatprep.subr.bf16.mxu0 0
    %1224 = vmatpush1.bf16.msra.mxu0 0
    %1225 = vmatprep.subr.bf16.mxu0 0
    %1226 = vmatpush1.bf16.msra.mxu0 0
    %1227 = vmatprep.subr.bf16.mxu0 0
    %1228 = vmatpush1.bf16.msra.mxu0 0
    %1229 = vmatprep.mubr.bf16.mxu0 0
    %1230 = vmatmul.mubr.bf16.gmra.mrb[0].mxu0 %v1195
    %v1231 = vpop.f32.mrb[0].mxu0
    %v1232 = vadd.f32 0.0, %v1231
    %v1233 = vpop.f32.mrb[0].mxu0
    %v1234 = vpop.f32.mrb[0].mxu0
    %v1235 = vpop.f32.mrb[0].mxu0
    %1236 = vdwg.mxu0
    %v1237 = vadd.f32 %v1140, %v1232
    %s1238 = sld [smem:[#allocation2 + $0x600]]
    %v1239 = vstv %s1238
    %v1240 = vmul.f32 %v69, %v1239
    %s1241 = sld [smem:[#allocation2 + $0x601]]
    %v1242 = vstv %s1241
    %v1243 = vmul.f32 %v71, %v1242
    %v1244 = vadd.f32 %v1240, %v1243
    %s1245 = sld [smem:[#allocation2 + $0x602]]
    %v1246 = vstv %s1245
    %v1247 = vmul.f32 %v73, %v1246
    %v1248 = vadd.f32 %v1244, %v1247
    %s1249 = sld [smem:[#allocation2 + $0x603]]
    %v1250 = vstv %s1249
    %v1251 = vmul.f32 %v75, %v1250
    %v1252 = vadd.f32 %v1248, %v1251
    %s1253 = sld [smem:[#allocation6 + $0xc]]
    %v1254 = vstv %s1253
    %v1255 = vadd.f32 %v1252, %v1254
    %v1256 = vmax.f32 %v1255, 0.0
    %v1257 = vpack.c.bf16 %v1256, %v1256
    %s1258 = scalar_lea.vmem [#allocation8], 384
    %v1259 = vld [vmem:[%s1258] sm:$0xf]
    %v1260 = vld [vmem:[%s1258 + $0x4] sm:$0xf]
    %v1261 = vld [vmem:[%s1258 + $0x8] sm:$0xf]
    %v1262 = vld [vmem:[%s1258 + $0xc] sm:$0xf]
    %v1263 = vld [vmem:[%s1258 + $0x10] sm:$0xf]
    %v1264 = vld [vmem:[%s1258 + $0x14] sm:$0xf]
    %v1265 = vld [vmem:[%s1258 + $0x18] sm:$0xf]
    %v1266 = vld [vmem:[%s1258 + $0x1c] sm:$0xf]
    %v1275 = vunpack.c.l.b16 %v1259
    %v1276 = vunpack.c.l.b16 %v1260
    %v1277 = vunpack.c.l.b16 %v1261
    %v1278 = vunpack.c.l.b16 %v1262
    %v1279 = vunpack.c.l.b16 %v1263
    %v1280 = vunpack.c.l.b16 %v1264
    %v1281 = vunpack.c.l.b16 %v1265
    %v1282 = vunpack.c.l.b16 %v1266
    %v1283 = vpack.c.b16 %v1276, %v1275
    %v1284 = vpack.c.b16 %v1278, %v1277
    %v1285 = vpack.c.b16 %v1280, %v1279
    %v1286 = vpack.c.b16 %v1282, %v1281
    %v1292 = vsel %vm157, %v1257, 0
    %1294 = vmatprep.subr.bf16.mxu0 0
    %1295 = vmatpush1.bf16.msra.mxu0 %v1283
    %1296 = vmatprep.subr.bf16.mxu0 0
    %1297 = vmatpush1.bf16.msra.mxu0 %v1284
    %1298 = vmatprep.subr.bf16.mxu0 0
    %1299 = vmatpush1.bf16.msra.mxu0 %v1285
    %1300 = vmatprep.subr.bf16.mxu0 0
    %1301 = vmatpush1.bf16.msra.mxu0 %v1286
    %1302 = vmatprep.subr.bf16.mxu0 0
    %1303 = vmatpush1.bf16.msra.mxu0 0
    %1304 = vmatprep.subr.bf16.mxu0 0
    %1305 = vmatpush1.bf16.msra.mxu0 0
    %1306 = vmatprep.subr.bf16.mxu0 0
    %1307 = vmatpush1.bf16.msra.mxu0 0
    %1308 = vmatprep.subr.bf16.mxu0 0
    %1309 = vmatpush1.bf16.msra.mxu0 0
    %1310 = vmatprep.subr.bf16.mxu0 0
    %1311 = vmatpush1.bf16.msra.mxu0 0
    %1312 = vmatprep.subr.bf16.mxu0 0
    %1313 = vmatpush1.bf16.msra.mxu0 0
    %1314 = vmatprep.subr.bf16.mxu0 0
    %1315 = vmatpush1.bf16.msra.mxu0 0
    %1316 = vmatprep.subr.bf16.mxu0 0
    %1317 = vmatpush1.bf16.msra.mxu0 0
    %1318 = vmatprep.subr.bf16.mxu0 0
    %1319 = vmatpush1.bf16.msra.mxu0 0
    %1320 = vmatprep.subr.bf16.mxu0 0
    %1321 = vmatpush1.bf16.msra.mxu0 0
    %1322 = vmatprep.subr.bf16.mxu0 0
    %1323 = vmatpush1.bf16.msra.mxu0 0
    %1324 = vmatprep.subr.bf16.mxu0 0
    %1325 = vmatpush1.bf16.msra.mxu0 0
    %1326 = vmatprep.mubr.bf16.mxu0 0
    %1327 = vmatmul.mubr.bf16.gmra.mrb[0].mxu0 %v1292
    %v1328 = vpop.f32.mrb[0].mxu0
    %v1329 = vadd.f32 0.0, %v1328
    %v1330 = vpop.f32.mrb[0].mxu0
    %v1331 = vpop.f32.mrb[0].mxu0
    %v1332 = vpop.f32.mrb[0].mxu0
    %1333 = vdwg.mxu0
    %v1334 = vadd.f32 %v1237, %v1329
    %s1335 = sld [smem:[#allocation2 + $0x680]]
    %v1336 = vstv %s1335
    %v1337 = vmul.f32 %v69, %v1336
    %s1338 = sld [smem:[#allocation2 + $0x681]]
    %v1339 = vstv %s1338
    %v1340 = vmul.f32 %v71, %v1339
    %v1341 = vadd.f32 %v1337, %v1340
    %s1342 = sld [smem:[#allocation2 + $0x682]]
    %v1343 = vstv %s1342
    %v1344 = vmul.f32 %v73, %v1343
    %v1345 = vadd.f32 %v1341, %v1344
    %s1346 = sld [smem:[#allocation2 + $0x683]]
    %v1347 = vstv %s1346
    %v1348 = vmul.f32 %v75, %v1347
    %v1349 = vadd.f32 %v1345, %v1348
    %s1350 = sld [smem:[#allocation6 + $0xd]]
    %v1351 = vstv %s1350
    %v1352 = vadd.f32 %v1349, %v1351
    %v1353 = vmax.f32 %v1352, 0.0
    %v1354 = vpack.c.bf16 %v1353, %v1353
    %s1355 = scalar_lea.vmem [#allocation8], 416
    %v1356 = vld [vmem:[%s1355] sm:$0xf]
    %v1357 = vld [vmem:[%s1355 + $0x4] sm:$0xf]
    %v1358 = vld [vmem:[%s1355 + $0x8] sm:$0xf]
    %v1359 = vld [vmem:[%s1355 + $0xc] sm:$0xf]
    %v1360 = vld [vmem:[%s1355 + $0x10] sm:$0xf]
    %v1361 = vld [vmem:[%s1355 + $0x14] sm:$0xf]
    %v1362 = vld [vmem:[%s1355 + $0x18] sm:$0xf]
    %v1363 = vld [vmem:[%s1355 + $0x1c] sm:$0xf]
    %v1372 = vunpack.c.l.b16 %v1356
    %v1373 = vunpack.c.l.b16 %v1357
    %v1374 = vunpack.c.l.b16 %v1358
    %v1375 = vunpack.c.l.b16 %v1359
    %v1376 = vunpack.c.l.b16 %v1360
    %v1377 = vunpack.c.l.b16 %v1361
    %v1378 = vunpack.c.l.b16 %v1362
    %v1379 = vunpack.c.l.b16 %v1363
    %v1380 = vpack.c.b16 %v1373, %v1372
    %v1381 = vpack.c.b16 %v1375, %v1374
    %v1382 = vpack.c.b16 %v1377, %v1376
    %v1383 = vpack.c.b16 %v1379, %v1378
    %v1389 = vsel %vm157, %v1354, 0
    %1391 = vmatprep.subr.bf16.mxu0 0
    %1392 = vmatpush1.bf16.msra.mxu0 %v1380
    %1393 = vmatprep.subr.bf16.mxu0 0
    %1394 = vmatpush1.bf16.msra.mxu0 %v1381
    %1395 = vmatprep.subr.bf16.mxu0 0
    %1396 = vmatpush1.bf16.msra.mxu0 %v1382
    %1397 = vmatprep.subr.bf16.mxu0 0
    %1398 = vmatpush1.bf16.msra.mxu0 %v1383
    %1399 = vmatprep.subr.bf16.mxu0 0
    %1400 = vmatpush1.bf16.msra.mxu0 0
    %1401 = vmatprep.subr.bf16.mxu0 0
    %1402 = vmatpush1.bf16.msra.mxu0 0
    %1403 = vmatprep.subr.bf16.mxu0 0
    %1404 = vmatpush1.bf16.msra.mxu0 0
    %1405 = vmatprep.subr.bf16.mxu0 0
    %1406 = vmatpush1.bf16.msra.mxu0 0
    %1407 = vmatprep.subr.bf16.mxu0 0
    %1408 = vmatpush1.bf16.msra.mxu0 0
    %1409 = vmatprep.subr.bf16.mxu0 0
    %1410 = vmatpush1.bf16.msra.mxu0 0
    %1411 = vmatprep.subr.bf16.mxu0 0
    %1412 = vmatpush1.bf16.msra.mxu0 0
    %1413 = vmatprep.subr.bf16.mxu0 0
    %1414 = vmatpush1.bf16.msra.mxu0 0
    %1415 = vmatprep.subr.bf16.mxu0 0
    %1416 = vmatpush1.bf16.msra.mxu0 0
    %1417 = vmatprep.subr.bf16.mxu0 0
    %1418 = vmatpush1.bf16.msra.mxu0 0
    %1419 = vmatprep.subr.bf16.mxu0 0
    %1420 = vmatpush1.bf16.msra.mxu0 0
    %1421 = vmatprep.subr.bf16.mxu0 0
    %1422 = vmatpush1.bf16.msra.mxu0 0
    %1423 = vmatprep.mubr.bf16.mxu0 0
    %1424 = vmatmul.mubr.bf16.gmra.mrb[0].mxu0 %v1389
    %v1425 = vpop.f32.mrb[0].mxu0
    %v1426 = vadd.f32 0.0, %v1425
    %v1427 = vpop.f32.mrb[0].mxu0
    %v1428 = vpop.f32.mrb[0].mxu0
    %v1429 = vpop.f32.mrb[0].mxu0
    %1430 = vdwg.mxu0
    %v1431 = vadd.f32 %v1334, %v1426
    %s1432 = sld [smem:[#allocation2 + $0x700]]
    %v1433 = vstv %s1432
    %v1434 = vmul.f32 %v69, %v1433
    %s1435 = sld [smem:[#allocation2 + $0x701]]
    %v1436 = vstv %s1435
    %v1437 = vmul.f32 %v71, %v1436
    %v1438 = vadd.f32 %v1434, %v1437
    %s1439 = sld [smem:[#allocation2 + $0x702]]
    %v1440 = vstv %s1439
    %v1441 = vmul.f32 %v73, %v1440
    %v1442 = vadd.f32 %v1438, %v1441
    %s1443 = sld [smem:[#allocation2 + $0x703]]
    %v1444 = vstv %s1443
    %v1445 = vmul.f32 %v75, %v1444
    %v1446 = vadd.f32 %v1442, %v1445
    %s1447 = sld [smem:[#allocation6 + $0xe]]
    %v1448 = vstv %s1447
    %v1449 = vadd.f32 %v1446, %v1448
    %v1450 = vmax.f32 %v1449, 0.0
    %v1451 = vpack.c.bf16 %v1450, %v1450
    %s1452 = scalar_lea.vmem [#allocation8], 448
    %v1453 = vld [vmem:[%s1452] sm:$0xf]
    %v1454 = vld [vmem:[%s1452 + $0x4] sm:$0xf]
    %v1455 = vld [vmem:[%s1452 + $0x8] sm:$0xf]
    %v1456 = vld [vmem:[%s1452 + $0xc] sm:$0xf]
    %v1457 = vld [vmem:[%s1452 + $0x10] sm:$0xf]
    %v1458 = vld [vmem:[%s1452 + $0x14] sm:$0xf]
    %v1459 = vld [vmem:[%s1452 + $0x18] sm:$0xf]
    %v1460 = vld [vmem:[%s1452 + $0x1c] sm:$0xf]
    %v1469 = vunpack.c.l.b16 %v1453
    %v1470 = vunpack.c.l.b16 %v1454
    %v1471 = vunpack.c.l.b16 %v1455
    %v1472 = vunpack.c.l.b16 %v1456
    %v1473 = vunpack.c.l.b16 %v1457
    %v1474 = vunpack.c.l.b16 %v1458
    %v1475 = vunpack.c.l.b16 %v1459
    %v1476 = vunpack.c.l.b16 %v1460
    %v1477 = vpack.c.b16 %v1470, %v1469
    %v1478 = vpack.c.b16 %v1472, %v1471
    %v1479 = vpack.c.b16 %v1474, %v1473
    %v1480 = vpack.c.b16 %v1476, %v1475
    %v1486 = vsel %vm157, %v1451, 0
    %1488 = vmatprep.subr.bf16.mxu0 0
    %1489 = vmatpush1.bf16.msra.mxu0 %v1477
    %1490 = vmatprep.subr.bf16.mxu0 0
    %1491 = vmatpush1.bf16.msra.mxu0 %v1478
    %1492 = vmatprep.subr.bf16.mxu0 0
    %1493 = vmatpush1.bf16.msra.mxu0 %v1479
    %1494 = vmatprep.subr.bf16.mxu0 0
    %1495 = vmatpush1.bf16.msra.mxu0 %v1480
    %1496 = vmatprep.subr.bf16.mxu0 0
    %1497 = vmatpush1.bf16.msra.mxu0 0
    %1498 = vmatprep.subr.bf16.mxu0 0
    %1499 = vmatpush1.bf16.msra.mxu0 0
    %1500 = vmatprep.subr.bf16.mxu0 0
    %1501 = vmatpush1.bf16.msra.mxu0 0
    %1502 = vmatprep.subr.bf16.mxu0 0
    %1503 = vmatpush1.bf16.msra.mxu0 0
    %1504 = vmatprep.subr.bf16.mxu0 0
    %1505 = vmatpush1.bf16.msra.mxu0 0
    %1506 = vmatprep.subr.bf16.mxu0 0
    %1507 = vmatpush1.bf16.msra.mxu0 0
    %1508 = vmatprep.subr.bf16.mxu0 0
    %1509 = vmatpush1.bf16.msra.mxu0 0
    %1510 = vmatprep.subr.bf16.mxu0 0
    %1511 = vmatpush1.bf16.msra.mxu0 0
    %1512 = vmatprep.subr.bf16.mxu0 0
    %1513 = vmatpush1.bf16.msra.mxu0 0
    %1514 = vmatprep.subr.bf16.mxu0 0
    %1515 = vmatpush1.bf16.msra.mxu0 0
    %1516 = vmatprep.subr.bf16.mxu0 0
    %1517 = vmatpush1.bf16.msra.mxu0 0
    %1518 = vmatprep.subr.bf16.mxu0 0
    %1519 = vmatpush1.bf16.msra.mxu0 0
    %1520 = vmatprep.mubr.bf16.mxu0 0
    %1521 = vmatmul.mubr.bf16.gmra.mrb[0].mxu0 %v1486
    %v1522 = vpop.f32.mrb[0].mxu0
    %v1523 = vadd.f32 0.0, %v1522
    %v1524 = vpop.f32.mrb[0].mxu0
    %v1525 = vpop.f32.mrb[0].mxu0
    %v1526 = vpop.f32.mrb[0].mxu0
    %1527 = vdwg.mxu0
    %v1528 = vadd.f32 %v1431, %v1523
    %s1529 = sld [smem:[#allocation2 + $0x780]]
    %v1530 = vstv %s1529
    %v1531 = vmul.f32 %v69, %v1530
    %s1532 = sld [smem:[#allocation2 + $0x781]]
    %v1533 = vstv %s1532
    %v1534 = vmul.f32 %v71, %v1533
    %v1535 = vadd.f32 %v1531, %v1534
    %s1536 = sld [smem:[#allocation2 + $0x782]]
    %v1537 = vstv %s1536
    %v1538 = vmul.f32 %v73, %v1537
    %v1539 = vadd.f32 %v1535, %v1538
    %s1540 = sld [smem:[#allocation2 + $0x783]]
    %v1541 = vstv %s1540
    %v1542 = vmul.f32 %v75, %v1541
    %v1543 = vadd.f32 %v1539, %v1542
    %s1544 = sld [smem:[#allocation6 + $0xf]]
    %v1545 = vstv %s1544
    %v1546 = vadd.f32 %v1543, %v1545
    %v1547 = vmax.f32 %v1546, 0.0
    %v1548 = vpack.c.bf16 %v1547, %v1547
    %s1549 = scalar_lea.vmem [#allocation8], 480
    %v1550 = vld [vmem:[%s1549] sm:$0xf]
    %v1551 = vld [vmem:[%s1549 + $0x4] sm:$0xf]
    %v1552 = vld [vmem:[%s1549 + $0x8] sm:$0xf]
    %v1553 = vld [vmem:[%s1549 + $0xc] sm:$0xf]
    %v1554 = vld [vmem:[%s1549 + $0x10] sm:$0xf]
    %v1555 = vld [vmem:[%s1549 + $0x14] sm:$0xf]
    %v1556 = vld [vmem:[%s1549 + $0x18] sm:$0xf]
    %v1557 = vld [vmem:[%s1549 + $0x1c] sm:$0xf]
    %v1566 = vunpack.c.l.b16 %v1550
    %v1567 = vunpack.c.l.b16 %v1551
    %v1568 = vunpack.c.l.b16 %v1552
    %v1569 = vunpack.c.l.b16 %v1553
    %v1570 = vunpack.c.l.b16 %v1554
    %v1571 = vunpack.c.l.b16 %v1555
    %v1572 = vunpack.c.l.b16 %v1556
    %v1573 = vunpack.c.l.b16 %v1557
    %v1574 = vpack.c.b16 %v1567, %v1566
    %v1575 = vpack.c.b16 %v1569, %v1568
    %v1576 = vpack.c.b16 %v1571, %v1570
    %v1577 = vpack.c.b16 %v1573, %v1572
    %v1583 = vsel %vm157, %v1548, 0
    %1585 = vmatprep.subr.bf16.mxu0 0
    %1586 = vmatpush1.bf16.msra.mxu0 %v1574
    %1587 = vmatprep.subr.bf16.mxu0 0
    %1588 = vmatpush1.bf16.msra.mxu0 %v1575
    %1589 = vmatprep.subr.bf16.mxu0 0
    %1590 = vmatpush1.bf16.msra.mxu0 %v1576
    %1591 = vmatprep.subr.bf16.mxu0 0
    %1592 = vmatpush1.bf16.msra.mxu0 %v1577
    %1593 = vmatprep.subr.bf16.mxu0 0
    %1594 = vmatpush1.bf16.msra.mxu0 0
    %1595 = vmatprep.subr.bf16.mxu0 0
    %1596 = vmatpush1.bf16.msra.mxu0 0
    %1597 = vmatprep.subr.bf16.mxu0 0
    %1598 = vmatpush1.bf16.msra.mxu0 0
    %1599 = vmatprep.subr.bf16.mxu0 0
    %1600 = vmatpush1.bf16.msra.mxu0 0
    %1601 = vmatprep.subr.bf16.mxu0 0
    %1602 = vmatpush1.bf16.msra.mxu0 0
    %1603 = vmatprep.subr.bf16.mxu0 0
    %1604 = vmatpush1.bf16.msra.mxu0 0
    %1605 = vmatprep.subr.bf16.mxu0 0
    %1606 = vmatpush1.bf16.msra.mxu0 0
    %1607 = vmatprep.subr.bf16.mxu0 0
    %1608 = vmatpush1.bf16.msra.mxu0 0
    %1609 = vmatprep.subr.bf16.mxu0 0
    %1610 = vmatpush1.bf16.msra.mxu0 0
    %1611 = vmatprep.subr.bf16.mxu0 0
    %1612 = vmatpush1.bf16.msra.mxu0 0
    %1613 = vmatprep.subr.bf16.mxu0 0
    %1614 = vmatpush1.bf16.msra.mxu0 0
    %1615 = vmatprep.subr.bf16.mxu0 0
    %1616 = vmatpush1.bf16.msra.mxu0 0
    %1617 = vmatprep.mubr.bf16.mxu0 0
    %1618 = vmatmul.mubr.bf16.gmra.mrb[0].mxu0 %v1583
    %v1619 = vpop.f32.mrb[0].mxu0
    %v1620 = vadd.f32 0.0, %v1619
    %v1621 = vpop.f32.mrb[0].mxu0
    %v1622 = vpop.f32.mrb[0].mxu0
    %v1623 = vpop.f32.mrb[0].mxu0
    %1624 = vdwg.mxu0
    %v1625 = vadd.f32 %v1528, %v1620
    %s1626 = sld [smem:[#allocation2 + $0x800]]
    %v1627 = vstv %s1626
    %v1628 = vmul.f32 %v69, %v1627
    %s1629 = sld [smem:[#allocation2 + $0x801]]
    %v1630 = vstv %s1629
    %v1631 = vmul.f32 %v71, %v1630
    %v1632 = vadd.f32 %v1628, %v1631
    %s1633 = sld [smem:[#allocation2 + $0x802]]
    %v1634 = vstv %s1633
    %v1635 = vmul.f32 %v73, %v1634
    %v1636 = vadd.f32 %v1632, %v1635
    %s1637 = sld [smem:[#allocation2 + $0x803]]
    %v1638 = vstv %s1637
    %v1639 = vmul.f32 %v75, %v1638
    %v1640 = vadd.f32 %v1636, %v1639
    %s1641 = sld [smem:[#allocation6 + $0x10]]
    %v1642 = vstv %s1641
    %v1643 = vadd.f32 %v1640, %v1642
    %v1644 = vmax.f32 %v1643, 0.0
    %v1645 = vpack.c.bf16 %v1644, %v1644
    %s1646 = scalar_lea.vmem [#allocation8], 512
    %v1647 = vld [vmem:[%s1646] sm:$0xf]
    %v1648 = vld [vmem:[%s1646 + $0x4] sm:$0xf]
    %v1649 = vld [vmem:[%s1646 + $0x8] sm:$0xf]
    %v1650 = vld [vmem:[%s1646 + $0xc] sm:$0xf]
    %v1651 = vld [vmem:[%s1646 + $0x10] sm:$0xf]
    %v1652 = vld [vmem:[%s1646 + $0x14] sm:$0xf]
    %v1653 = vld [vmem:[%s1646 + $0x18] sm:$0xf]
    %v1654 = vld [vmem:[%s1646 + $0x1c] sm:$0xf]
    %v1663 = vunpack.c.l.b16 %v1647
    %v1664 = vunpack.c.l.b16 %v1648
    %v1665 = vunpack.c.l.b16 %v1649
    %v1666 = vunpack.c.l.b16 %v1650
    %v1667 = vunpack.c.l.b16 %v1651
    %v1668 = vunpack.c.l.b16 %v1652
    %v1669 = vunpack.c.l.b16 %v1653
    %v1670 = vunpack.c.l.b16 %v1654
    %v1671 = vpack.c.b16 %v1664, %v1663
    %v1672 = vpack.c.b16 %v1666, %v1665
    %v1673 = vpack.c.b16 %v1668, %v1667
    %v1674 = vpack.c.b16 %v1670, %v1669
    %v1680 = vsel %vm157, %v1645, 0
    %1682 = vmatprep.subr.bf16.mxu0 0
    %1683 = vmatpush1.bf16.msra.mxu0 %v1671
    %1684 = vmatprep.subr.bf16.mxu0 0
    %1685 = vmatpush1.bf16.msra.mxu0 %v1672
    %1686 = vmatprep.subr.bf16.mxu0 0
    %1687 = vmatpush1.bf16.msra.mxu0 %v1673
    %1688 = vmatprep.subr.bf16.mxu0 0
    %1689 = vmatpush1.bf16.msra.mxu0 %v1674
    %1690 = vmatprep.subr.bf16.mxu0 0
    %1691 = vmatpush1.bf16.msra.mxu0 0
    %1692 = vmatprep.subr.bf16.mxu0 0
    %1693 = vmatpush1.bf16.msra.mxu0 0
    %1694 = vmatprep.subr.bf16.mxu0 0
    %1695 = vmatpush1.bf16.msra.mxu0 0
    %1696 = vmatprep.subr.bf16.mxu0 0
    %1697 = vmatpush1.bf16.msra.mxu0 0
    %1698 = vmatprep.subr.bf16.mxu0 0
    %1699 = vmatpush1.bf16.msra.mxu0 0
    %1700 = vmatprep.subr.bf16.mxu0 0
    %1701 = vmatpush1.bf16.msra.mxu0 0
    %1702 = vmatprep.subr.bf16.mxu0 0
    %1703 = vmatpush1.bf16.msra.mxu0 0
    %1704 = vmatprep.subr.bf16.mxu0 0
    %1705 = vmatpush1.bf16.msra.mxu0 0
    %1706 = vmatprep.subr.bf16.mxu0 0
    %1707 = vmatpush1.bf16.msra.mxu0 0
    %1708 = vmatprep.subr.bf16.mxu0 0
    %1709 = vmatpush1.bf16.msra.mxu0 0
    %1710 = vmatprep.subr.bf16.mxu0 0
    %1711 = vmatpush1.bf16.msra.mxu0 0
    %1712 = vmatprep.subr.bf16.mxu0 0
    %1713 = vmatpush1.bf16.msra.mxu0 0
    %1714 = vmatprep.mubr.bf16.mxu0 0
    %1715 = vmatmul.mubr.bf16.gmra.mrb[0].mxu0 %v1680
    %v1716 = vpop.f32.mrb[0].mxu0
    %v1717 = vadd.f32 0.0, %v1716
    %v1718 = vpop.f32.mrb[0].mxu0
    %v1719 = vpop.f32.mrb[0].mxu0
    %v1720 = vpop.f32.mrb[0].mxu0
    %1721 = vdwg.mxu0
    %v1722 = vadd.f32 %v1625, %v1717
    %s1723 = sld [smem:[#allocation2 + $0x880]]
    %v1724 = vstv %s1723
    %v1725 = vmul.f32 %v69, %v1724
    %s1726 = sld [smem:[#allocation2 + $0x881]]
    %v1727 = vstv %s1726
    %v1728 = vmul.f32 %v71, %v1727
    %v1729 = vadd.f32 %v1725, %v1728
    %s1730 = sld [smem:[#allocation2 + $0x882]]
    %v1731 = vstv %s1730
    %v1732 = vmul.f32 %v73, %v1731
    %v1733 = vadd.f32 %v1729, %v1732
    %s1734 = sld [smem:[#allocation2 + $0x883]]
    %v1735 = vstv %s1734
    %v1736 = vmul.f32 %v75, %v1735
    %v1737 = vadd.f32 %v1733, %v1736
    %s1738 = sld [smem:[#allocation6 + $0x11]]
    %v1739 = vstv %s1738
    %v1740 = vadd.f32 %v1737, %v1739
    %v1741 = vmax.f32 %v1740, 0.0
    %v1742 = vpack.c.bf16 %v1741, %v1741
    %s1743 = scalar_lea.vmem [#allocation8], 544
    %v1744 = vld [vmem:[%s1743] sm:$0xf]
    %v1745 = vld [vmem:[%s1743 + $0x4] sm:$0xf]
    %v1746 = vld [vmem:[%s1743 + $0x8] sm:$0xf]
    %v1747 = vld [vmem:[%s1743 + $0xc] sm:$0xf]
    %v1748 = vld [vmem:[%s1743 + $0x10] sm:$0xf]
    %v1749 = vld [vmem:[%s1743 + $0x14] sm:$0xf]
    %v1750 = vld [vmem:[%s1743 + $0x18] sm:$0xf]
    %v1751 = vld [vmem:[%s1743 + $0x1c] sm:$0xf]
    %v1760 = vunpack.c.l.b16 %v1744
    %v1761 = vunpack.c.l.b16 %v1745
    %v1762 = vunpack.c.l.b16 %v1746
    %v1763 = vunpack.c.l.b16 %v1747
    %v1764 = vunpack.c.l.b16 %v1748
    %v1765 = vunpack.c.l.b16 %v1749
    %v1766 = vunpack.c.l.b16 %v1750
    %v1767 = vunpack.c.l.b16 %v1751
    %v1768 = vpack.c.b16 %v1761, %v1760
    %v1769 = vpack.c.b16 %v1763, %v1762
    %v1770 = vpack.c.b16 %v1765, %v1764
    %v1771 = vpack.c.b16 %v1767, %v1766
    %v1777 = vsel %vm157, %v1742, 0
    %1779 = vmatprep.subr.bf16.mxu0 0
    %1780 = vmatpush1.bf16.msra.mxu0 %v1768
    %1781 = vmatprep.subr.bf16.mxu0 0
    %1782 = vmatpush1.bf16.msra.mxu0 %v1769
    %1783 = vmatprep.subr.bf16.mxu0 0
    %1784 = vmatpush1.bf16.msra.mxu0 %v1770
    %1785 = vmatprep.subr.bf16.mxu0 0
    %1786 = vmatpush1.bf16.msra.mxu0 %v1771
    %1787 = vmatprep.subr.bf16.mxu0 0
    %1788 = vmatpush1.bf16.msra.mxu0 0
    %1789 = vmatprep.subr.bf16.mxu0 0
    %1790 = vmatpush1.bf16.msra.mxu0 0
    %1791 = vmatprep.subr.bf16.mxu0 0
    %1792 = vmatpush1.bf16.msra.mxu0 0
    %1793 = vmatprep.subr.bf16.mxu0 0
    %1794 = vmatpush1.bf16.msra.mxu0 0
    %1795 = vmatprep.subr.bf16.mxu0 0
    %1796 = vmatpush1.bf16.msra.mxu0 0
    %1797 = vmatprep.subr.bf16.mxu0 0
    %1798 = vmatpush1.bf16.msra.mxu0 0
    %1799 = vmatprep.subr.bf16.mxu0 0
    %1800 = vmatpush1.bf16.msra.mxu0 0
    %1801 = vmatprep.subr.bf16.mxu0 0
    %1802 = vmatpush1.bf16.msra.mxu0 0
    %1803 = vmatprep.subr.bf16.mxu0 0
    %1804 = vmatpush1.bf16.msra.mxu0 0
    %1805 = vmatprep.subr.bf16.mxu0 0
    %1806 = vmatpush1.bf16.msra.mxu0 0
    %1807 = vmatprep.subr.bf16.mxu0 0
    %1808 = vmatpush1.bf16.msra.mxu0 0
    %1809 = vmatprep.subr.bf16.mxu0 0
    %1810 = vmatpush1.bf16.msra.mxu0 0
    %1811 = vmatprep.mubr.bf16.mxu0 0
    %1812 = vmatmul.mubr.bf16.gmra.mrb[0].mxu0 %v1777
    %v1813 = vpop.f32.mrb[0].mxu0
    %v1814 = vadd.f32 0.0, %v1813
    %v1815 = vpop.f32.mrb[0].mxu0
    %v1816 = vpop.f32.mrb[0].mxu0
    %v1817 = vpop.f32.mrb[0].mxu0
    %1818 = vdwg.mxu0
    %v1819 = vadd.f32 %v1722, %v1814
    %s1820 = sld [smem:[#allocation2 + $0x900]]
    %v1821 = vstv %s1820
    %v1822 = vmul.f32 %v69, %v1821
    %s1823 = sld [smem:[#allocation2 + $0x901]]
    %v1824 = vstv %s1823
    %v1825 = vmul.f32 %v71, %v1824
    %v1826 = vadd.f32 %v1822, %v1825
    %s1827 = sld [smem:[#allocation2 + $0x902]]
    %v1828 = vstv %s1827
    %v1829 = vmul.f32 %v73, %v1828
    %v1830 = vadd.f32 %v1826, %v1829
    %s1831 = sld [smem:[#allocation2 + $0x903]]
    %v1832 = vstv %s1831
    %v1833 = vmul.f32 %v75, %v1832
    %v1834 = vadd.f32 %v1830, %v1833
    %s1835 = sld [smem:[#allocation6 + $0x12]]
    %v1836 = vstv %s1835
    %v1837 = vadd.f32 %v1834, %v1836
    %v1838 = vmax.f32 %v1837, 0.0
    %v1839 = vpack.c.bf16 %v1838, %v1838
    %s1840 = scalar_lea.vmem [#allocation8], 576
    %v1841 = vld [vmem:[%s1840] sm:$0xf]
    %v1842 = vld [vmem:[%s1840 + $0x4] sm:$0xf]
    %v1843 = vld [vmem:[%s1840 + $0x8] sm:$0xf]
    %v1844 = vld [vmem:[%s1840 + $0xc] sm:$0xf]
    %v1845 = vld [vmem:[%s1840 + $0x10] sm:$0xf]
    %v1846 = vld [vmem:[%s1840 + $0x14] sm:$0xf]
    %v1847 = vld [vmem:[%s1840 + $0x18] sm:$0xf]
    %v1848 = vld [vmem:[%s1840 + $0x1c] sm:$0xf]
    %v1857 = vunpack.c.l.b16 %v1841
    %v1858 = vunpack.c.l.b16 %v1842
    %v1859 = vunpack.c.l.b16 %v1843
    %v1860 = vunpack.c.l.b16 %v1844
    %v1861 = vunpack.c.l.b16 %v1845
    %v1862 = vunpack.c.l.b16 %v1846
    %v1863 = vunpack.c.l.b16 %v1847
    %v1864 = vunpack.c.l.b16 %v1848
    %v1865 = vpack.c.b16 %v1858, %v1857
    %v1866 = vpack.c.b16 %v1860, %v1859
    %v1867 = vpack.c.b16 %v1862, %v1861
    %v1868 = vpack.c.b16 %v1864, %v1863
    %v1874 = vsel %vm157, %v1839, 0
    %1876 = vmatprep.subr.bf16.mxu0 0
    %1877 = vmatpush1.bf16.msra.mxu0 %v1865
    %1878 = vmatprep.subr.bf16.mxu0 0
    %1879 = vmatpush1.bf16.msra.mxu0 %v1866
    %1880 = vmatprep.subr.bf16.mxu0 0
    %1881 = vmatpush1.bf16.msra.mxu0 %v1867
    %1882 = vmatprep.subr.bf16.mxu0 0
    %1883 = vmatpush1.bf16.msra.mxu0 %v1868
    %1884 = vmatprep.subr.bf16.mxu0 0
    %1885 = vmatpush1.bf16.msra.mxu0 0
    %1886 = vmatprep.subr.bf16.mxu0 0
    %1887 = vmatpush1.bf16.msra.mxu0 0
    %1888 = vmatprep.subr.bf16.mxu0 0
    %1889 = vmatpush1.bf16.msra.mxu0 0
    %1890 = vmatprep.subr.bf16.mxu0 0
    %1891 = vmatpush1.bf16.msra.mxu0 0
    %1892 = vmatprep.subr.bf16.mxu0 0
    %1893 = vmatpush1.bf16.msra.mxu0 0
    %1894 = vmatprep.subr.bf16.mxu0 0
    %1895 = vmatpush1.bf16.msra.mxu0 0
    %1896 = vmatprep.subr.bf16.mxu0 0
    %1897 = vmatpush1.bf16.msra.mxu0 0
    %1898 = vmatprep.subr.bf16.mxu0 0
    %1899 = vmatpush1.bf16.msra.mxu0 0
    %1900 = vmatprep.subr.bf16.mxu0 0
    %1901 = vmatpush1.bf16.msra.mxu0 0
    %1902 = vmatprep.subr.bf16.mxu0 0
    %1903 = vmatpush1.bf16.msra.mxu0 0
    %1904 = vmatprep.subr.bf16.mxu0 0
    %1905 = vmatpush1.bf16.msra.mxu0 0
    %1906 = vmatprep.subr.bf16.mxu0 0
    %1907 = vmatpush1.bf16.msra.mxu0 0
    %1908 = vmatprep.mubr.bf16.mxu0 0
    %1909 = vmatmul.mubr.bf16.gmra.mrb[0].mxu0 %v1874
    %v1910 = vpop.f32.mrb[0].mxu0
    %v1911 = vadd.f32 0.0, %v1910
    %v1912 = vpop.f32.mrb[0].mxu0
    %v1913 = vpop.f32.mrb[0].mxu0
    %v1914 = vpop.f32.mrb[0].mxu0
    %1915 = vdwg.mxu0
    %v1916 = vadd.f32 %v1819, %v1911
    %s1917 = sld [smem:[#allocation2 + $0x980]]
    %v1918 = vstv %s1917
    %v1919 = vmul.f32 %v69, %v1918
    %s1920 = sld [smem:[#allocation2 + $0x981]]
    %v1921 = vstv %s1920
    %v1922 = vmul.f32 %v71, %v1921
    %v1923 = vadd.f32 %v1919, %v1922
    %s1924 = sld [smem:[#allocation2 + $0x982]]
    %v1925 = vstv %s1924
    %v1926 = vmul.f32 %v73, %v1925
    %v1927 = vadd.f32 %v1923, %v1926
    %s1928 = sld [smem:[#allocation2 + $0x983]]
    %v1929 = vstv %s1928
    %v1930 = vmul.f32 %v75, %v1929
    %v1931 = vadd.f32 %v1927, %v1930
    %s1932 = sld [smem:[#allocation6 + $0x13]]
    %v1933 = vstv %s1932
    %v1934 = vadd.f32 %v1931, %v1933
    %v1935 = vmax.f32 %v1934, 0.0
    %v1936 = vpack.c.bf16 %v1935, %v1935
    %s1937 = scalar_lea.vmem [#allocation8], 608
    %v1938 = vld [vmem:[%s1937] sm:$0xf]
    %v1939 = vld [vmem:[%s1937 + $0x4] sm:$0xf]
    %v1940 = vld [vmem:[%s1937 + $0x8] sm:$0xf]
    %v1941 = vld [vmem:[%s1937 + $0xc] sm:$0xf]
    %v1942 = vld [vmem:[%s1937 + $0x10] sm:$0xf]
    %v1943 = vld [vmem:[%s1937 + $0x14] sm:$0xf]
    %v1944 = vld [vmem:[%s1937 + $0x18] sm:$0xf]
    %v1945 = vld [vmem:[%s1937 + $0x1c] sm:$0xf]
    %v1954 = vunpack.c.l.b16 %v1938
    %v1955 = vunpack.c.l.b16 %v1939
    %v1956 = vunpack.c.l.b16 %v1940
    %v1957 = vunpack.c.l.b16 %v1941
    %v1958 = vunpack.c.l.b16 %v1942
    %v1959 = vunpack.c.l.b16 %v1943
    %v1960 = vunpack.c.l.b16 %v1944
    %v1961 = vunpack.c.l.b16 %v1945
    %v1962 = vpack.c.b16 %v1955, %v1954
    %v1963 = vpack.c.b16 %v1957, %v1956
    %v1964 = vpack.c.b16 %v1959, %v1958
    %v1965 = vpack.c.b16 %v1961, %v1960
    %v1971 = vsel %vm157, %v1936, 0
    %1973 = vmatprep.subr.bf16.mxu0 0
    %1974 = vmatpush1.bf16.msra.mxu0 %v1962
    %1975 = vmatprep.subr.bf16.mxu0 0
    %1976 = vmatpush1.bf16.msra.mxu0 %v1963
    %1977 = vmatprep.subr.bf16.mxu0 0
    %1978 = vmatpush1.bf16.msra.mxu0 %v1964
    %1979 = vmatprep.subr.bf16.mxu0 0
    %1980 = vmatpush1.bf16.msra.mxu0 %v1965
    %1981 = vmatprep.subr.bf16.mxu0 0
    %1982 = vmatpush1.bf16.msra.mxu0 0
    %1983 = vmatprep.subr.bf16.mxu0 0
    %1984 = vmatpush1.bf16.msra.mxu0 0
    %1985 = vmatprep.subr.bf16.mxu0 0
    %1986 = vmatpush1.bf16.msra.mxu0 0
    %1987 = vmatprep.subr.bf16.mxu0 0
    %1988 = vmatpush1.bf16.msra.mxu0 0
    %1989 = vmatprep.subr.bf16.mxu0 0
    %1990 = vmatpush1.bf16.msra.mxu0 0
    %1991 = vmatprep.subr.bf16.mxu0 0
    %1992 = vmatpush1.bf16.msra.mxu0 0
    %1993 = vmatprep.subr.bf16.mxu0 0
    %1994 = vmatpush1.bf16.msra.mxu0 0
    %1995 = vmatprep.subr.bf16.mxu0 0
    %1996 = vmatpush1.bf16.msra.mxu0 0
    %1997 = vmatprep.subr.bf16.mxu0 0
    %1998 = vmatpush1.bf16.msra.mxu0 0
    %1999 = vmatprep.subr.bf16.mxu0 0
    %2000 = vmatpush1.bf16.msra.mxu0 0
    %2001 = vmatprep.subr.bf16.mxu0 0
    %2002 = vmatpush1.bf16.msra.mxu0 0
    %2003 = vmatprep.subr.bf16.mxu0 0
    %2004 = vmatpush1.bf16.msra.mxu0 0
    %2005 = vmatprep.mubr.bf16.mxu0 0
    %2006 = vmatmul.mubr.bf16.gmra.mrb[0].mxu0 %v1971
    %v2007 = vpop.f32.mrb[0].mxu0
    %v2008 = vadd.f32 0.0, %v2007
    %v2009 = vpop.f32.mrb[0].mxu0
    %v2010 = vpop.f32.mrb[0].mxu0
    %v2011 = vpop.f32.mrb[0].mxu0
    %2012 = vdwg.mxu0
    %v2013 = vadd.f32 %v1916, %v2008
    %s2014 = sld [smem:[#allocation2 + $0xa00]]
    %v2015 = vstv %s2014
    %v2016 = vmul.f32 %v69, %v2015
    %s2017 = sld [smem:[#allocation2 + $0xa01]]
    %v2018 = vstv %s2017
    %v2019 = vmul.f32 %v71, %v2018
    %v2020 = vadd.f32 %v2016, %v2019
    %s2021 = sld [smem:[#allocation2 + $0xa02]]
    %v2022 = vstv %s2021
    %v2023 = vmul.f32 %v73, %v2022
    %v2024 = vadd.f32 %v2020, %v2023
    %s2025 = sld [smem:[#allocation2 + $0xa03]]
    %v2026 = vstv %s2025
    %v2027 = vmul.f32 %v75, %v2026
    %v2028 = vadd.f32 %v2024, %v2027
    %s2029 = sld [smem:[#allocation6 + $0x14]]
    %v2030 = vstv %s2029
    %v2031 = vadd.f32 %v2028, %v2030
    %v2032 = vmax.f32 %v2031, 0.0
    %v2033 = vpack.c.bf16 %v2032, %v2032
    %s2034 = scalar_lea.vmem [#allocation8], 640
    %v2035 = vld [vmem:[%s2034] sm:$0xf]
    %v2036 = vld [vmem:[%s2034 + $0x4] sm:$0xf]
    %v2037 = vld [vmem:[%s2034 + $0x8] sm:$0xf]
    %v2038 = vld [vmem:[%s2034 + $0xc] sm:$0xf]
    %v2039 = vld [vmem:[%s2034 + $0x10] sm:$0xf]
    %v2040 = vld [vmem:[%s2034 + $0x14] sm:$0xf]
    %v2041 = vld [vmem:[%s2034 + $0x18] sm:$0xf]
    %v2042 = vld [vmem:[%s2034 + $0x1c] sm:$0xf]
    %v2051 = vunpack.c.l.b16 %v2035
    %v2052 = vunpack.c.l.b16 %v2036
    %v2053 = vunpack.c.l.b16 %v2037
    %v2054 = vunpack.c.l.b16 %v2038
    %v2055 = vunpack.c.l.b16 %v2039
    %v2056 = vunpack.c.l.b16 %v2040
    %v2057 = vunpack.c.l.b16 %v2041
    %v2058 = vunpack.c.l.b16 %v2042
    %v2059 = vpack.c.b16 %v2052, %v2051
    %v2060 = vpack.c.b16 %v2054, %v2053
    %v2061 = vpack.c.b16 %v2056, %v2055
    %v2062 = vpack.c.b16 %v2058, %v2057
    %v2068 = vsel %vm157, %v2033, 0
    %2070 = vmatprep.subr.bf16.mxu0 0
    %2071 = vmatpush1.bf16.msra.mxu0 %v2059
    %2072 = vmatprep.subr.bf16.mxu0 0
    %2073 = vmatpush1.bf16.msra.mxu0 %v2060
    %2074 = vmatprep.subr.bf16.mxu0 0
    %2075 = vmatpush1.bf16.msra.mxu0 %v2061
    %2076 = vmatprep.subr.bf16.mxu0 0
    %2077 = vmatpush1.bf16.msra.mxu0 %v2062
    %2078 = vmatprep.subr.bf16.mxu0 0
    %2079 = vmatpush1.bf16.msra.mxu0 0
    %2080 = vmatprep.subr.bf16.mxu0 0
    %2081 = vmatpush1.bf16.msra.mxu0 0
    %2082 = vmatprep.subr.bf16.mxu0 0
    %2083 = vmatpush1.bf16.msra.mxu0 0
    %2084 = vmatprep.subr.bf16.mxu0 0
    %2085 = vmatpush1.bf16.msra.mxu0 0
    %2086 = vmatprep.subr.bf16.mxu0 0
    %2087 = vmatpush1.bf16.msra.mxu0 0
    %2088 = vmatprep.subr.bf16.mxu0 0
    %2089 = vmatpush1.bf16.msra.mxu0 0
    %2090 = vmatprep.subr.bf16.mxu0 0
    %2091 = vmatpush1.bf16.msra.mxu0 0
    %2092 = vmatprep.subr.bf16.mxu0 0
    %2093 = vmatpush1.bf16.msra.mxu0 0
    %2094 = vmatprep.subr.bf16.mxu0 0
    %2095 = vmatpush1.bf16.msra.mxu0 0
    %2096 = vmatprep.subr.bf16.mxu0 0
    %2097 = vmatpush1.bf16.msra.mxu0 0
    %2098 = vmatprep.subr.bf16.mxu0 0
    %2099 = vmatpush1.bf16.msra.mxu0 0
    %2100 = vmatprep.subr.bf16.mxu0 0
    %2101 = vmatpush1.bf16.msra.mxu0 0
    %2102 = vmatprep.mubr.bf16.mxu0 0
    %2103 = vmatmul.mubr.bf16.gmra.mrb[0].mxu0 %v2068
    %v2104 = vpop.f32.mrb[0].mxu0
    %v2105 = vadd.f32 0.0, %v2104
    %v2106 = vpop.f32.mrb[0].mxu0
    %v2107 = vpop.f32.mrb[0].mxu0
    %v2108 = vpop.f32.mrb[0].mxu0
    %2109 = vdwg.mxu0
    %v2110 = vadd.f32 %v2013, %v2105
    %s2111 = sld [smem:[#allocation2 + $0xa80]]
    %v2112 = vstv %s2111
    %v2113 = vmul.f32 %v69, %v2112
    %s2114 = sld [smem:[#allocation2 + $0xa81]]
    %v2115 = vstv %s2114
    %v2116 = vmul.f32 %v71, %v2115
    %v2117 = vadd.f32 %v2113, %v2116
    %s2118 = sld [smem:[#allocation2 + $0xa82]]
    %v2119 = vstv %s2118
    %v2120 = vmul.f32 %v73, %v2119
    %v2121 = vadd.f32 %v2117, %v2120
    %s2122 = sld [smem:[#allocation2 + $0xa83]]
    %v2123 = vstv %s2122
    %v2124 = vmul.f32 %v75, %v2123
    %v2125 = vadd.f32 %v2121, %v2124
    %s2126 = sld [smem:[#allocation6 + $0x15]]
    %v2127 = vstv %s2126
    %v2128 = vadd.f32 %v2125, %v2127
    %v2129 = vmax.f32 %v2128, 0.0
    %v2130 = vpack.c.bf16 %v2129, %v2129
    %s2131 = scalar_lea.vmem [#allocation8], 672
    %v2132 = vld [vmem:[%s2131] sm:$0xf]
    %v2133 = vld [vmem:[%s2131 + $0x4] sm:$0xf]
    %v2134 = vld [vmem:[%s2131 + $0x8] sm:$0xf]
    %v2135 = vld [vmem:[%s2131 + $0xc] sm:$0xf]
    %v2136 = vld [vmem:[%s2131 + $0x10] sm:$0xf]
    %v2137 = vld [vmem:[%s2131 + $0x14] sm:$0xf]
    %v2138 = vld [vmem:[%s2131 + $0x18] sm:$0xf]
    %v2139 = vld [vmem:[%s2131 + $0x1c] sm:$0xf]
    %v2148 = vunpack.c.l.b16 %v2132
    %v2149 = vunpack.c.l.b16 %v2133
    %v2150 = vunpack.c.l.b16 %v2134
    %v2151 = vunpack.c.l.b16 %v2135
    %v2152 = vunpack.c.l.b16 %v2136
    %v2153 = vunpack.c.l.b16 %v2137
    %v2154 = vunpack.c.l.b16 %v2138
    %v2155 = vunpack.c.l.b16 %v2139
    %v2156 = vpack.c.b16 %v2149, %v2148
    %v2157 = vpack.c.b16 %v2151, %v2150
    %v2158 = vpack.c.b16 %v2153, %v2152
    %v2159 = vpack.c.b16 %v2155, %v2154
    %v2165 = vsel %vm157, %v2130, 0
    %2167 = vmatprep.subr.bf16.mxu0 0
    %2168 = vmatpush1.bf16.msra.mxu0 %v2156
    %2169 = vmatprep.subr.bf16.mxu0 0
    %2170 = vmatpush1.bf16.msra.mxu0 %v2157
    %2171 = vmatprep.subr.bf16.mxu0 0
    %2172 = vmatpush1.bf16.msra.mxu0 %v2158
    %2173 = vmatprep.subr.bf16.mxu0 0
    %2174 = vmatpush1.bf16.msra.mxu0 %v2159
    %2175 = vmatprep.subr.bf16.mxu0 0
    %2176 = vmatpush1.bf16.msra.mxu0 0
    %2177 = vmatprep.subr.bf16.mxu0 0
    %2178 = vmatpush1.bf16.msra.mxu0 0
    %2179 = vmatprep.subr.bf16.mxu0 0
    %2180 = vmatpush1.bf16.msra.mxu0 0
    %2181 = vmatprep.subr.bf16.mxu0 0
    %2182 = vmatpush1.bf16.msra.mxu0 0
    %2183 = vmatprep.subr.bf16.mxu0 0
    %2184 = vmatpush1.bf16.msra.mxu0 0
    %2185 = vmatprep.subr.bf16.mxu0 0
    %2186 = vmatpush1.bf16.msra.mxu0 0
    %2187 = vmatprep.subr.bf16.mxu0 0
    %2188 = vmatpush1.bf16.msra.mxu0 0
    %2189 = vmatprep.subr.bf16.mxu0 0
    %2190 = vmatpush1.bf16.msra.mxu0 0
    %2191 = vmatprep.subr.bf16.mxu0 0
    %2192 = vmatpush1.bf16.msra.mxu0 0
    %2193 = vmatprep.subr.bf16.mxu0 0
    %2194 = vmatpush1.bf16.msra.mxu0 0
    %2195 = vmatprep.subr.bf16.mxu0 0
    %2196 = vmatpush1.bf16.msra.mxu0 0
    %2197 = vmatprep.subr.bf16.mxu0 0
    %2198 = vmatpush1.bf16.msra.mxu0 0
    %2199 = vmatprep.mubr.bf16.mxu0 0
    %2200 = vmatmul.mubr.bf16.gmra.mrb[0].mxu0 %v2165
    %v2201 = vpop.f32.mrb[0].mxu0
    %v2202 = vadd.f32 0.0, %v2201
    %v2203 = vpop.f32.mrb[0].mxu0
    %v2204 = vpop.f32.mrb[0].mxu0
    %v2205 = vpop.f32.mrb[0].mxu0
    %2206 = vdwg.mxu0
    %v2207 = vadd.f32 %v2110, %v2202
    %s2208 = sld [smem:[#allocation2 + $0xb00]]
    %v2209 = vstv %s2208
    %v2210 = vmul.f32 %v69, %v2209
    %s2211 = sld [smem:[#allocation2 + $0xb01]]
    %v2212 = vstv %s2211
    %v2213 = vmul.f32 %v71, %v2212
    %v2214 = vadd.f32 %v2210, %v2213
    %s2215 = sld [smem:[#allocation2 + $0xb02]]
    %v2216 = vstv %s2215
    %v2217 = vmul.f32 %v73, %v2216
    %v2218 = vadd.f32 %v2214, %v2217
    %s2219 = sld [smem:[#allocation2 + $0xb03]]
    %v2220 = vstv %s2219
    %v2221 = vmul.f32 %v75, %v2220
    %v2222 = vadd.f32 %v2218, %v2221
    %s2223 = sld [smem:[#allocation6 + $0x16]]
    %v2224 = vstv %s2223
    %v2225 = vadd.f32 %v2222, %v2224
    %v2226 = vmax.f32 %v2225, 0.0
    %v2227 = vpack.c.bf16 %v2226, %v2226
    %s2228 = scalar_lea.vmem [#allocation8], 704
    %v2229 = vld [vmem:[%s2228] sm:$0xf]
    %v2230 = vld [vmem:[%s2228 + $0x4] sm:$0xf]
    %v2231 = vld [vmem:[%s2228 + $0x8] sm:$0xf]
    %v2232 = vld [vmem:[%s2228 + $0xc] sm:$0xf]
    %v2233 = vld [vmem:[%s2228 + $0x10] sm:$0xf]
    %v2234 = vld [vmem:[%s2228 + $0x14] sm:$0xf]
    %v2235 = vld [vmem:[%s2228 + $0x18] sm:$0xf]
    %v2236 = vld [vmem:[%s2228 + $0x1c] sm:$0xf]
    %v2245 = vunpack.c.l.b16 %v2229
    %v2246 = vunpack.c.l.b16 %v2230
    %v2247 = vunpack.c.l.b16 %v2231
    %v2248 = vunpack.c.l.b16 %v2232
    %v2249 = vunpack.c.l.b16 %v2233
    %v2250 = vunpack.c.l.b16 %v2234
    %v2251 = vunpack.c.l.b16 %v2235
    %v2252 = vunpack.c.l.b16 %v2236
    %v2253 = vpack.c.b16 %v2246, %v2245
    %v2254 = vpack.c.b16 %v2248, %v2247
    %v2255 = vpack.c.b16 %v2250, %v2249
    %v2256 = vpack.c.b16 %v2252, %v2251
    %v2262 = vsel %vm157, %v2227, 0
    %2264 = vmatprep.subr.bf16.mxu0 0
    %2265 = vmatpush1.bf16.msra.mxu0 %v2253
    %2266 = vmatprep.subr.bf16.mxu0 0
    %2267 = vmatpush1.bf16.msra.mxu0 %v2254
    %2268 = vmatprep.subr.bf16.mxu0 0
    %2269 = vmatpush1.bf16.msra.mxu0 %v2255
    %2270 = vmatprep.subr.bf16.mxu0 0
    %2271 = vmatpush1.bf16.msra.mxu0 %v2256
    %2272 = vmatprep.subr.bf16.mxu0 0
    %2273 = vmatpush1.bf16.msra.mxu0 0
    %2274 = vmatprep.subr.bf16.mxu0 0
    %2275 = vmatpush1.bf16.msra.mxu0 0
    %2276 = vmatprep.subr.bf16.mxu0 0
    %2277 = vmatpush1.bf16.msra.mxu0 0
    %2278 = vmatprep.subr.bf16.mxu0 0
    %2279 = vmatpush1.bf16.msra.mxu0 0
    %2280 = vmatprep.subr.bf16.mxu0 0
    %2281 = vmatpush1.bf16.msra.mxu0 0
    %2282 = vmatprep.subr.bf16.mxu0 0
    %2283 = vmatpush1.bf16.msra.mxu0 0
    %2284 = vmatprep.subr.bf16.mxu0 0
    %2285 = vmatpush1.bf16.msra.mxu0 0
    %2286 = vmatprep.subr.bf16.mxu0 0
    %2287 = vmatpush1.bf16.msra.mxu0 0
    %2288 = vmatprep.subr.bf16.mxu0 0
    %2289 = vmatpush1.bf16.msra.mxu0 0
    %2290 = vmatprep.subr.bf16.mxu0 0
    %2291 = vmatpush1.bf16.msra.mxu0 0
    %2292 = vmatprep.subr.bf16.mxu0 0
    %2293 = vmatpush1.bf16.msra.mxu0 0
    %2294 = vmatprep.subr.bf16.mxu0 0
    %2295 = vmatpush1.bf16.msra.mxu0 0
    %2296 = vmatprep.mubr.bf16.mxu0 0
    %2297 = vmatmul.mubr.bf16.gmra.mrb[0].mxu0 %v2262
    %v2298 = vpop.f32.mrb[0].mxu0
    %v2299 = vadd.f32 0.0, %v2298
    %v2300 = vpop.f32.mrb[0].mxu0
    %v2301 = vpop.f32.mrb[0].mxu0
    %v2302 = vpop.f32.mrb[0].mxu0
    %2303 = vdwg.mxu0
    %v2304 = vadd.f32 %v2207, %v2299
    %s2305 = sld [smem:[#allocation2 + $0xb80]]
    %v2306 = vstv %s2305
    %v2307 = vmul.f32 %v69, %v2306
    %s2308 = sld [smem:[#allocation2 + $0xb81]]
    %v2309 = vstv %s2308
    %v2310 = vmul.f32 %v71, %v2309
    %v2311 = vadd.f32 %v2307, %v2310
    %s2312 = sld [smem:[#allocation2 + $0xb82]]
    %v2313 = vstv %s2312
    %v2314 = vmul.f32 %v73, %v2313
    %v2315 = vadd.f32 %v2311, %v2314
    %s2316 = sld [smem:[#allocation2 + $0xb83]]
    %v2317 = vstv %s2316
    %v2318 = vmul.f32 %v75, %v2317
    %v2319 = vadd.f32 %v2315, %v2318
    %s2320 = sld [smem:[#allocation6 + $0x17]]
    %v2321 = vstv %s2320
    %v2322 = vadd.f32 %v2319, %v2321
    %v2323 = vmax.f32 %v2322, 0.0
    %v2324 = vpack.c.bf16 %v2323, %v2323
    %s2325 = scalar_lea.vmem [#allocation8], 736
    %v2326 = vld [vmem:[%s2325] sm:$0xf]
    %v2327 = vld [vmem:[%s2325 + $0x4] sm:$0xf]
    %v2328 = vld [vmem:[%s2325 + $0x8] sm:$0xf]
    %v2329 = vld [vmem:[%s2325 + $0xc] sm:$0xf]
    %v2330 = vld [vmem:[%s2325 + $0x10] sm:$0xf]
    %v2331 = vld [vmem:[%s2325 + $0x14] sm:$0xf]
    %v2332 = vld [vmem:[%s2325 + $0x18] sm:$0xf]
    %v2333 = vld [vmem:[%s2325 + $0x1c] sm:$0xf]
    %v2342 = vunpack.c.l.b16 %v2326
    %v2343 = vunpack.c.l.b16 %v2327
    %v2344 = vunpack.c.l.b16 %v2328
    %v2345 = vunpack.c.l.b16 %v2329
    %v2346 = vunpack.c.l.b16 %v2330
    %v2347 = vunpack.c.l.b16 %v2331
    %v2348 = vunpack.c.l.b16 %v2332
    %v2349 = vunpack.c.l.b16 %v2333
    %v2350 = vpack.c.b16 %v2343, %v2342
    %v2351 = vpack.c.b16 %v2345, %v2344
    %v2352 = vpack.c.b16 %v2347, %v2346
    %v2353 = vpack.c.b16 %v2349, %v2348
    %v2359 = vsel %vm157, %v2324, 0
    %2361 = vmatprep.subr.bf16.mxu0 0
    %2362 = vmatpush1.bf16.msra.mxu0 %v2350
    %2363 = vmatprep.subr.bf16.mxu0 0
    %2364 = vmatpush1.bf16.msra.mxu0 %v2351
    %2365 = vmatprep.subr.bf16.mxu0 0
    %2366 = vmatpush1.bf16.msra.mxu0 %v2352
    %2367 = vmatprep.subr.bf16.mxu0 0
    %2368 = vmatpush1.bf16.msra.mxu0 %v2353
    %2369 = vmatprep.subr.bf16.mxu0 0
    %2370 = vmatpush1.bf16.msra.mxu0 0
    %2371 = vmatprep.subr.bf16.mxu0 0
    %2372 = vmatpush1.bf16.msra.mxu0 0
    %2373 = vmatprep.subr.bf16.mxu0 0
    %2374 = vmatpush1.bf16.msra.mxu0 0
    %2375 = vmatprep.subr.bf16.mxu0 0
    %2376 = vmatpush1.bf16.msra.mxu0 0
    %2377 = vmatprep.subr.bf16.mxu0 0
    %2378 = vmatpush1.bf16.msra.mxu0 0
    %2379 = vmatprep.subr.bf16.mxu0 0
    %2380 = vmatpush1.bf16.msra.mxu0 0
    %2381 = vmatprep.subr.bf16.mxu0 0
    %2382 = vmatpush1.bf16.msra.mxu0 0
    %2383 = vmatprep.subr.bf16.mxu0 0
    %2384 = vmatpush1.bf16.msra.mxu0 0
    %2385 = vmatprep.subr.bf16.mxu0 0
    %2386 = vmatpush1.bf16.msra.mxu0 0
    %2387 = vmatprep.subr.bf16.mxu0 0
    %2388 = vmatpush1.bf16.msra.mxu0 0
    %2389 = vmatprep.subr.bf16.mxu0 0
    %2390 = vmatpush1.bf16.msra.mxu0 0
    %2391 = vmatprep.subr.bf16.mxu0 0
    %2392 = vmatpush1.bf16.msra.mxu0 0
    %2393 = vmatprep.mubr.bf16.mxu0 0
    %2394 = vmatmul.mubr.bf16.gmra.mrb[0].mxu0 %v2359
    %v2395 = vpop.f32.mrb[0].mxu0
    %v2396 = vadd.f32 0.0, %v2395
    %v2397 = vpop.f32.mrb[0].mxu0
    %v2398 = vpop.f32.mrb[0].mxu0
    %v2399 = vpop.f32.mrb[0].mxu0
    %2400 = vdwg.mxu0
    %v2401 = vadd.f32 %v2304, %v2396
    %s2402 = sld [smem:[#allocation2 + $0xc00]]
    %v2403 = vstv %s2402
    %v2404 = vmul.f32 %v69, %v2403
    %s2405 = sld [smem:[#allocation2 + $0xc01]]
    %v2406 = vstv %s2405
    %v2407 = vmul.f32 %v71, %v2406
    %v2408 = vadd.f32 %v2404, %v2407
    %s2409 = sld [smem:[#allocation2 + $0xc02]]
    %v2410 = vstv %s2409
    %v2411 = vmul.f32 %v73, %v2410
    %v2412 = vadd.f32 %v2408, %v2411
    %s2413 = sld [smem:[#allocation2 + $0xc03]]
    %v2414 = vstv %s2413
    %v2415 = vmul.f32 %v75, %v2414
    %v2416 = vadd.f32 %v2412, %v2415
    %s2417 = sld [smem:[#allocation6 + $0x18]]
    %v2418 = vstv %s2417
    %v2419 = vadd.f32 %v2416, %v2418
    %v2420 = vmax.f32 %v2419, 0.0
    %v2421 = vpack.c.bf16 %v2420, %v2420
    %s2422 = scalar_lea.vmem [#allocation8], 768
    %v2423 = vld [vmem:[%s2422] sm:$0xf]
    %v2424 = vld [vmem:[%s2422 + $0x4] sm:$0xf]
    %v2425 = vld [vmem:[%s2422 + $0x8] sm:$0xf]
    %v2426 = vld [vmem:[%s2422 + $0xc] sm:$0xf]
    %v2427 = vld [vmem:[%s2422 + $0x10] sm:$0xf]
    %v2428 = vld [vmem:[%s2422 + $0x14] sm:$0xf]
    %v2429 = vld [vmem:[%s2422 + $0x18] sm:$0xf]
    %v2430 = vld [vmem:[%s2422 + $0x1c] sm:$0xf]
    %v2439 = vunpack.c.l.b16 %v2423
    %v2440 = vunpack.c.l.b16 %v2424
    %v2441 = vunpack.c.l.b16 %v2425
    %v2442 = vunpack.c.l.b16 %v2426
    %v2443 = vunpack.c.l.b16 %v2427
    %v2444 = vunpack.c.l.b16 %v2428
    %v2445 = vunpack.c.l.b16 %v2429
    %v2446 = vunpack.c.l.b16 %v2430
    %v2447 = vpack.c.b16 %v2440, %v2439
    %v2448 = vpack.c.b16 %v2442, %v2441
    %v2449 = vpack.c.b16 %v2444, %v2443
    %v2450 = vpack.c.b16 %v2446, %v2445
    %v2456 = vsel %vm157, %v2421, 0
    %2458 = vmatprep.subr.bf16.mxu0 0
    %2459 = vmatpush1.bf16.msra.mxu0 %v2447
    %2460 = vmatprep.subr.bf16.mxu0 0
    %2461 = vmatpush1.bf16.msra.mxu0 %v2448
    %2462 = vmatprep.subr.bf16.mxu0 0
    %2463 = vmatpush1.bf16.msra.mxu0 %v2449
    %2464 = vmatprep.subr.bf16.mxu0 0
    %2465 = vmatpush1.bf16.msra.mxu0 %v2450
    %2466 = vmatprep.subr.bf16.mxu0 0
    %2467 = vmatpush1.bf16.msra.mxu0 0
    %2468 = vmatprep.subr.bf16.mxu0 0
    %2469 = vmatpush1.bf16.msra.mxu0 0
    %2470 = vmatprep.subr.bf16.mxu0 0
    %2471 = vmatpush1.bf16.msra.mxu0 0
    %2472 = vmatprep.subr.bf16.mxu0 0
    %2473 = vmatpush1.bf16.msra.mxu0 0
    %2474 = vmatprep.subr.bf16.mxu0 0
    %2475 = vmatpush1.bf16.msra.mxu0 0
    %2476 = vmatprep.subr.bf16.mxu0 0
    %2477 = vmatpush1.bf16.msra.mxu0 0
    %2478 = vmatprep.subr.bf16.mxu0 0
    %2479 = vmatpush1.bf16.msra.mxu0 0
    %2480 = vmatprep.subr.bf16.mxu0 0
    %2481 = vmatpush1.bf16.msra.mxu0 0
    %2482 = vmatprep.subr.bf16.mxu0 0
    %2483 = vmatpush1.bf16.msra.mxu0 0
    %2484 = vmatprep.subr.bf16.mxu0 0
    %2485 = vmatpush1.bf16.msra.mxu0 0
    %2486 = vmatprep.subr.bf16.mxu0 0
    %2487 = vmatpush1.bf16.msra.mxu0 0
    %2488 = vmatprep.subr.bf16.mxu0 0
    %2489 = vmatpush1.bf16.msra.mxu0 0
    %2490 = vmatprep.mubr.bf16.mxu0 0
    %2491 = vmatmul.mubr.bf16.gmra.mrb[0].mxu0 %v2456
    %v2492 = vpop.f32.mrb[0].mxu0
    %v2493 = vadd.f32 0.0, %v2492
    %v2494 = vpop.f32.mrb[0].mxu0
    %v2495 = vpop.f32.mrb[0].mxu0
    %v2496 = vpop.f32.mrb[0].mxu0
    %2497 = vdwg.mxu0
    %v2498 = vadd.f32 %v2401, %v2493
    %s2499 = sld [smem:[#allocation2 + $0xc80]]
    %v2500 = vstv %s2499
    %v2501 = vmul.f32 %v69, %v2500
    %s2502 = sld [smem:[#allocation2 + $0xc81]]
    %v2503 = vstv %s2502
    %v2504 = vmul.f32 %v71, %v2503
    %v2505 = vadd.f32 %v2501, %v2504
    %s2506 = sld [smem:[#allocation2 + $0xc82]]
    %v2507 = vstv %s2506
    %v2508 = vmul.f32 %v73, %v2507
    %v2509 = vadd.f32 %v2505, %v2508
    %s2510 = sld [smem:[#allocation2 + $0xc83]]
    %v2511 = vstv %s2510
    %v2512 = vmul.f32 %v75, %v2511
    %v2513 = vadd.f32 %v2509, %v2512
    %s2514 = sld [smem:[#allocation6 + $0x19]]
    %v2515 = vstv %s2514
    %v2516 = vadd.f32 %v2513, %v2515
    %v2517 = vmax.f32 %v2516, 0.0
    %v2518 = vpack.c.bf16 %v2517, %v2517
    %s2519 = scalar_lea.vmem [#allocation8], 800
    %v2520 = vld [vmem:[%s2519] sm:$0xf]
    %v2521 = vld [vmem:[%s2519 + $0x4] sm:$0xf]
    %v2522 = vld [vmem:[%s2519 + $0x8] sm:$0xf]
    %v2523 = vld [vmem:[%s2519 + $0xc] sm:$0xf]
    %v2524 = vld [vmem:[%s2519 + $0x10] sm:$0xf]
    %v2525 = vld [vmem:[%s2519 + $0x14] sm:$0xf]
    %v2526 = vld [vmem:[%s2519 + $0x18] sm:$0xf]
    %v2527 = vld [vmem:[%s2519 + $0x1c] sm:$0xf]
    %v2536 = vunpack.c.l.b16 %v2520
    %v2537 = vunpack.c.l.b16 %v2521
    %v2538 = vunpack.c.l.b16 %v2522
    %v2539 = vunpack.c.l.b16 %v2523
    %v2540 = vunpack.c.l.b16 %v2524
    %v2541 = vunpack.c.l.b16 %v2525
    %v2542 = vunpack.c.l.b16 %v2526
    %v2543 = vunpack.c.l.b16 %v2527
    %v2544 = vpack.c.b16 %v2537, %v2536
    %v2545 = vpack.c.b16 %v2539, %v2538
    %v2546 = vpack.c.b16 %v2541, %v2540
    %v2547 = vpack.c.b16 %v2543, %v2542
    %v2553 = vsel %vm157, %v2518, 0
    %2555 = vmatprep.subr.bf16.mxu0 0
    %2556 = vmatpush1.bf16.msra.mxu0 %v2544
    %2557 = vmatprep.subr.bf16.mxu0 0
    %2558 = vmatpush1.bf16.msra.mxu0 %v2545
    %2559 = vmatprep.subr.bf16.mxu0 0
    %2560 = vmatpush1.bf16.msra.mxu0 %v2546
    %2561 = vmatprep.subr.bf16.mxu0 0
    %2562 = vmatpush1.bf16.msra.mxu0 %v2547
    %2563 = vmatprep.subr.bf16.mxu0 0
    %2564 = vmatpush1.bf16.msra.mxu0 0
    %2565 = vmatprep.subr.bf16.mxu0 0
    %2566 = vmatpush1.bf16.msra.mxu0 0
    %2567 = vmatprep.subr.bf16.mxu0 0
    %2568 = vmatpush1.bf16.msra.mxu0 0
    %2569 = vmatprep.subr.bf16.mxu0 0
    %2570 = vmatpush1.bf16.msra.mxu0 0
    %2571 = vmatprep.subr.bf16.mxu0 0
    %2572 = vmatpush1.bf16.msra.mxu0 0
    %2573 = vmatprep.subr.bf16.mxu0 0
    %2574 = vmatpush1.bf16.msra.mxu0 0
    %2575 = vmatprep.subr.bf16.mxu0 0
    %2576 = vmatpush1.bf16.msra.mxu0 0
    %2577 = vmatprep.subr.bf16.mxu0 0
    %2578 = vmatpush1.bf16.msra.mxu0 0
    %2579 = vmatprep.subr.bf16.mxu0 0
    %2580 = vmatpush1.bf16.msra.mxu0 0
    %2581 = vmatprep.subr.bf16.mxu0 0
    %2582 = vmatpush1.bf16.msra.mxu0 0
    %2583 = vmatprep.subr.bf16.mxu0 0
    %2584 = vmatpush1.bf16.msra.mxu0 0
    %2585 = vmatprep.subr.bf16.mxu0 0
    %2586 = vmatpush1.bf16.msra.mxu0 0
    %2587 = vmatprep.mubr.bf16.mxu0 0
    %2588 = vmatmul.mubr.bf16.gmra.mrb[0].mxu0 %v2553
    %v2589 = vpop.f32.mrb[0].mxu0
    %v2590 = vadd.f32 0.0, %v2589
    %v2591 = vpop.f32.mrb[0].mxu0
    %v2592 = vpop.f32.mrb[0].mxu0
    %v2593 = vpop.f32.mrb[0].mxu0
    %2594 = vdwg.mxu0
    %v2595 = vadd.f32 %v2498, %v2590
    %s2596 = sld [smem:[#allocation2 + $0xd00]]
    %v2597 = vstv %s2596
    %v2598 = vmul.f32 %v69, %v2597
    %s2599 = sld [smem:[#allocation2 + $0xd01]]
    %v2600 = vstv %s2599
    %v2601 = vmul.f32 %v71, %v2600
    %v2602 = vadd.f32 %v2598, %v2601
    %s2603 = sld [smem:[#allocation2 + $0xd02]]
    %v2604 = vstv %s2603
    %v2605 = vmul.f32 %v73, %v2604
    %v2606 = vadd.f32 %v2602, %v2605
    %s2607 = sld [smem:[#allocation2 + $0xd03]]
    %v2608 = vstv %s2607
    %v2609 = vmul.f32 %v75, %v2608
    %v2610 = vadd.f32 %v2606, %v2609
    %s2611 = sld [smem:[#allocation6 + $0x1a]]
    %v2612 = vstv %s2611
    %v2613 = vadd.f32 %v2610, %v2612
    %v2614 = vmax.f32 %v2613, 0.0
    %v2615 = vpack.c.bf16 %v2614, %v2614
    %s2616 = scalar_lea.vmem [#allocation8], 832
    %v2617 = vld [vmem:[%s2616] sm:$0xf]
    %v2618 = vld [vmem:[%s2616 + $0x4] sm:$0xf]
    %v2619 = vld [vmem:[%s2616 + $0x8] sm:$0xf]
    %v2620 = vld [vmem:[%s2616 + $0xc] sm:$0xf]
    %v2621 = vld [vmem:[%s2616 + $0x10] sm:$0xf]
    %v2622 = vld [vmem:[%s2616 + $0x14] sm:$0xf]
    %v2623 = vld [vmem:[%s2616 + $0x18] sm:$0xf]
    %v2624 = vld [vmem:[%s2616 + $0x1c] sm:$0xf]
    %v2633 = vunpack.c.l.b16 %v2617
    %v2634 = vunpack.c.l.b16 %v2618
    %v2635 = vunpack.c.l.b16 %v2619
    %v2636 = vunpack.c.l.b16 %v2620
    %v2637 = vunpack.c.l.b16 %v2621
    %v2638 = vunpack.c.l.b16 %v2622
    %v2639 = vunpack.c.l.b16 %v2623
    %v2640 = vunpack.c.l.b16 %v2624
    %v2641 = vpack.c.b16 %v2634, %v2633
    %v2642 = vpack.c.b16 %v2636, %v2635
    %v2643 = vpack.c.b16 %v2638, %v2637
    %v2644 = vpack.c.b16 %v2640, %v2639
    %v2650 = vsel %vm157, %v2615, 0
    %2652 = vmatprep.subr.bf16.mxu0 0
    %2653 = vmatpush1.bf16.msra.mxu0 %v2641
    %2654 = vmatprep.subr.bf16.mxu0 0
    %2655 = vmatpush1.bf16.msra.mxu0 %v2642
    %2656 = vmatprep.subr.bf16.mxu0 0
    %2657 = vmatpush1.bf16.msra.mxu0 %v2643
    %2658 = vmatprep.subr.bf16.mxu0 0
    %2659 = vmatpush1.bf16.msra.mxu0 %v2644
    %2660 = vmatprep.subr.bf16.mxu0 0
    %2661 = vmatpush1.bf16.msra.mxu0 0
    %2662 = vmatprep.subr.bf16.mxu0 0
    %2663 = vmatpush1.bf16.msra.mxu0 0
    %2664 = vmatprep.subr.bf16.mxu0 0
    %2665 = vmatpush1.bf16.msra.mxu0 0
    %2666 = vmatprep.subr.bf16.mxu0 0
    %2667 = vmatpush1.bf16.msra.mxu0 0
    %2668 = vmatprep.subr.bf16.mxu0 0
    %2669 = vmatpush1.bf16.msra.mxu0 0
    %2670 = vmatprep.subr.bf16.mxu0 0
    %2671 = vmatpush1.bf16.msra.mxu0 0
    %2672 = vmatprep.subr.bf16.mxu0 0
    %2673 = vmatpush1.bf16.msra.mxu0 0
    %2674 = vmatprep.subr.bf16.mxu0 0
    %2675 = vmatpush1.bf16.msra.mxu0 0
    %2676 = vmatprep.subr.bf16.mxu0 0
    %2677 = vmatpush1.bf16.msra.mxu0 0
    %2678 = vmatprep.subr.bf16.mxu0 0
    %2679 = vmatpush1.bf16.msra.mxu0 0
    %2680 = vmatprep.subr.bf16.mxu0 0
    %2681 = vmatpush1.bf16.msra.mxu0 0
    %2682 = vmatprep.subr.bf16.mxu0 0
    %2683 = vmatpush1.bf16.msra.mxu0 0
    %2684 = vmatprep.mubr.bf16.mxu0 0
    %2685 = vmatmul.mubr.bf16.gmra.mrb[0].mxu0 %v2650
    %v2686 = vpop.f32.mrb[0].mxu0
    %v2687 = vadd.f32 0.0, %v2686
    %v2688 = vpop.f32.mrb[0].mxu0
    %v2689 = vpop.f32.mrb[0].mxu0
    %v2690 = vpop.f32.mrb[0].mxu0
    %2691 = vdwg.mxu0
    %v2692 = vadd.f32 %v2595, %v2687
    %s2693 = sld [smem:[#allocation2 + $0xd80]]
    %v2694 = vstv %s2693
    %v2695 = vmul.f32 %v69, %v2694
    %s2696 = sld [smem:[#allocation2 + $0xd81]]
    %v2697 = vstv %s2696
    %v2698 = vmul.f32 %v71, %v2697
    %v2699 = vadd.f32 %v2695, %v2698
    %s2700 = sld [smem:[#allocation2 + $0xd82]]
    %v2701 = vstv %s2700
    %v2702 = vmul.f32 %v73, %v2701
    %v2703 = vadd.f32 %v2699, %v2702
    %s2704 = sld [smem:[#allocation2 + $0xd83]]
    %v2705 = vstv %s2704
    %v2706 = vmul.f32 %v75, %v2705
    %v2707 = vadd.f32 %v2703, %v2706
    %s2708 = sld [smem:[#allocation6 + $0x1b]]
    %v2709 = vstv %s2708
    %v2710 = vadd.f32 %v2707, %v2709
    %v2711 = vmax.f32 %v2710, 0.0
    %v2712 = vpack.c.bf16 %v2711, %v2711
    %s2713 = scalar_lea.vmem [#allocation8], 864
    %v2714 = vld [vmem:[%s2713] sm:$0xf]
    %v2715 = vld [vmem:[%s2713 + $0x4] sm:$0xf]
    %v2716 = vld [vmem:[%s2713 + $0x8] sm:$0xf]
    %v2717 = vld [vmem:[%s2713 + $0xc] sm:$0xf]
    %v2718 = vld [vmem:[%s2713 + $0x10] sm:$0xf]
    %v2719 = vld [vmem:[%s2713 + $0x14] sm:$0xf]
    %v2720 = vld [vmem:[%s2713 + $0x18] sm:$0xf]
    %v2721 = vld [vmem:[%s2713 + $0x1c] sm:$0xf]
    %v2730 = vunpack.c.l.b16 %v2714
    %v2731 = vunpack.c.l.b16 %v2715
    %v2732 = vunpack.c.l.b16 %v2716
    %v2733 = vunpack.c.l.b16 %v2717
    %v2734 = vunpack.c.l.b16 %v2718
    %v2735 = vunpack.c.l.b16 %v2719
    %v2736 = vunpack.c.l.b16 %v2720
    %v2737 = vunpack.c.l.b16 %v2721
    %v2738 = vpack.c.b16 %v2731, %v2730
    %v2739 = vpack.c.b16 %v2733, %v2732
    %v2740 = vpack.c.b16 %v2735, %v2734
    %v2741 = vpack.c.b16 %v2737, %v2736
    %v2747 = vsel %vm157, %v2712, 0
    %2749 = vmatprep.subr.bf16.mxu0 0
    %2750 = vmatpush1.bf16.msra.mxu0 %v2738
    %2751 = vmatprep.subr.bf16.mxu0 0
    %2752 = vmatpush1.bf16.msra.mxu0 %v2739
    %2753 = vmatprep.subr.bf16.mxu0 0
    %2754 = vmatpush1.bf16.msra.mxu0 %v2740
    %2755 = vmatprep.subr.bf16.mxu0 0
    %2756 = vmatpush1.bf16.msra.mxu0 %v2741
    %2757 = vmatprep.subr.bf16.mxu0 0
    %2758 = vmatpush1.bf16.msra.mxu0 0
    %2759 = vmatprep.subr.bf16.mxu0 0
    %2760 = vmatpush1.bf16.msra.mxu0 0
    %2761 = vmatprep.subr.bf16.mxu0 0
    %2762 = vmatpush1.bf16.msra.mxu0 0
    %2763 = vmatprep.subr.bf16.mxu0 0
    %2764 = vmatpush1.bf16.msra.mxu0 0
    %2765 = vmatprep.subr.bf16.mxu0 0
    %2766 = vmatpush1.bf16.msra.mxu0 0
    %2767 = vmatprep.subr.bf16.mxu0 0
    %2768 = vmatpush1.bf16.msra.mxu0 0
    %2769 = vmatprep.subr.bf16.mxu0 0
    %2770 = vmatpush1.bf16.msra.mxu0 0
    %2771 = vmatprep.subr.bf16.mxu0 0
    %2772 = vmatpush1.bf16.msra.mxu0 0
    %2773 = vmatprep.subr.bf16.mxu0 0
    %2774 = vmatpush1.bf16.msra.mxu0 0
    %2775 = vmatprep.subr.bf16.mxu0 0
    %2776 = vmatpush1.bf16.msra.mxu0 0
    %2777 = vmatprep.subr.bf16.mxu0 0
    %2778 = vmatpush1.bf16.msra.mxu0 0
    %2779 = vmatprep.subr.bf16.mxu0 0
    %2780 = vmatpush1.bf16.msra.mxu0 0
    %2781 = vmatprep.mubr.bf16.mxu0 0
    %2782 = vmatmul.mubr.bf16.gmra.mrb[0].mxu0 %v2747
    %v2783 = vpop.f32.mrb[0].mxu0
    %v2784 = vadd.f32 0.0, %v2783
    %v2785 = vpop.f32.mrb[0].mxu0
    %v2786 = vpop.f32.mrb[0].mxu0
    %v2787 = vpop.f32.mrb[0].mxu0
    %2788 = vdwg.mxu0
    %v2789 = vadd.f32 %v2692, %v2784
    %s2790 = sld [smem:[#allocation2 + $0xe00]]
    %v2791 = vstv %s2790
    %v2792 = vmul.f32 %v69, %v2791
    %s2793 = sld [smem:[#allocation2 + $0xe01]]
    %v2794 = vstv %s2793
    %v2795 = vmul.f32 %v71, %v2794
    %v2796 = vadd.f32 %v2792, %v2795
    %s2797 = sld [smem:[#allocation2 + $0xe02]]
    %v2798 = vstv %s2797
    %v2799 = vmul.f32 %v73, %v2798
    %v2800 = vadd.f32 %v2796, %v2799
    %s2801 = sld [smem:[#allocation2 + $0xe03]]
    %v2802 = vstv %s2801
    %v2803 = vmul.f32 %v75, %v2802
    %v2804 = vadd.f32 %v2800, %v2803
    %s2805 = sld [smem:[#allocation6 + $0x1c]]
    %v2806 = vstv %s2805
    %v2807 = vadd.f32 %v2804, %v2806
    %v2808 = vmax.f32 %v2807, 0.0
    %v2809 = vpack.c.bf16 %v2808, %v2808
    %s2810 = scalar_lea.vmem [#allocation8], 896
    %v2811 = vld [vmem:[%s2810] sm:$0xf]
    %v2812 = vld [vmem:[%s2810 + $0x4] sm:$0xf]
    %v2813 = vld [vmem:[%s2810 + $0x8] sm:$0xf]
    %v2814 = vld [vmem:[%s2810 + $0xc] sm:$0xf]
    %v2815 = vld [vmem:[%s2810 + $0x10] sm:$0xf]
    %v2816 = vld [vmem:[%s2810 + $0x14] sm:$0xf]
    %v2817 = vld [vmem:[%s2810 + $0x18] sm:$0xf]
    %v2818 = vld [vmem:[%s2810 + $0x1c] sm:$0xf]
    %v2827 = vunpack.c.l.b16 %v2811
    %v2828 = vunpack.c.l.b16 %v2812
    %v2829 = vunpack.c.l.b16 %v2813
    %v2830 = vunpack.c.l.b16 %v2814
    %v2831 = vunpack.c.l.b16 %v2815
    %v2832 = vunpack.c.l.b16 %v2816
    %v2833 = vunpack.c.l.b16 %v2817
    %v2834 = vunpack.c.l.b16 %v2818
    %v2835 = vpack.c.b16 %v2828, %v2827
    %v2836 = vpack.c.b16 %v2830, %v2829
    %v2837 = vpack.c.b16 %v2832, %v2831
    %v2838 = vpack.c.b16 %v2834, %v2833
    %v2844 = vsel %vm157, %v2809, 0
    %2846 = vmatprep.subr.bf16.mxu0 0
    %2847 = vmatpush1.bf16.msra.mxu0 %v2835
    %2848 = vmatprep.subr.bf16.mxu0 0
    %2849 = vmatpush1.bf16.msra.mxu0 %v2836
    %2850 = vmatprep.subr.bf16.mxu0 0
    %2851 = vmatpush1.bf16.msra.mxu0 %v2837
    %2852 = vmatprep.subr.bf16.mxu0 0
    %2853 = vmatpush1.bf16.msra.mxu0 %v2838
    %2854 = vmatprep.subr.bf16.mxu0 0
    %2855 = vmatpush1.bf16.msra.mxu0 0
    %2856 = vmatprep.subr.bf16.mxu0 0
    %2857 = vmatpush1.bf16.msra.mxu0 0
    %2858 = vmatprep.subr.bf16.mxu0 0
    %2859 = vmatpush1.bf16.msra.mxu0 0
    %2860 = vmatprep.subr.bf16.mxu0 0
    %2861 = vmatpush1.bf16.msra.mxu0 0
    %2862 = vmatprep.subr.bf16.mxu0 0
    %2863 = vmatpush1.bf16.msra.mxu0 0
    %2864 = vmatprep.subr.bf16.mxu0 0
    %2865 = vmatpush1.bf16.msra.mxu0 0
    %2866 = vmatprep.subr.bf16.mxu0 0
    %2867 = vmatpush1.bf16.msra.mxu0 0
    %2868 = vmatprep.subr.bf16.mxu0 0
    %2869 = vmatpush1.bf16.msra.mxu0 0
    %2870 = vmatprep.subr.bf16.mxu0 0
    %2871 = vmatpush1.bf16.msra.mxu0 0
    %2872 = vmatprep.subr.bf16.mxu0 0
    %2873 = vmatpush1.bf16.msra.mxu0 0
    %2874 = vmatprep.subr.bf16.mxu0 0
    %2875 = vmatpush1.bf16.msra.mxu0 0
    %2876 = vmatprep.subr.bf16.mxu0 0
    %2877 = vmatpush1.bf16.msra.mxu0 0
    %2878 = vmatprep.mubr.bf16.mxu0 0
    %2879 = vmatmul.mubr.bf16.gmra.mrb[0].mxu0 %v2844
    %v2880 = vpop.f32.mrb[0].mxu0
    %v2881 = vadd.f32 0.0, %v2880
    %v2882 = vpop.f32.mrb[0].mxu0
    %v2883 = vpop.f32.mrb[0].mxu0
    %v2884 = vpop.f32.mrb[0].mxu0
    %2885 = vdwg.mxu0
    %v2886 = vadd.f32 %v2789, %v2881
    %s2887 = sld [smem:[#allocation2 + $0xe80]]
    %v2888 = vstv %s2887
    %v2889 = vmul.f32 %v69, %v2888
    %s2890 = sld [smem:[#allocation2 + $0xe81]]
    %v2891 = vstv %s2890
    %v2892 = vmul.f32 %v71, %v2891
    %v2893 = vadd.f32 %v2889, %v2892
    %s2894 = sld [smem:[#allocation2 + $0xe82]]
    %v2895 = vstv %s2894
    %v2896 = vmul.f32 %v73, %v2895
    %v2897 = vadd.f32 %v2893, %v2896
    %s2898 = sld [smem:[#allocation2 + $0xe83]]
    %v2899 = vstv %s2898
    %v2900 = vmul.f32 %v75, %v2899
    %v2901 = vadd.f32 %v2897, %v2900
    %s2902 = sld [smem:[#allocation6 + $0x1d]]
    %v2903 = vstv %s2902
    %v2904 = vadd.f32 %v2901, %v2903
    %v2905 = vmax.f32 %v2904, 0.0
    %v2906 = vpack.c.bf16 %v2905, %v2905
    %s2907 = scalar_lea.vmem [#allocation8], 928
    %v2908 = vld [vmem:[%s2907] sm:$0xf]
    %v2909 = vld [vmem:[%s2907 + $0x4] sm:$0xf]
    %v2910 = vld [vmem:[%s2907 + $0x8] sm:$0xf]
    %v2911 = vld [vmem:[%s2907 + $0xc] sm:$0xf]
    %v2912 = vld [vmem:[%s2907 + $0x10] sm:$0xf]
    %v2913 = vld [vmem:[%s2907 + $0x14] sm:$0xf]
    %v2914 = vld [vmem:[%s2907 + $0x18] sm:$0xf]
    %v2915 = vld [vmem:[%s2907 + $0x1c] sm:$0xf]
    %v2924 = vunpack.c.l.b16 %v2908
    %v2925 = vunpack.c.l.b16 %v2909
    %v2926 = vunpack.c.l.b16 %v2910
    %v2927 = vunpack.c.l.b16 %v2911
    %v2928 = vunpack.c.l.b16 %v2912
    %v2929 = vunpack.c.l.b16 %v2913
    %v2930 = vunpack.c.l.b16 %v2914
    %v2931 = vunpack.c.l.b16 %v2915
    %v2932 = vpack.c.b16 %v2925, %v2924
    %v2933 = vpack.c.b16 %v2927, %v2926
    %v2934 = vpack.c.b16 %v2929, %v2928
    %v2935 = vpack.c.b16 %v2931, %v2930
    %v2941 = vsel %vm157, %v2906, 0
    %2943 = vmatprep.subr.bf16.mxu0 0
    %2944 = vmatpush1.bf16.msra.mxu0 %v2932
    %2945 = vmatprep.subr.bf16.mxu0 0
    %2946 = vmatpush1.bf16.msra.mxu0 %v2933
    %2947 = vmatprep.subr.bf16.mxu0 0
    %2948 = vmatpush1.bf16.msra.mxu0 %v2934
    %2949 = vmatprep.subr.bf16.mxu0 0
    %2950 = vmatpush1.bf16.msra.mxu0 %v2935
    %2951 = vmatprep.subr.bf16.mxu0 0
    %2952 = vmatpush1.bf16.msra.mxu0 0
    %2953 = vmatprep.subr.bf16.mxu0 0
    %2954 = vmatpush1.bf16.msra.mxu0 0
    %2955 = vmatprep.subr.bf16.mxu0 0
    %2956 = vmatpush1.bf16.msra.mxu0 0
    %2957 = vmatprep.subr.bf16.mxu0 0
    %2958 = vmatpush1.bf16.msra.mxu0 0
    %2959 = vmatprep.subr.bf16.mxu0 0
    %2960 = vmatpush1.bf16.msra.mxu0 0
    %2961 = vmatprep.subr.bf16.mxu0 0
    %2962 = vmatpush1.bf16.msra.mxu0 0
    %2963 = vmatprep.subr.bf16.mxu0 0
    %2964 = vmatpush1.bf16.msra.mxu0 0
    %2965 = vmatprep.subr.bf16.mxu0 0
    %2966 = vmatpush1.bf16.msra.mxu0 0
    %2967 = vmatprep.subr.bf16.mxu0 0
    %2968 = vmatpush1.bf16.msra.mxu0 0
    %2969 = vmatprep.subr.bf16.mxu0 0
    %2970 = vmatpush1.bf16.msra.mxu0 0
    %2971 = vmatprep.subr.bf16.mxu0 0
    %2972 = vmatpush1.bf16.msra.mxu0 0
    %2973 = vmatprep.subr.bf16.mxu0 0
    %2974 = vmatpush1.bf16.msra.mxu0 0
    %2975 = vmatprep.mubr.bf16.mxu0 0
    %2976 = vmatmul.mubr.bf16.gmra.mrb[0].mxu0 %v2941
    %v2977 = vpop.f32.mrb[0].mxu0
    %v2978 = vadd.f32 0.0, %v2977
    %v2979 = vpop.f32.mrb[0].mxu0
    %v2980 = vpop.f32.mrb[0].mxu0
    %v2981 = vpop.f32.mrb[0].mxu0
    %2982 = vdwg.mxu0
    %v2983 = vadd.f32 %v2886, %v2978
    %s2984 = sld [smem:[#allocation2 + $0xf00]]
    %v2985 = vstv %s2984
    %v2986 = vmul.f32 %v69, %v2985
    %s2987 = sld [smem:[#allocation2 + $0xf01]]
    %v2988 = vstv %s2987
    %v2989 = vmul.f32 %v71, %v2988
    %v2990 = vadd.f32 %v2986, %v2989
    %s2991 = sld [smem:[#allocation2 + $0xf02]]
    %v2992 = vstv %s2991
    %v2993 = vmul.f32 %v73, %v2992
    %v2994 = vadd.f32 %v2990, %v2993
    %s2995 = sld [smem:[#allocation2 + $0xf03]]
    %v2996 = vstv %s2995
    %v2997 = vmul.f32 %v75, %v2996
    %v2998 = vadd.f32 %v2994, %v2997
    %s2999 = sld [smem:[#allocation6 + $0x1e]]
    %v3000 = vstv %s2999
    %v3001 = vadd.f32 %v2998, %v3000
    %v3002 = vmax.f32 %v3001, 0.0
    %v3003 = vpack.c.bf16 %v3002, %v3002
    %s3004 = scalar_lea.vmem [#allocation8], 960
    %v3005 = vld [vmem:[%s3004] sm:$0xf]
    %v3006 = vld [vmem:[%s3004 + $0x4] sm:$0xf]
    %v3007 = vld [vmem:[%s3004 + $0x8] sm:$0xf]
    %v3008 = vld [vmem:[%s3004 + $0xc] sm:$0xf]
    %v3009 = vld [vmem:[%s3004 + $0x10] sm:$0xf]
    %v3010 = vld [vmem:[%s3004 + $0x14] sm:$0xf]
    %v3011 = vld [vmem:[%s3004 + $0x18] sm:$0xf]
    %v3012 = vld [vmem:[%s3004 + $0x1c] sm:$0xf]
    %v3021 = vunpack.c.l.b16 %v3005
    %v3022 = vunpack.c.l.b16 %v3006
    %v3023 = vunpack.c.l.b16 %v3007
    %v3024 = vunpack.c.l.b16 %v3008
    %v3025 = vunpack.c.l.b16 %v3009
    %v3026 = vunpack.c.l.b16 %v3010
    %v3027 = vunpack.c.l.b16 %v3011
    %v3028 = vunpack.c.l.b16 %v3012
    %v3029 = vpack.c.b16 %v3022, %v3021
    %v3030 = vpack.c.b16 %v3024, %v3023
    %v3031 = vpack.c.b16 %v3026, %v3025
    %v3032 = vpack.c.b16 %v3028, %v3027
    %v3038 = vsel %vm157, %v3003, 0
    %3040 = vmatprep.subr.bf16.mxu0 0
    %3041 = vmatpush1.bf16.msra.mxu0 %v3029
    %3042 = vmatprep.subr.bf16.mxu0 0
    %3043 = vmatpush1.bf16.msra.mxu0 %v3030
    %3044 = vmatprep.subr.bf16.mxu0 0
    %3045 = vmatpush1.bf16.msra.mxu0 %v3031
    %3046 = vmatprep.subr.bf16.mxu0 0
    %3047 = vmatpush1.bf16.msra.mxu0 %v3032
    %3048 = vmatprep.subr.bf16.mxu0 0
    %3049 = vmatpush1.bf16.msra.mxu0 0
    %3050 = vmatprep.subr.bf16.mxu0 0
    %3051 = vmatpush1.bf16.msra.mxu0 0
    %3052 = vmatprep.subr.bf16.mxu0 0
    %3053 = vmatpush1.bf16.msra.mxu0 0
    %3054 = vmatprep.subr.bf16.mxu0 0
    %3055 = vmatpush1.bf16.msra.mxu0 0
    %3056 = vmatprep.subr.bf16.mxu0 0
    %3057 = vmatpush1.bf16.msra.mxu0 0
    %3058 = vmatprep.subr.bf16.mxu0 0
    %3059 = vmatpush1.bf16.msra.mxu0 0
    %3060 = vmatprep.subr.bf16.mxu0 0
    %3061 = vmatpush1.bf16.msra.mxu0 0
    %3062 = vmatprep.subr.bf16.mxu0 0
    %3063 = vmatpush1.bf16.msra.mxu0 0
    %3064 = vmatprep.subr.bf16.mxu0 0
    %3065 = vmatpush1.bf16.msra.mxu0 0
    %3066 = vmatprep.subr.bf16.mxu0 0
    %3067 = vmatpush1.bf16.msra.mxu0 0
    %3068 = vmatprep.subr.bf16.mxu0 0
    %3069 = vmatpush1.bf16.msra.mxu0 0
    %3070 = vmatprep.subr.bf16.mxu0 0
    %3071 = vmatpush1.bf16.msra.mxu0 0
    %3072 = vmatprep.mubr.bf16.mxu0 0
    %3073 = vmatmul.mubr.bf16.gmra.mrb[0].mxu0 %v3038
    %v3074 = vpop.f32.mrb[0].mxu0
    %v3075 = vadd.f32 0.0, %v3074
    %v3076 = vpop.f32.mrb[0].mxu0
    %v3077 = vpop.f32.mrb[0].mxu0
    %v3078 = vpop.f32.mrb[0].mxu0
    %3079 = vdwg.mxu0
    %v3080 = vadd.f32 %v2983, %v3075
    %s3081 = sld [smem:[#allocation2 + $0xf80]]
    %v3082 = vstv %s3081
    %v3083 = vmul.f32 %v69, %v3082
    %s3084 = sld [smem:[#allocation2 + $0xf81]]
    %v3085 = vstv %s3084
    %v3086 = vmul.f32 %v71, %v3085
    %v3087 = vadd.f32 %v3083, %v3086
    %s3088 = sld [smem:[#allocation2 + $0xf82]]
    %v3089 = vstv %s3088
    %v3090 = vmul.f32 %v73, %v3089
    %v3091 = vadd.f32 %v3087, %v3090
    %s3092 = sld [smem:[#allocation2 + $0xf83]]
    %v3093 = vstv %s3092
    %v3094 = vmul.f32 %v75, %v3093
    %v3095 = vadd.f32 %v3091, %v3094
    %s3096 = sld [smem:[#allocation6 + $0x1f]]
    %v3097 = vstv %s3096
    %v3098 = vadd.f32 %v3095, %v3097
    %v3099 = vmax.f32 %v3098, 0.0
    %v3100 = vpack.c.bf16 %v3099, %v3099
    %s3101 = scalar_lea.vmem [#allocation8], 992
    %v3102 = vld [vmem:[%s3101] sm:$0xf]
    %v3103 = vld [vmem:[%s3101 + $0x4] sm:$0xf]
    %v3104 = vld [vmem:[%s3101 + $0x8] sm:$0xf]
    %v3105 = vld [vmem:[%s3101 + $0xc] sm:$0xf]
    %v3106 = vld [vmem:[%s3101 + $0x10] sm:$0xf]
    %v3107 = vld [vmem:[%s3101 + $0x14] sm:$0xf]
    %v3108 = vld [vmem:[%s3101 + $0x18] sm:$0xf]
    %v3109 = vld [vmem:[%s3101 + $0x1c] sm:$0xf]
    %v3118 = vunpack.c.l.b16 %v3102
    %v3119 = vunpack.c.l.b16 %v3103
    %v3120 = vunpack.c.l.b16 %v3104
    %v3121 = vunpack.c.l.b16 %v3105
    %v3122 = vunpack.c.l.b16 %v3106
    %v3123 = vunpack.c.l.b16 %v3107
    %v3124 = vunpack.c.l.b16 %v3108
    %v3125 = vunpack.c.l.b16 %v3109
    %v3126 = vpack.c.b16 %v3119, %v3118
    %v3127 = vpack.c.b16 %v3121, %v3120
    %v3128 = vpack.c.b16 %v3123, %v3122
    %v3129 = vpack.c.b16 %v3125, %v3124
    %v3135 = vsel %vm157, %v3100, 0
    %3137 = vmatprep.subr.bf16.mxu0 0
    %3138 = vmatpush1.bf16.msra.mxu0 %v3126
    %3139 = vmatprep.subr.bf16.mxu0 0
    %3140 = vmatpush1.bf16.msra.mxu0 %v3127
    %3141 = vmatprep.subr.bf16.mxu0 0
    %3142 = vmatpush1.bf16.msra.mxu0 %v3128
    %3143 = vmatprep.subr.bf16.mxu0 0
    %3144 = vmatpush1.bf16.msra.mxu0 %v3129
    %3145 = vmatprep.subr.bf16.mxu0 0
    %3146 = vmatpush1.bf16.msra.mxu0 0
    %3147 = vmatprep.subr.bf16.mxu0 0
    %3148 = vmatpush1.bf16.msra.mxu0 0
    %3149 = vmatprep.subr.bf16.mxu0 0
    %3150 = vmatpush1.bf16.msra.mxu0 0
    %3151 = vmatprep.subr.bf16.mxu0 0
    %3152 = vmatpush1.bf16.msra.mxu0 0
    %3153 = vmatprep.subr.bf16.mxu0 0
    %3154 = vmatpush1.bf16.msra.mxu0 0
    %3155 = vmatprep.subr.bf16.mxu0 0
    %3156 = vmatpush1.bf16.msra.mxu0 0
    %3157 = vmatprep.subr.bf16.mxu0 0
    %3158 = vmatpush1.bf16.msra.mxu0 0
    %3159 = vmatprep.subr.bf16.mxu0 0
    %3160 = vmatpush1.bf16.msra.mxu0 0
    %3161 = vmatprep.subr.bf16.mxu0 0
    %3162 = vmatpush1.bf16.msra.mxu0 0
    %3163 = vmatprep.subr.bf16.mxu0 0
    %3164 = vmatpush1.bf16.msra.mxu0 0
    %3165 = vmatprep.subr.bf16.mxu0 0
    %3166 = vmatpush1.bf16.msra.mxu0 0
    %3167 = vmatprep.subr.bf16.mxu0 0
    %3168 = vmatpush1.bf16.msra.mxu0 0
    %3169 = vmatprep.mubr.bf16.mxu0 0
    %3170 = vmatmul.mubr.bf16.gmra.mrb[0].mxu0 %v3135
    %v3171 = vpop.f32.mrb[0].mxu0
    %v3172 = vadd.f32 0.0, %v3171
    %v3173 = vpop.f32.mrb[0].mxu0
    %v3174 = vpop.f32.mrb[0].mxu0
    %v3175 = vpop.f32.mrb[0].mxu0
    %3176 = vdwg.mxu0
    %v3177 = vadd.f32 %v3080, %v3172
    %v3178 = vld [vmem:[%s4] sm:$0x1]
    %v3180 = vlaneseq
    %v3181 = vshrl.u32 %v3180, 7
    %v3182 = vsub.s32 0, %v3181
    %v3183 = vrot.slane %v3178, %v3182
    %v3185 = vadd.f32 %v3177, %v3183
    %v3186 = vmax.f32 %v3185, 0.0
    %v3187 = vpack.c.bf16 %v3186, %v3186
    %v3188 = vld [vmem:[%s5] sm:$0xf]
    %v3189 = vld [vmem:[%s5 + $0x4] sm:$0xf]
    %v3190 = vld [vmem:[%s5 + $0x8] sm:$0xf]
    %v3191 = vld [vmem:[%s5 + $0xc] sm:$0xf]
    %v3192 = vld [vmem:[%s5 + $0x10] sm:$0xf]
    %v3193 = vld [vmem:[%s5 + $0x14] sm:$0xf]
    %v3194 = vld [vmem:[%s5 + $0x18] sm:$0xf]
    %v3195 = vld [vmem:[%s5 + $0x1c] sm:$0xf]
    %v3196 = vld [vmem:[%s5 + $0x20] sm:$0xf]
    %v3197 = vld [vmem:[%s5 + $0x24] sm:$0xf]
    %v3198 = vld [vmem:[%s5 + $0x28] sm:$0xf]
    %v3199 = vld [vmem:[%s5 + $0x2c] sm:$0xf]
    %v3200 = vld [vmem:[%s5 + $0x30] sm:$0xf]
    %v3201 = vld [vmem:[%s5 + $0x34] sm:$0xf]
    %v3202 = vld [vmem:[%s5 + $0x38] sm:$0xf]
    %v3203 = vld [vmem:[%s5 + $0x3c] sm:$0xf]
    %v3204 = vld [vmem:[%s6] sm:$0x1]
    %v3206 = vlaneseq
    %v3207 = vshrl.u32 %v3206, 7
    %v3208 = vsub.s32 0, %v3207
    %v3209 = vrot.slane %v3204, %v3208
    %v3227 = vunpack.c.l.b16 %v3188
    %v3228 = vunpack.c.l.b16 %v3189
    %v3229 = vunpack.c.l.b16 %v3190
    %v3230 = vunpack.c.l.b16 %v3191
    %v3231 = vunpack.c.l.b16 %v3192
    %v3232 = vunpack.c.l.b16 %v3193
    %v3233 = vunpack.c.l.b16 %v3194
    %v3234 = vunpack.c.l.b16 %v3195
    %v3235 = vunpack.c.l.b16 %v3196
    %v3236 = vunpack.c.l.b16 %v3197
    %v3237 = vunpack.c.l.b16 %v3198
    %v3238 = vunpack.c.l.b16 %v3199
    %v3239 = vunpack.c.l.b16 %v3200
    %v3240 = vunpack.c.l.b16 %v3201
    %v3241 = vunpack.c.l.b16 %v3202
    %v3242 = vunpack.c.l.b16 %v3203
    %v3243 = vpack.c.b16 %v3228, %v3227
    %v3244 = vpack.c.b16 %v3230, %v3229
    %v3245 = vpack.c.b16 %v3232, %v3231
    %v3246 = vpack.c.b16 %v3234, %v3233
    %v3247 = vpack.c.b16 %v3236, %v3235
    %v3248 = vpack.c.b16 %v3238, %v3237
    %v3249 = vpack.c.b16 %v3240, %v3239
    %v3250 = vpack.c.b16 %v3242, %v3241
    %3259 = vmatprep.subr.bf16.mxu0 0
    %3260 = vmatpush1.bf16.msra.mxu0 %v3243
    %3261 = vmatprep.subr.bf16.mxu0 0
    %3262 = vmatpush1.bf16.msra.mxu0 %v3244
    %3263 = vmatprep.subr.bf16.mxu0 0
    %3264 = vmatpush1.bf16.msra.mxu0 %v3245
    %3265 = vmatprep.subr.bf16.mxu0 0
    %3266 = vmatpush1.bf16.msra.mxu0 %v3246
    %3267 = vmatprep.subr.bf16.mxu0 0
    %3268 = vmatpush1.bf16.msra.mxu0 %v3247
    %3269 = vmatprep.subr.bf16.mxu0 0
    %3270 = vmatpush1.bf16.msra.mxu0 %v3248
    %3271 = vmatprep.subr.bf16.mxu0 0
    %3272 = vmatpush1.bf16.msra.mxu0 %v3249
    %3273 = vmatprep.subr.bf16.mxu0 0
    %3274 = vmatpush1.bf16.msra.mxu0 %v3250
    %3275 = vmatprep.subr.bf16.mxu0 0
    %3276 = vmatpush1.bf16.msra.mxu0 0
    %3277 = vmatprep.subr.bf16.mxu0 0
    %3278 = vmatpush1.bf16.msra.mxu0 0
    %3279 = vmatprep.subr.bf16.mxu0 0
    %3280 = vmatpush1.bf16.msra.mxu0 0
    %3281 = vmatprep.subr.bf16.mxu0 0
    %3282 = vmatpush1.bf16.msra.mxu0 0
    %3283 = vmatprep.subr.bf16.mxu0 0
    %3284 = vmatpush1.bf16.msra.mxu0 0
    %3285 = vmatprep.subr.bf16.mxu0 0
    %3286 = vmatpush1.bf16.msra.mxu0 0
    %3287 = vmatprep.subr.bf16.mxu0 0
    %3288 = vmatpush1.bf16.msra.mxu0 0
    %3289 = vmatprep.subr.bf16.mxu0 0
    %3290 = vmatpush1.bf16.msra.mxu0 0
    %3291 = vmatprep.mubr.bf16.mxu0 0
    %3292 = vmatmul.mubr.bf16.gmra.mrb[0].mxu0 %v3187
    %v3293 = vpop.f32.mrb[0].mxu0
    %v3294 = vadd.f32 %v3209, %v3293
    %v3295 = vpop.f32.mrb[0].mxu0
    %v3296 = vpop.f32.mrb[0].mxu0
    %v3297 = vpop.f32.mrb[0].mxu0
    %3298 = vdwg.mxu0
    %vm3299 = vcmask 41984
    %3300 = vst.msk [vmem:[#allocation9] sm:$0x3] %vm3299, %v3294
    // Predicated region
    $region42: #{tpu_custom_call.1} parent=1 // pred_check
      _
    $region43: #{tpu_custom_call.1} parent=1 // pred_check_branch
      %3302 = sbr.rel (0) target = $region45
    $region44: #{tpu_custom_call.1} parent=1 // pred_region
      %s3304 = ssub.s32 32, 32
      %3305 = vsyncadd [#allocation4], %s3304
      %s3307 = sshll.u32 [#allocation9], 4
      %s3308 = int_to_ptr.vmem [resolvable:$true] %s3307
      %3310 = dma.vmem_to_hbm [thread:$0]  %s3308, 32, %s7, [#allocation4]
    $region45: #{tpu_custom_call.1} parent=1 // pred_fallthru
      _
    // Predicated region
    $region46: #{tpu_custom_call.1} parent=1 // pred_check
      _
    $region47: #{tpu_custom_call.1} parent=1 // pred_check_branch
      %3312 = sbr.rel (0) target = $region49
    $region48: #{tpu_custom_call.1} parent=1 // pred_region
      %3313 = dma.done [#allocation4], 32
    $region49: #{tpu_custom_call.1} parent=1 // pred_fallthru
      _
    %3314 = vsyncpa [#allocation3], 1
    %3315 = vsyncpa [#allocation4], 1
    %3316 = vsyncpa [#allocation5], 1
    %3317 = vsyncpa [#allocation7], 1

</llo_original>
